<compile_context>
chip_gen: v5e
topology: v5e:2x2
jax: 0.10.0
libtpu: 0.0.40
codegen_flags: <defaults>
</compile_context>

<pallas_src>
import functools
import math

import jax
import jax.numpy as jnp
from jax.experimental import pallas as pl
from jax.experimental.pallas import tpu as pltpu

# Safe on v5e/v6e (128 MiB VMEM) and v7x (64 MiB physical); our tiles are tiny.
_VMEM_LIMIT = 64 * 1024 * 1024

# Name changed from TPUCompilerParams -> CompilerParams in newer jax; be robust.
_CompilerParams = getattr(pltpu, "CompilerParams",
                          getattr(pltpu, "TPUCompilerParams", None))


# ----------------------------------------------------------------------------
# Kernel 1: fused im2col conv (one batch element per grid step)
# ----------------------------------------------------------------------------
def _conv_im2col_kernel(x_ref, w_ref, b_ref, o_ref, *, KH, KW, stride, OH, OW,
                        scale):
    """x_ref: (1, H, W//s, s*C)  input tile (channels-last, W folded by stride)
       w_ref: (KH*KW*C, OC) f32  weight, K-order = (kh, kw, c)
       b_ref: (1, OC)       f32
       o_ref: (1, OH*OW, OC) f32
    """
    s = stride
    qn = KW // s                              # kernel columns per folded W block
    xv = x_ref[0]
    if xv.dtype == jnp.uint8:
        xv = xv.astype(jnp.int32)             # robust u8 -> f32 widening path
    xv = xv.astype(jnp.float32)
    if scale != 1.0:
        xv = xv * scale                       # fused /256 of the PyTorch forward

    # Build the im2col patch matrix entirely in VMEM.  The W-stride was folded
    # into the lane dim, so only contiguous static slices are needed.
    row_blocks = []
    for oh in range(OH):
        pieces = []
        for kh in range(KH):
            band = xv[oh * s + kh]                          # (W//s, s*C)
            for q in range(qn):
                pieces.append(band[q:q + OW, :])            # (OW, s*C)
        row_blocks.append(jnp.concatenate(pieces, axis=1))  # (OW, KH*KW*C)
    patches = row_blocks[0] if OH == 1 else jnp.concatenate(row_blocks, axis=0)

    acc = jnp.dot(patches.astype(jnp.bfloat16),             # bf16 MXU inputs,
                  w_ref[...].astype(jnp.bfloat16),          # f32 accumulation
                  preferred_element_type=jnp.float32)       # (OH*OW, OC)
    o_ref[0, :, :] = jnp.maximum(acc + b_ref[...], 0.0)     # bias + ReLU fused


def conv2d_nhwc(x, w, b, stride, *, scale=1.0):
    """x: (B, H, W, C) NHWC (any dtype); w: (OC, IC, KH, KW) torch layout;
    b: (OC,).  Returns ReLU(conv(x)) as (B, OH, OW, OC) float32."""
    B, H, W, C = x.shape
    OC, IC, KH, KW = w.shape
    assert IC == C, (IC, C)
    s = stride
    assert KW % s == 0, "kernel width must be a multiple of the stride"
    OH = (H - KH) // s + 1
    OW = (W - KW) // s + 1

    # Fold the W-stride into the channel (lane) dim so the in-kernel im2col
    # only needs contiguous slices.
    if W % s:
        x = jnp.pad(x, ((0, 0), (0, 0), (0, s - W % s), (0, 0)))
        W = x.shape[2]
    Ws = W // s
    x_r = x.reshape(B, H, Ws, s * C)

    # (OC, IC, KH, KW) -> (KH*KW*IC, OC) with column order (kh, kw, c) — the
    # same order the in-kernel im2col produces.  Tiny, done once per call.
    wmat = jnp.transpose(w, (2, 3, 1, 0)).reshape(KH * KW * IC, OC)
    wmat = wmat.astype(jnp.float32)
    bmat = b.reshape(1, OC).astype(jnp.float32)

    kernel = functools.partial(_conv_im2col_kernel, KH=KH, KW=KW, stride=s,
                               OH=OH, OW=OW, scale=scale)
    out = pl.pallas_call(
        kernel,
        out_shape=jax.ShapeDtypeStruct((B, OH * OW, OC), jnp.float32),
        grid=(B,),
        in_specs=[
            pl.BlockSpec((1, H, Ws, s * C), lambda bi: (bi, 0, 0, 0)),
            pl.BlockSpec((KH * KW * IC, OC), lambda bi: (0, 0)),
            pl.BlockSpec((1, OC), lambda bi: (0, 0)),
        ],
        out_specs=pl.BlockSpec((1, OH * OW, OC), lambda bi: (bi, 0, 0)),
        compiler_params=_CompilerParams(
            dimension_semantics=("parallel",),
            vmem_limit_bytes=_VMEM_LIMIT,
        ),
    )(x_r, wmat, bmat)
    return out.reshape(B, OH, OW, OC)


# ----------------------------------------------------------------------------
# Kernel 2: fused NoisyLinear head  (flatten -> fc1 -> ReLU -> fc2)
# ----------------------------------------------------------------------------
def _noisy_head_kernel(x_ref, w1_ref, sw1_ref, ew1_ref, b1_ref,
                       w2_ref, sw2_ref, ew2_ref, b2_ref, o_ref, h_acc):
    k = pl.program_id(1)

    @pl.when(k == 0)
    def _init():
        h_acc[...] = jnp.zeros_like(h_acc)

    # NoisyLinear weight assembly fused as a VPU prologue on this K-tile.
    # Weights stay in their native (out_features, in_features) layout and are
    # contracted on axis 1 — no transposed weight copies in HBM.
    v1 = w1_ref[...] + sw1_ref[...] * ew1_ref[...]               # (H1, TK)
    h_acc[...] += jax.lax.dot_general(
        x_ref[...].astype(jnp.bfloat16), v1.astype(jnp.bfloat16),
        dimension_numbers=(((1,), (1,)), ((), ())),
        preferred_element_type=jnp.float32)                      # (TM, H1)

    @pl.when(k == pl.num_programs(1) - 1)
    def _finalize():
        h = jnp.maximum(h_acc[...] + b1_ref[...], 0.0)           # ReLU, f32
        v2 = w2_ref[...] + sw2_ref[...] * ew2_ref[...]           # (NP, H1)
        q = jax.lax.dot_general(
            h.astype(jnp.bfloat16), v2.astype(jnp.bfloat16),
            dimension_numbers=(((1,), (1,)), ((), ())),
            preferred_element_type=jnp.float32)                  # (TM, NP)
        o_ref[...] = q + b2_ref[...]


def _pick_divisor(dim, candidates):
    for c in candidates:
        if dim % c == 0:
            return c
    return dim


def noisy_head(flat, w1, sw1, ew1, vb1, w2p, sw2p, ew2p, vb2p):
    """flat: (B, K); w1/sw1/ew1: (H1, K); vb1: (1, H1);
    w2p/sw2p/ew2p: (NP, H1); vb2p: (1, NP).  Returns (B, NP) float32."""
    B, K = flat.shape
    H1 = w1.shape[0]
    NP = w2p.shape[0]

    tm = B if B <= 256 else _pick_divisor(B, (256, 128, 64, 32, 16, 8))
    tk = _pick_divisor(K, (512, 384, 256, 128)) if (K % 128 == 0 and K > 512) else K
    grid = (B // tm, K // tk)

    return pl.pallas_call(
        _noisy_head_kernel,
        out_shape=jax.ShapeDtypeStruct((B, NP), jnp.float32),
        grid=grid,
        in_specs=[
            pl.BlockSpec((tm, tk), lambda m, k: (m, k)),
            pl.BlockSpec((H1, tk), lambda m, k: (0, k)),
            pl.BlockSpec((H1, tk), lambda m, k: (0, k)),
            pl.BlockSpec((H1, tk), lambda m, k: (0, k)),
            pl.BlockSpec((1, H1), lambda m, k: (0, 0)),
            pl.BlockSpec((NP, H1), lambda m, k: (0, 0)),
            pl.BlockSpec((NP, H1), lambda m, k: (0, 0)),
            pl.BlockSpec((NP, H1), lambda m, k: (0, 0)),
            pl.BlockSpec((1, NP), lambda m, k: (0, 0)),
        ],
        out_specs=pl.BlockSpec((tm, NP), lambda m, k: (m, 0)),
        scratch_shapes=[pltpu.VMEM((tm, H1), jnp.float32)],
        compiler_params=_CompilerParams(
            dimension_semantics=("parallel", "arbitrary"),
            vmem_limit_bytes=_VMEM_LIMIT,
        ),
    )(flat, w1, sw1, ew1, vb1, w2p, sw2p, ew2p, vb2p)


# ----------------------------------------------------------------------------
# Parameter construction (deterministic, synthetic)
# ----------------------------------------------------------------------------
def init_conv_params(key, oc, ic, kh, kw):
    kw_, kb_ = jax.random.split(key)
    fan_in = ic * kh * kw
    bound = 1.0 / math.sqrt(fan_in)
    weight = jax.random.uniform(kw_, (oc, ic, kh, kw), jnp.float32,
                                minval=-bound, maxval=bound)
    bias = jax.random.uniform(kb_, (oc,), jnp.float32,
                              minval=-bound, maxval=bound)
    return weight, bias


def init_noisy_linear_params(key, in_features, out_features, sigma_init=0.017):
    kw_, kb_ = jax.random.split(key)
    std = math.sqrt(3.0 / in_features)
    weight = jax.random.uniform(kw_, (out_features, in_features), jnp.float32,
                                minval=-std, maxval=std)
    bias = jax.random.uniform(kb_, (out_features,), jnp.float32,
                              minval=-std, maxval=std)
    sigma_weight = jnp.full((out_features, in_features), sigma_init, jnp.float32)
    sigma_bias = jnp.full((out_features,), sigma_init, jnp.float32)
    return dict(weight=weight, bias=bias,
                sigma_weight=sigma_weight, sigma_bias=sigma_bias)


def init_noisy_dqn_params(key, input_shape, n_actions):
    c, h, w = input_shape
    k1, k2, k3, k4, k5 = jax.random.split(key, 5)
    conv1 = init_conv_params(k1, 32, c, 8, 8)
    conv2 = init_conv_params(k2, 64, 32, 4, 4)
    conv3 = init_conv_params(k3, 64, 64, 3, 3)
    # conv output size (valid conv arithmetic, matches _get_conv_out)
    o1 = (h - 8) // 4 + 1
    o2 = (o1 - 4) // 2 + 1
    o3 = (o2 - 3) // 1 + 1
    conv_out_size = 64 * o3 * o3
    fc1 = init_noisy_linear_params(k4, conv_out_size, 512)
    fc2 = init_noisy_linear_params(k5, 512, n_actions)
    return dict(conv1=conv1, conv2=conv2, conv3=conv3, fc1=fc1, fc2=fc2)


# ----------------------------------------------------------------------------
# Forward pass
# ----------------------------------------------------------------------------
def noisy_dqn_forward(params, x, noise_key):
    """x: (B, C, H, W) uint8 (PyTorch NCHW convention). Returns (B, n_actions)."""
    B = x.shape[0]

    # NCHW uint8 -> NHWC, kept uint8 (4x less HBM/DMA than a float32 copy);
    # the /256 cast happens inside the conv1 kernel.
    xh = jnp.transpose(x, (0, 2, 3, 1))

    w1, b1 = params["conv1"]
    h = conv2d_nhwc(xh, w1, b1, stride=4, scale=1.0 / 256.0)
    w2, b2 = params["conv2"]
    h = conv2d_nhwc(h, w2, b2, stride=2)
    w3, b3 = params["conv3"]
    h = conv2d_nhwc(h, w3, b3, stride=1)

    # Single tiny reorder so the flatten matches PyTorch's NCHW .view(B, -1).
    flat = jnp.transpose(h, (0, 3, 1, 2)).reshape(B, -1)

    # Fresh epsilon per forward call (NoisyLinear semantics).
    p1, p2 = params["fc1"], params["fc2"]
    kw1, kb1, kw2, kb2 = jax.random.split(noise_key, 4)
    ew1 = jax.random.normal(kw1, p1["weight"].shape, jnp.float32)
    eb1 = jax.random.normal(kb1, p1["bias"].shape, jnp.float32)
    ew2 = jax.random.normal(kw2, p2["weight"].shape, jnp.float32)
    eb2 = jax.random.normal(kb2, p2["bias"].shape, jnp.float32)

    # Effective biases are tiny -> assemble in plain JAX; the big weight
    # assembly (w + sigma*eps) is fused into the head kernel.
    vb1 = (p1["bias"] + p1["sigma_bias"] * eb1).reshape(1, -1)
    vb2 = p2["bias"] + p2["sigma_bias"] * eb2

    # Pad fc2's output dim to a lane-dense 128 columns (sliced off below).
    n_actions = p2["weight"].shape[0]
    NP = ((n_actions + 127) // 128) * 128
    pad = NP - n_actions
    w2p = jnp.pad(p2["weight"], ((0, pad), (0, 0)))
    sw2p = jnp.pad(p2["sigma_weight"], ((0, pad), (0, 0)))
    ew2p = jnp.pad(ew2, ((0, pad), (0, 0)))
    vb2p = jnp.pad(vb2, (0, pad)).reshape(1, NP)

    q_padded = noisy_head(flat, p1["weight"], p1["sigma_weight"], ew1, vb1,
                          w2p, sw2p, ew2p, vb2p)
    return q_padded[:, :n_actions]


# ----------------------------------------------------------------------------
if __name__ == "__main__":
    # Small shapes consistent with the module: 4 stacked frames, 36x36 spatial
    # -> conv output 64*1*1 = 64 features; n_actions = 6.
    B, C, H, W = 2, 4, 36, 36
    n_actions = 6

    key = jax.random.PRNGKey(0)
    k_params, k_input, k_noise = jax.random.split(key, 3)

    params = init_noisy_dqn_params(k_params, (C, H, W), n_actions)
    x = jax.random.randint(k_input, (B, C, H, W), 0, 256,
                           dtype=jnp.int32).astype(jnp.uint8)

    fwd = jax.jit(noisy_dqn_forward)
    q_values = jax.block_until_ready(fwd(params, x, k_noise))

    assert q_values.shape == (B, n_actions), q_values.shape
    assert q_values.dtype == jnp.float32
    assert bool(jnp.all(jnp.isfinite(q_values)))
    print("KERNEL_OK")
</pallas_src>

<mosaic_0001>
module attributes {stable_mosaic.version = 11 : i64} {
  func.func @_conv_im2col_kernel(%arg0: i32, %arg1: memref<1x36x9x16xi8, #tpu.memory_space<vmem>>, %arg2: memref<256x32xf32, #tpu.memory_space<vmem>>, %arg3: memref<1x32xf32, #tpu.memory_space<vmem>>, %arg4: memref<1x64x32xf32, #tpu.memory_space<vmem>>) attributes {dimension_semantics = [#tpu.dimension_semantics<parallel>], iteration_bounds = array<i64: 2>, scalar_prefetch = 0 : i64, scratch_operands = 0 : i64, tpu.core_type = #tpu.core_type<tc>, window_params = [{transform_indices = @transform_0, window_bounds = array<i64: 1, 36, 9, 16>}, {pipeline_mode = #tpu.pipeline_mode<synchronous>, transform_indices = @transform_1, window_bounds = array<i64: 256, 32>}, {pipeline_mode = #tpu.pipeline_mode<synchronous>, transform_indices = @transform_2, window_bounds = array<i64: 1, 32>}, {transform_indices = @transform_3, window_bounds = array<i64: 1, 64, 32>}]} {
    %c0 = arith.constant 0 : index
    %c0_0 = arith.constant 0 : index
    %c0_1 = arith.constant 0 : index
    %c0_2 = arith.constant 0 : index
    %0 = vector.load %arg1[%c0, %c0_0, %c0_1, %c0_2] : memref<1x36x9x16xi8, #tpu.memory_space<vmem>>, vector<1x36x9x16xi8>
    %1 = vector.shape_cast %0 : vector<1x36x9x16xi8> to vector<36x9x16xi8>
    %2 = arith.extui %1 : vector<36x9x16xi8> to vector<36x9x16xi32>
    %3 = arith.sitofp %2 : vector<36x9x16xi32> to vector<36x9x16xf32>
    %cst = arith.constant 3.906250e-03 : f32
    %4 = vector.broadcast %cst : f32 to vector<36x9x16xf32>
    %5 = arith.mulf %3, %4 : vector<36x9x16xf32>
    %6 = vector.extract_strided_slice %5 {offsets = [0, 0, 0], sizes = [1, 9, 16], strides = [1, 1, 1]} : vector<36x9x16xf32> to vector<1x9x16xf32>
    %7 = vector.shape_cast %6 : vector<1x9x16xf32> to vector<9x16xf32>
    %8 = vector.extract_strided_slice %7 {offsets = [0, 0], sizes = [8, 16], strides = [1, 1]} : vector<9x16xf32> to vector<8x16xf32>
    %9 = vector.extract_strided_slice %7 {offsets = [1, 0], sizes = [8, 16], strides = [1, 1]} : vector<9x16xf32> to vector<8x16xf32>
    %10 = vector.extract_strided_slice %5 {offsets = [1, 0, 0], sizes = [1, 9, 16], strides = [1, 1, 1]} : vector<36x9x16xf32> to vector<1x9x16xf32>
    %11 = vector.shape_cast %10 : vector<1x9x16xf32> to vector<9x16xf32>
    %12 = vector.extract_strided_slice %11 {offsets = [0, 0], sizes = [8, 16], strides = [1, 1]} : vector<9x16xf32> to vector<8x16xf32>
    %13 = vector.extract_strided_slice %11 {offsets = [1, 0], sizes = [8, 16], strides = [1, 1]} : vector<9x16xf32> to vector<8x16xf32>
    %14 = vector.extract_strided_slice %5 {offsets = [2, 0, 0], sizes = [1, 9, 16], strides = [1, 1, 1]} : vector<36x9x16xf32> to vector<1x9x16xf32>
    %15 = vector.shape_cast %14 : vector<1x9x16xf32> to vector<9x16xf32>
    %16 = vector.extract_strided_slice %15 {offsets = [0, 0], sizes = [8, 16], strides = [1, 1]} : vector<9x16xf32> to vector<8x16xf32>
    %17 = vector.extract_strided_slice %15 {offsets = [1, 0], sizes = [8, 16], strides = [1, 1]} : vector<9x16xf32> to vector<8x16xf32>
    %18 = vector.extract_strided_slice %5 {offsets = [3, 0, 0], sizes = [1, 9, 16], strides = [1, 1, 1]} : vector<36x9x16xf32> to vector<1x9x16xf32>
    %19 = vector.shape_cast %18 : vector<1x9x16xf32> to vector<9x16xf32>
    %20 = vector.extract_strided_slice %19 {offsets = [0, 0], sizes = [8, 16], strides = [1, 1]} : vector<9x16xf32> to vector<8x16xf32>
    %21 = vector.extract_strided_slice %19 {offsets = [1, 0], sizes = [8, 16], strides = [1, 1]} : vector<9x16xf32> to vector<8x16xf32>
    %22 = vector.extract_strided_slice %5 {offsets = [4, 0, 0], sizes = [1, 9, 16], strides = [1, 1, 1]} : vector<36x9x16xf32> to vector<1x9x16xf32>
    %23 = vector.shape_cast %22 : vector<1x9x16xf32> to vector<9x16xf32>
    %24 = vector.extract_strided_slice %23 {offsets = [0, 0], sizes = [8, 16], strides = [1, 1]} : vector<9x16xf32> to vector<8x16xf32>
    %25 = vector.extract_strided_slice %23 {offsets = [1, 0], sizes = [8, 16], strides = [1, 1]} : vector<9x16xf32> to vector<8x16xf32>
    %26 = vector.extract_strided_slice %5 {offsets = [5, 0, 0], sizes = [1, 9, 16], strides = [1, 1, 1]} : vector<36x9x16xf32> to vector<1x9x16xf32>
    %27 = vector.shape_cast %26 : vector<1x9x16xf32> to vector<9x16xf32>
    %28 = vector.extract_strided_slice %27 {offsets = [0, 0], sizes = [8, 16], strides = [1, 1]} : vector<9x16xf32> to vector<8x16xf32>
    %29 = vector.extract_strided_slice %27 {offsets = [1, 0], sizes = [8, 16], strides = [1, 1]} : vector<9x16xf32> to vector<8x16xf32>
    %30 = vector.extract_strided_slice %5 {offsets = [6, 0, 0], sizes = [1, 9, 16], strides = [1, 1, 1]} : vector<36x9x16xf32> to vector<1x9x16xf32>
    %31 = vector.shape_cast %30 : vector<1x9x16xf32> to vector<9x16xf32>
    %32 = vector.extract_strided_slice %31 {offsets = [0, 0], sizes = [8, 16], strides = [1, 1]} : vector<9x16xf32> to vector<8x16xf32>
    %33 = vector.extract_strided_slice %31 {offsets = [1, 0], sizes = [8, 16], strides = [1, 1]} : vector<9x16xf32> to vector<8x16xf32>
    %34 = vector.extract_strided_slice %5 {offsets = [7, 0, 0], sizes = [1, 9, 16], strides = [1, 1, 1]} : vector<36x9x16xf32> to vector<1x9x16xf32>
    %35 = vector.shape_cast %34 : vector<1x9x16xf32> to vector<9x16xf32>
    %36 = vector.extract_strided_slice %35 {offsets = [0, 0], sizes = [8, 16], strides = [1, 1]} : vector<9x16xf32> to vector<8x16xf32>
    %37 = vector.extract_strided_slice %35 {offsets = [1, 0], sizes = [8, 16], strides = [1, 1]} : vector<9x16xf32> to vector<8x16xf32>
    %38 = tpu.concatenate %8, %9, %12, %13, %16, %17, %20, %21, %24, %25, %28, %29, %32, %33, %36, %37 in 1 : vector<8x16xf32>, vector<8x16xf32>, vector<8x16xf32>, vector<8x16xf32>, vector<8x16xf32>, vector<8x16xf32>, vector<8x16xf32>, vector<8x16xf32>, vector<8x16xf32>, vector<8x16xf32>, vector<8x16xf32>, vector<8x16xf32>, vector<8x16xf32>, vector<8x16xf32>, vector<8x16xf32>, vector<8x16xf32> -> vector<8x256xf32>
    %39 = vector.extract_strided_slice %5 {offsets = [4, 0, 0], sizes = [1, 9, 16], strides = [1, 1, 1]} : vector<36x9x16xf32> to vector<1x9x16xf32>
    %40 = vector.shape_cast %39 : vector<1x9x16xf32> to vector<9x16xf32>
    %41 = vector.extract_strided_slice %40 {offsets = [0, 0], sizes = [8, 16], strides = [1, 1]} : vector<9x16xf32> to vector<8x16xf32>
    %42 = vector.extract_strided_slice %40 {offsets = [1, 0], sizes = [8, 16], strides = [1, 1]} : vector<9x16xf32> to vector<8x16xf32>
    %43 = vector.extract_strided_slice %5 {offsets = [5, 0, 0], sizes = [1, 9, 16], strides = [1, 1, 1]} : vector<36x9x16xf32> to vector<1x9x16xf32>
    %44 = vector.shape_cast %43 : vector<1x9x16xf32> to vector<9x16xf32>
    %45 = vector.extract_strided_slice %44 {offsets = [0, 0], sizes = [8, 16], strides = [1, 1]} : vector<9x16xf32> to vector<8x16xf32>
    %46 = vector.extract_strided_slice %44 {offsets = [1, 0], sizes = [8, 16], strides = [1, 1]} : vector<9x16xf32> to vector<8x16xf32>
    %47 = vector.extract_strided_slice %5 {offsets = [6, 0, 0], sizes = [1, 9, 16], strides = [1, 1, 1]} : vector<36x9x16xf32> to vector<1x9x16xf32>
    %48 = vector.shape_cast %47 : vector<1x9x16xf32> to vector<9x16xf32>
    %49 = vector.extract_strided_slice %48 {offsets = [0, 0], sizes = [8, 16], strides = [1, 1]} : vector<9x16xf32> to vector<8x16xf32>
    %50 = vector.extract_strided_slice %48 {offsets = [1, 0], sizes = [8, 16], strides = [1, 1]} : vector<9x16xf32> to vector<8x16xf32>
    %51 = vector.extract_strided_slice %5 {offsets = [7, 0, 0], sizes = [1, 9, 16], strides = [1, 1, 1]} : vector<36x9x16xf32> to vector<1x9x16xf32>
    %52 = vector.shape_cast %51 : vector<1x9x16xf32> to vector<9x16xf32>
    %53 = vector.extract_strided_slice %52 {offsets = [0, 0], sizes = [8, 16], strides = [1, 1]} : vector<9x16xf32> to vector<8x16xf32>
    %54 = vector.extract_strided_slice %52 {offsets = [1, 0], sizes = [8, 16], strides = [1, 1]} : vector<9x16xf32> to vector<8x16xf32>
    %55 = vector.extract_strided_slice %5 {offsets = [8, 0, 0], sizes = [1, 9, 16], strides = [1, 1, 1]} : vector<36x9x16xf32> to vector<1x9x16xf32>
    %56 = vector.shape_cast %55 : vector<1x9x16xf32> to vector<9x16xf32>
    %57 = vector.extract_strided_slice %56 {offsets = [0, 0], sizes = [8, 16], strides = [1, 1]} : vector<9x16xf32> to vector<8x16xf32>
    %58 = vector.extract_strided_slice %56 {offsets = [1, 0], sizes = [8, 16], strides = [1, 1]} : vector<9x16xf32> to vector<8x16xf32>
    %59 = vector.extract_strided_slice %5 {offsets = [9, 0, 0], sizes = [1, 9, 16], strides = [1, 1, 1]} : vector<36x9x16xf32> to vector<1x9x16xf32>
    %60 = vector.shape_cast %59 : vector<1x9x16xf32> to vector<9x16xf32>
    %61 = vector.extract_strided_slice %60 {offsets = [0, 0], sizes = [8, 16], strides = [1, 1]} : vector<9x16xf32> to vector<8x16xf32>
    %62 = vector.extract_strided_slice %60 {offsets = [1, 0], sizes = [8, 16], strides = [1, 1]} : vector<9x16xf32> to vector<8x16xf32>
    %63 = vector.extract_strided_slice %5 {offsets = [10, 0, 0], sizes = [1, 9, 16], strides = [1, 1, 1]} : vector<36x9x16xf32> to vector<1x9x16xf32>
    %64 = vector.shape_cast %63 : vector<1x9x16xf32> to vector<9x16xf32>
    %65 = vector.extract_strided_slice %64 {offsets = [0, 0], sizes = [8, 16], strides = [1, 1]} : vector<9x16xf32> to vector<8x16xf32>
    %66 = vector.extract_strided_slice %64 {offsets = [1, 0], sizes = [8, 16], strides = [1, 1]} : vector<9x16xf32> to vector<8x16xf32>
    %67 = vector.extract_strided_slice %5 {offsets = [11, 0, 0], sizes = [1, 9, 16], strides = [1, 1, 1]} : vector<36x9x16xf32> to vector<1x9x16xf32>
    %68 = vector.shape_cast %67 : vector<1x9x16xf32> to vector<9x16xf32>
    %69 = vector.extract_strided_slice %68 {offsets = [0, 0], sizes = [8, 16], strides = [1, 1]} : vector<9x16xf32> to vector<8x16xf32>
    %70 = vector.extract_strided_slice %68 {offsets = [1, 0], sizes = [8, 16], strides = [1, 1]} : vector<9x16xf32> to vector<8x16xf32>
    %71 = tpu.concatenate %41, %42, %45, %46, %49, %50, %53, %54, %57, %58, %61, %62, %65, %66, %69, %70 in 1 : vector<8x16xf32>, vector<8x16xf32>, vector<8x16xf32>, vector<8x16xf32>, vector<8x16xf32>, vector<8x16xf32>, vector<8x16xf32>, vector<8x16xf32>, vector<8x16xf32>, vector<8x16xf32>, vector<8x16xf32>, vector<8x16xf32>, vector<8x16xf32>, vector<8x16xf32>, vector<8x16xf32>, vector<8x16xf32> -> vector<8x256xf32>
    %72 = vector.extract_strided_slice %5 {offsets = [8, 0, 0], sizes = [1, 9, 16], strides = [1, 1, 1]} : vector<36x9x16xf32> to vector<1x9x16xf32>
    %73 = vector.shape_cast %72 : vector<1x9x16xf32> to vector<9x16xf32>
    %74 = vector.extract_strided_slice %73 {offsets = [0, 0], sizes = [8, 16], strides = [1, 1]} : vector<9x16xf32> to vector<8x16xf32>
    %75 = vector.extract_strided_slice %73 {offsets = [1, 0], sizes = [8, 16], strides = [1, 1]} : vector<9x16xf32> to vector<8x16xf32>
    %76 = vector.extract_strided_slice %5 {offsets = [9, 0, 0], sizes = [1, 9, 16], strides = [1, 1, 1]} : vector<36x9x16xf32> to vector<1x9x16xf32>
    %77 = vector.shape_cast %76 : vector<1x9x16xf32> to vector<9x16xf32>
    %78 = vector.extract_strided_slice %77 {offsets = [0, 0], sizes = [8, 16], strides = [1, 1]} : vector<9x16xf32> to vector<8x16xf32>
    %79 = vector.extract_strided_slice %77 {offsets = [1, 0], sizes = [8, 16], strides = [1, 1]} : vector<9x16xf32> to vector<8x16xf32>
    %80 = vector.extract_strided_slice %5 {offsets = [10, 0, 0], sizes = [1, 9, 16], strides = [1, 1, 1]} : vector<36x9x16xf32> to vector<1x9x16xf32>
    %81 = vector.shape_cast %80 : vector<1x9x16xf32> to vector<9x16xf32>
    %82 = vector.extract_strided_slice %81 {offsets = [0, 0], sizes = [8, 16], strides = [1, 1]} : vector<9x16xf32> to vector<8x16xf32>
    %83 = vector.extract_strided_slice %81 {offsets = [1, 0], sizes = [8, 16], strides = [1, 1]} : vector<9x16xf32> to vector<8x16xf32>
    %84 = vector.extract_strided_slice %5 {offsets = [11, 0, 0], sizes = [1, 9, 16], strides = [1, 1, 1]} : vector<36x9x16xf32> to vector<1x9x16xf32>
    %85 = vector.shape_cast %84 : vector<1x9x16xf32> to vector<9x16xf32>
    %86 = vector.extract_strided_slice %85 {offsets = [0, 0], sizes = [8, 16], strides = [1, 1]} : vector<9x16xf32> to vector<8x16xf32>
    %87 = vector.extract_strided_slice %85 {offsets = [1, 0], sizes = [8, 16], strides = [1, 1]} : vector<9x16xf32> to vector<8x16xf32>
    %88 = vector.extract_strided_slice %5 {offsets = [12, 0, 0], sizes = [1, 9, 16], strides = [1, 1, 1]} : vector<36x9x16xf32> to vector<1x9x16xf32>
    %89 = vector.shape_cast %88 : vector<1x9x16xf32> to vector<9x16xf32>
    %90 = vector.extract_strided_slice %89 {offsets = [0, 0], sizes = [8, 16], strides = [1, 1]} : vector<9x16xf32> to vector<8x16xf32>
    %91 = vector.extract_strided_slice %89 {offsets = [1, 0], sizes = [8, 16], strides = [1, 1]} : vector<9x16xf32> to vector<8x16xf32>
    %92 = vector.extract_strided_slice %5 {offsets = [13, 0, 0], sizes = [1, 9, 16], strides = [1, 1, 1]} : vector<36x9x16xf32> to vector<1x9x16xf32>
    %93 = vector.shape_cast %92 : vector<1x9x16xf32> to vector<9x16xf32>
    %94 = vector.extract_strided_slice %93 {offsets = [0, 0], sizes = [8, 16], strides = [1, 1]} : vector<9x16xf32> to vector<8x16xf32>
    %95 = vector.extract_strided_slice %93 {offsets = [1, 0], sizes = [8, 16], strides = [1, 1]} : vector<9x16xf32> to vector<8x16xf32>
    %96 = vector.extract_strided_slice %5 {offsets = [14, 0, 0], sizes = [1, 9, 16], strides = [1, 1, 1]} : vector<36x9x16xf32> to vector<1x9x16xf32>
    %97 = vector.shape_cast %96 : vector<1x9x16xf32> to vector<9x16xf32>
    %98 = vector.extract_strided_slice %97 {offsets = [0, 0], sizes = [8, 16], strides = [1, 1]} : vector<9x16xf32> to vector<8x16xf32>
    %99 = vector.extract_strided_slice %97 {offsets = [1, 0], sizes = [8, 16], strides = [1, 1]} : vector<9x16xf32> to vector<8x16xf32>
    %100 = vector.extract_strided_slice %5 {offsets = [15, 0, 0], sizes = [1, 9, 16], strides = [1, 1, 1]} : vector<36x9x16xf32> to vector<1x9x16xf32>
    %101 = vector.shape_cast %100 : vector<1x9x16xf32> to vector<9x16xf32>
    %102 = vector.extract_strided_slice %101 {offsets = [0, 0], sizes = [8, 16], strides = [1, 1]} : vector<9x16xf32> to vector<8x16xf32>
    %103 = vector.extract_strided_slice %101 {offsets = [1, 0], sizes = [8, 16], strides = [1, 1]} : vector<9x16xf32> to vector<8x16xf32>
    %104 = tpu.concatenate %74, %75, %78, %79, %82, %83, %86, %87, %90, %91, %94, %95, %98, %99, %102, %103 in 1 : vector<8x16xf32>, vector<8x16xf32>, vector<8x16xf32>, vector<8x16xf32>, vector<8x16xf32>, vector<8x16xf32>, vector<8x16xf32>, vector<8x16xf32>, vector<8x16xf32>, vector<8x16xf32>, vector<8x16xf32>, vector<8x16xf32>, vector<8x16xf32>, vector<8x16xf32>, vector<8x16xf32>, vector<8x16xf32> -> vector<8x256xf32>
    %105 = vector.extract_strided_slice %5 {offsets = [12, 0, 0], sizes = [1, 9, 16], strides = [1, 1, 1]} : vector<36x9x16xf32> to vector<1x9x16xf32>
    %106 = vector.shape_cast %105 : vector<1x9x16xf32> to vector<9x16xf32>
    %107 = vector.extract_strided_slice %106 {offsets = [0, 0], sizes = [8, 16], strides = [1, 1]} : vector<9x16xf32> to vector<8x16xf32>
    %108 = vector.extract_strided_slice %106 {offsets = [1, 0], sizes = [8, 16], strides = [1, 1]} : vector<9x16xf32> to vector<8x16xf32>
    %109 = vector.extract_strided_slice %5 {offsets = [13, 0, 0], sizes = [1, 9, 16], strides = [1, 1, 1]} : vector<36x9x16xf32> to vector<1x9x16xf32>
    %110 = vector.shape_cast %109 : vector<1x9x16xf32> to vector<9x16xf32>
    %111 = vector.extract_strided_slice %110 {offsets = [0, 0], sizes = [8, 16], strides = [1, 1]} : vector<9x16xf32> to vector<8x16xf32>
    %112 = vector.extract_strided_slice %110 {offsets = [1, 0], sizes = [8, 16], strides = [1, 1]} : vector<9x16xf32> to vector<8x16xf32>
    %113 = vector.extract_strided_slice %5 {offsets = [14, 0, 0], sizes = [1, 9, 16], strides = [1, 1, 1]} : vector<36x9x16xf32> to vector<1x9x16xf32>
    %114 = vector.shape_cast %113 : vector<1x9x16xf32> to vector<9x16xf32>
    %115 = vector.extract_strided_slice %114 {offsets = [0, 0], sizes = [8, 16], strides = [1, 1]} : vector<9x16xf32> to vector<8x16xf32>
    %116 = vector.extract_strided_slice %114 {offsets = [1, 0], sizes = [8, 16], strides = [1, 1]} : vector<9x16xf32> to vector<8x16xf32>
    %117 = vector.extract_strided_slice %5 {offsets = [15, 0, 0], sizes = [1, 9, 16], strides = [1, 1, 1]} : vector<36x9x16xf32> to vector<1x9x16xf32>
    %118 = vector.shape_cast %117 : vector<1x9x16xf32> to vector<9x16xf32>
    %119 = vector.extract_strided_slice %118 {offsets = [0, 0], sizes = [8, 16], strides = [1, 1]} : vector<9x16xf32> to vector<8x16xf32>
    %120 = vector.extract_strided_slice %118 {offsets = [1, 0], sizes = [8, 16], strides = [1, 1]} : vector<9x16xf32> to vector<8x16xf32>
    %121 = vector.extract_strided_slice %5 {offsets = [16, 0, 0], sizes = [1, 9, 16], strides = [1, 1, 1]} : vector<36x9x16xf32> to vector<1x9x16xf32>
    %122 = vector.shape_cast %121 : vector<1x9x16xf32> to vector<9x16xf32>
    %123 = vector.extract_strided_slice %122 {offsets = [0, 0], sizes = [8, 16], strides = [1, 1]} : vector<9x16xf32> to vector<8x16xf32>
    %124 = vector.extract_strided_slice %122 {offsets = [1, 0], sizes = [8, 16], strides = [1, 1]} : vector<9x16xf32> to vector<8x16xf32>
    %125 = vector.extract_strided_slice %5 {offsets = [17, 0, 0], sizes = [1, 9, 16], strides = [1, 1, 1]} : vector<36x9x16xf32> to vector<1x9x16xf32>
    %126 = vector.shape_cast %125 : vector<1x9x16xf32> to vector<9x16xf32>
    %127 = vector.extract_strided_slice %126 {offsets = [0, 0], sizes = [8, 16], strides = [1, 1]} : vector<9x16xf32> to vector<8x16xf32>
    %128 = vector.extract_strided_slice %126 {offsets = [1, 0], sizes = [8, 16], strides = [1, 1]} : vector<9x16xf32> to vector<8x16xf32>
    %129 = vector.extract_strided_slice %5 {offsets = [18, 0, 0], sizes = [1, 9, 16], strides = [1, 1, 1]} : vector<36x9x16xf32> to vector<1x9x16xf32>
    %130 = vector.shape_cast %129 : vector<1x9x16xf32> to vector<9x16xf32>
    %131 = vector.extract_strided_slice %130 {offsets = [0, 0], sizes = [8, 16], strides = [1, 1]} : vector<9x16xf32> to vector<8x16xf32>
    %132 = vector.extract_strided_slice %130 {offsets = [1, 0], sizes = [8, 16], strides = [1, 1]} : vector<9x16xf32> to vector<8x16xf32>
    %133 = vector.extract_strided_slice %5 {offsets = [19, 0, 0], sizes = [1, 9, 16], strides = [1, 1, 1]} : vector<36x9x16xf32> to vector<1x9x16xf32>
    %134 = vector.shape_cast %133 : vector<1x9x16xf32> to vector<9x16xf32>
    %135 = vector.extract_strided_slice %134 {offsets = [0, 0], sizes = [8, 16], strides = [1, 1]} : vector<9x16xf32> to vector<8x16xf32>
    %136 = vector.extract_strided_slice %134 {offsets = [1, 0], sizes = [8, 16], strides = [1, 1]} : vector<9x16xf32> to vector<8x16xf32>
    %137 = tpu.concatenate %107, %108, %111, %112, %115, %116, %119, %120, %123, %124, %127, %128, %131, %132, %135, %136 in 1 : vector<8x16xf32>, vector<8x16xf32>, vector<8x16xf32>, vector<8x16xf32>, vector<8x16xf32>, vector<8x16xf32>, vector<8x16xf32>, vector<8x16xf32>, vector<8x16xf32>, vector<8x16xf32>, vector<8x16xf32>, vector<8x16xf32>, vector<8x16xf32>, vector<8x16xf32>, vector<8x16xf32>, vector<8x16xf32> -> vector<8x256xf32>
    %138 = vector.extract_strided_slice %5 {offsets = [16, 0, 0], sizes = [1, 9, 16], strides = [1, 1, 1]} : vector<36x9x16xf32> to vector<1x9x16xf32>
    %139 = vector.shape_cast %138 : vector<1x9x16xf32> to vector<9x16xf32>
    %140 = vector.extract_strided_slice %139 {offsets = [0, 0], sizes = [8, 16], strides = [1, 1]} : vector<9x16xf32> to vector<8x16xf32>
    %141 = vector.extract_strided_slice %139 {offsets = [1, 0], sizes = [8, 16], strides = [1, 1]} : vector<9x16xf32> to vector<8x16xf32>
    %142 = vector.extract_strided_slice %5 {offsets = [17, 0, 0], sizes = [1, 9, 16], strides = [1, 1, 1]} : vector<36x9x16xf32> to vector<1x9x16xf32>
    %143 = vector.shape_cast %142 : vector<1x9x16xf32> to vector<9x16xf32>
    %144 = vector.extract_strided_slice %143 {offsets = [0, 0], sizes = [8, 16], strides = [1, 1]} : vector<9x16xf32> to vector<8x16xf32>
    %145 = vector.extract_strided_slice %143 {offsets = [1, 0], sizes = [8, 16], strides = [1, 1]} : vector<9x16xf32> to vector<8x16xf32>
    %146 = vector.extract_strided_slice %5 {offsets = [18, 0, 0], sizes = [1, 9, 16], strides = [1, 1, 1]} : vector<36x9x16xf32> to vector<1x9x16xf32>
    %147 = vector.shape_cast %146 : vector<1x9x16xf32> to vector<9x16xf32>
    %148 = vector.extract_strided_slice %147 {offsets = [0, 0], sizes = [8, 16], strides = [1, 1]} : vector<9x16xf32> to vector<8x16xf32>
    %149 = vector.extract_strided_slice %147 {offsets = [1, 0], sizes = [8, 16], strides = [1, 1]} : vector<9x16xf32> to vector<8x16xf32>
    %150 = vector.extract_strided_slice %5 {offsets = [19, 0, 0], sizes = [1, 9, 16], strides = [1, 1, 1]} : vector<36x9x16xf32> to vector<1x9x16xf32>
    %151 = vector.shape_cast %150 : vector<1x9x16xf32> to vector<9x16xf32>
    %152 = vector.extract_strided_slice %151 {offsets = [0, 0], sizes = [8, 16], strides = [1, 1]} : vector<9x16xf32> to vector<8x16xf32>
    %153 = vector.extract_strided_slice %151 {offsets = [1, 0], sizes = [8, 16], strides = [1, 1]} : vector<9x16xf32> to vector<8x16xf32>
    %154 = vector.extract_strided_slice %5 {offsets = [20, 0, 0], sizes = [1, 9, 16], strides = [1, 1, 1]} : vector<36x9x16xf32> to vector<1x9x16xf32>
    %155 = vector.shape_cast %154 : vector<1x9x16xf32> to vector<9x16xf32>
    %156 = vector.extract_strided_slice %155 {offsets = [0, 0], sizes = [8, 16], strides = [1, 1]} : vector<9x16xf32> to vector<8x16xf32>
    %157 = vector.extract_strided_slice %155 {offsets = [1, 0], sizes = [8, 16], strides = [1, 1]} : vector<9x16xf32> to vector<8x16xf32>
    %158 = vector.extract_strided_slice %5 {offsets = [21, 0, 0], sizes = [1, 9, 16], strides = [1, 1, 1]} : vector<36x9x16xf32> to vector<1x9x16xf32>
    %159 = vector.shape_cast %158 : vector<1x9x16xf32> to vector<9x16xf32>
    %160 = vector.extract_strided_slice %159 {offsets = [0, 0], sizes = [8, 16], strides = [1, 1]} : vector<9x16xf32> to vector<8x16xf32>
    %161 = vector.extract_strided_slice %159 {offsets = [1, 0], sizes = [8, 16], strides = [1, 1]} : vector<9x16xf32> to vector<8x16xf32>
    %162 = vector.extract_strided_slice %5 {offsets = [22, 0, 0], sizes = [1, 9, 16], strides = [1, 1, 1]} : vector<36x9x16xf32> to vector<1x9x16xf32>
    %163 = vector.shape_cast %162 : vector<1x9x16xf32> to vector<9x16xf32>
    %164 = vector.extract_strided_slice %163 {offsets = [0, 0], sizes = [8, 16], strides = [1, 1]} : vector<9x16xf32> to vector<8x16xf32>
    %165 = vector.extract_strided_slice %163 {offsets = [1, 0], sizes = [8, 16], strides = [1, 1]} : vector<9x16xf32> to vector<8x16xf32>
    %166 = vector.extract_strided_slice %5 {offsets = [23, 0, 0], sizes = [1, 9, 16], strides = [1, 1, 1]} : vector<36x9x16xf32> to vector<1x9x16xf32>
    %167 = vector.shape_cast %166 : vector<1x9x16xf32> to vector<9x16xf32>
    %168 = vector.extract_strided_slice %167 {offsets = [0, 0], sizes = [8, 16], strides = [1, 1]} : vector<9x16xf32> to vector<8x16xf32>
    %169 = vector.extract_strided_slice %167 {offsets = [1, 0], sizes = [8, 16], strides = [1, 1]} : vector<9x16xf32> to vector<8x16xf32>
    %170 = tpu.concatenate %140, %141, %144, %145, %148, %149, %152, %153, %156, %157, %160, %161, %164, %165, %168, %169 in 1 : vector<8x16xf32>, vector<8x16xf32>, vector<8x16xf32>, vector<8x16xf32>, vector<8x16xf32>, vector<8x16xf32>, vector<8x16xf32>, vector<8x16xf32>, vector<8x16xf32>, vector<8x16xf32>, vector<8x16xf32>, vector<8x16xf32>, vector<8x16xf32>, vector<8x16xf32>, vector<8x16xf32>, vector<8x16xf32> -> vector<8x256xf32>
    %171 = vector.extract_strided_slice %5 {offsets = [20, 0, 0], sizes = [1, 9, 16], strides = [1, 1, 1]} : vector<36x9x16xf32> to vector<1x9x16xf32>
    %172 = vector.shape_cast %171 : vector<1x9x16xf32> to vector<9x16xf32>
    %173 = vector.extract_strided_slice %172 {offsets = [0, 0], sizes = [8, 16], strides = [1, 1]} : vector<9x16xf32> to vector<8x16xf32>
    %174 = vector.extract_strided_slice %172 {offsets = [1, 0], sizes = [8, 16], strides = [1, 1]} : vector<9x16xf32> to vector<8x16xf32>
    %175 = vector.extract_strided_slice %5 {offsets = [21, 0, 0], sizes = [1, 9, 16], strides = [1, 1, 1]} : vector<36x9x16xf32> to vector<1x9x16xf32>
    %176 = vector.shape_cast %175 : vector<1x9x16xf32> to vector<9x16xf32>
    %177 = vector.extract_strided_slice %176 {offsets = [0, 0], sizes = [8, 16], strides = [1, 1]} : vector<9x16xf32> to vector<8x16xf32>
    %178 = vector.extract_strided_slice %176 {offsets = [1, 0], sizes = [8, 16], strides = [1, 1]} : vector<9x16xf32> to vector<8x16xf32>
    %179 = vector.extract_strided_slice %5 {offsets = [22, 0, 0], sizes = [1, 9, 16], strides = [1, 1, 1]} : vector<36x9x16xf32> to vector<1x9x16xf32>
    %180 = vector.shape_cast %179 : vector<1x9x16xf32> to vector<9x16xf32>
    %181 = vector.extract_strided_slice %180 {offsets = [0, 0], sizes = [8, 16], strides = [1, 1]} : vector<9x16xf32> to vector<8x16xf32>
    %182 = vector.extract_strided_slice %180 {offsets = [1, 0], sizes = [8, 16], strides = [1, 1]} : vector<9x16xf32> to vector<8x16xf32>
    %183 = vector.extract_strided_slice %5 {offsets = [23, 0, 0], sizes = [1, 9, 16], strides = [1, 1, 1]} : vector<36x9x16xf32> to vector<1x9x16xf32>
    %184 = vector.shape_cast %183 : vector<1x9x16xf32> to vector<9x16xf32>
    %185 = vector.extract_strided_slice %184 {offsets = [0, 0], sizes = [8, 16], strides = [1, 1]} : vector<9x16xf32> to vector<8x16xf32>
    %186 = vector.extract_strided_slice %184 {offsets = [1, 0], sizes = [8, 16], strides = [1, 1]} : vector<9x16xf32> to vector<8x16xf32>
    %187 = vector.extract_strided_slice %5 {offsets = [24, 0, 0], sizes = [1, 9, 16], strides = [1, 1, 1]} : vector<36x9x16xf32> to vector<1x9x16xf32>
    %188 = vector.shape_cast %187 : vector<1x9x16xf32> to vector<9x16xf32>
    %189 = vector.extract_strided_slice %188 {offsets = [0, 0], sizes = [8, 16], strides = [1, 1]} : vector<9x16xf32> to vector<8x16xf32>
    %190 = vector.extract_strided_slice %188 {offsets = [1, 0], sizes = [8, 16], strides = [1, 1]} : vector<9x16xf32> to vector<8x16xf32>
    %191 = vector.extract_strided_slice %5 {offsets = [25, 0, 0], sizes = [1, 9, 16], strides = [1, 1, 1]} : vector<36x9x16xf32> to vector<1x9x16xf32>
    %192 = vector.shape_cast %191 : vector<1x9x16xf32> to vector<9x16xf32>
    %193 = vector.extract_strided_slice %192 {offsets = [0, 0], sizes = [8, 16], strides = [1, 1]} : vector<9x16xf32> to vector<8x16xf32>
    %194 = vector.extract_strided_slice %192 {offsets = [1, 0], sizes = [8, 16], strides = [1, 1]} : vector<9x16xf32> to vector<8x16xf32>
    %195 = vector.extract_strided_slice %5 {offsets = [26, 0, 0], sizes = [1, 9, 16], strides = [1, 1, 1]} : vector<36x9x16xf32> to vector<1x9x16xf32>
    %196 = vector.shape_cast %195 : vector<1x9x16xf32> to vector<9x16xf32>
    %197 = vector.extract_strided_slice %196 {offsets = [0, 0], sizes = [8, 16], strides = [1, 1]} : vector<9x16xf32> to vector<8x16xf32>
    %198 = vector.extract_strided_slice %196 {offsets = [1, 0], sizes = [8, 16], strides = [1, 1]} : vector<9x16xf32> to vector<8x16xf32>
    %199 = vector.extract_strided_slice %5 {offsets = [27, 0, 0], sizes = [1, 9, 16], strides = [1, 1, 1]} : vector<36x9x16xf32> to vector<1x9x16xf32>
    %200 = vector.shape_cast %199 : vector<1x9x16xf32> to vector<9x16xf32>
    %201 = vector.extract_strided_slice %200 {offsets = [0, 0], sizes = [8, 16], strides = [1, 1]} : vector<9x16xf32> to vector<8x16xf32>
    %202 = vector.extract_strided_slice %200 {offsets = [1, 0], sizes = [8, 16], strides = [1, 1]} : vector<9x16xf32> to vector<8x16xf32>
    %203 = tpu.concatenate %173, %174, %177, %178, %181, %182, %185, %186, %189, %190, %193, %194, %197, %198, %201, %202 in 1 : vector<8x16xf32>, vector<8x16xf32>, vector<8x16xf32>, vector<8x16xf32>, vector<8x16xf32>, vector<8x16xf32>, vector<8x16xf32>, vector<8x16xf32>, vector<8x16xf32>, vector<8x16xf32>, vector<8x16xf32>, vector<8x16xf32>, vector<8x16xf32>, vector<8x16xf32>, vector<8x16xf32>, vector<8x16xf32> -> vector<8x256xf32>
    %204 = vector.extract_strided_slice %5 {offsets = [24, 0, 0], sizes = [1, 9, 16], strides = [1, 1, 1]} : vector<36x9x16xf32> to vector<1x9x16xf32>
    %205 = vector.shape_cast %204 : vector<1x9x16xf32> to vector<9x16xf32>
    %206 = vector.extract_strided_slice %205 {offsets = [0, 0], sizes = [8, 16], strides = [1, 1]} : vector<9x16xf32> to vector<8x16xf32>
    %207 = vector.extract_strided_slice %205 {offsets = [1, 0], sizes = [8, 16], strides = [1, 1]} : vector<9x16xf32> to vector<8x16xf32>
    %208 = vector.extract_strided_slice %5 {offsets = [25, 0, 0], sizes = [1, 9, 16], strides = [1, 1, 1]} : vector<36x9x16xf32> to vector<1x9x16xf32>
    %209 = vector.shape_cast %208 : vector<1x9x16xf32> to vector<9x16xf32>
    %210 = vector.extract_strided_slice %209 {offsets = [0, 0], sizes = [8, 16], strides = [1, 1]} : vector<9x16xf32> to vector<8x16xf32>
    %211 = vector.extract_strided_slice %209 {offsets = [1, 0], sizes = [8, 16], strides = [1, 1]} : vector<9x16xf32> to vector<8x16xf32>
    %212 = vector.extract_strided_slice %5 {offsets = [26, 0, 0], sizes = [1, 9, 16], strides = [1, 1, 1]} : vector<36x9x16xf32> to vector<1x9x16xf32>
    %213 = vector.shape_cast %212 : vector<1x9x16xf32> to vector<9x16xf32>
    %214 = vector.extract_strided_slice %213 {offsets = [0, 0], sizes = [8, 16], strides = [1, 1]} : vector<9x16xf32> to vector<8x16xf32>
    %215 = vector.extract_strided_slice %213 {offsets = [1, 0], sizes = [8, 16], strides = [1, 1]} : vector<9x16xf32> to vector<8x16xf32>
    %216 = vector.extract_strided_slice %5 {offsets = [27, 0, 0], sizes = [1, 9, 16], strides = [1, 1, 1]} : vector<36x9x16xf32> to vector<1x9x16xf32>
    %217 = vector.shape_cast %216 : vector<1x9x16xf32> to vector<9x16xf32>
    %218 = vector.extract_strided_slice %217 {offsets = [0, 0], sizes = [8, 16], strides = [1, 1]} : vector<9x16xf32> to vector<8x16xf32>
    %219 = vector.extract_strided_slice %217 {offsets = [1, 0], sizes = [8, 16], strides = [1, 1]} : vector<9x16xf32> to vector<8x16xf32>
    %220 = vector.extract_strided_slice %5 {offsets = [28, 0, 0], sizes = [1, 9, 16], strides = [1, 1, 1]} : vector<36x9x16xf32> to vector<1x9x16xf32>
    %221 = vector.shape_cast %220 : vector<1x9x16xf32> to vector<9x16xf32>
    %222 = vector.extract_strided_slice %221 {offsets = [0, 0], sizes = [8, 16], strides = [1, 1]} : vector<9x16xf32> to vector<8x16xf32>
    %223 = vector.extract_strided_slice %221 {offsets = [1, 0], sizes = [8, 16], strides = [1, 1]} : vector<9x16xf32> to vector<8x16xf32>
    %224 = vector.extract_strided_slice %5 {offsets = [29, 0, 0], sizes = [1, 9, 16], strides = [1, 1, 1]} : vector<36x9x16xf32> to vector<1x9x16xf32>
    %225 = vector.shape_cast %224 : vector<1x9x16xf32> to vector<9x16xf32>
    %226 = vector.extract_strided_slice %225 {offsets = [0, 0], sizes = [8, 16], strides = [1, 1]} : vector<9x16xf32> to vector<8x16xf32>
    %227 = vector.extract_strided_slice %225 {offsets = [1, 0], sizes = [8, 16], strides = [1, 1]} : vector<9x16xf32> to vector<8x16xf32>
    %228 = vector.extract_strided_slice %5 {offsets = [30, 0, 0], sizes = [1, 9, 16], strides = [1, 1, 1]} : vector<36x9x16xf32> to vector<1x9x16xf32>
    %229 = vector.shape_cast %228 : vector<1x9x16xf32> to vector<9x16xf32>
    %230 = vector.extract_strided_slice %229 {offsets = [0, 0], sizes = [8, 16], strides = [1, 1]} : vector<9x16xf32> to vector<8x16xf32>
    %231 = vector.extract_strided_slice %229 {offsets = [1, 0], sizes = [8, 16], strides = [1, 1]} : vector<9x16xf32> to vector<8x16xf32>
    %232 = vector.extract_strided_slice %5 {offsets = [31, 0, 0], sizes = [1, 9, 16], strides = [1, 1, 1]} : vector<36x9x16xf32> to vector<1x9x16xf32>
    %233 = vector.shape_cast %232 : vector<1x9x16xf32> to vector<9x16xf32>
    %234 = vector.extract_strided_slice %233 {offsets = [0, 0], sizes = [8, 16], strides = [1, 1]} : vector<9x16xf32> to vector<8x16xf32>
    %235 = vector.extract_strided_slice %233 {offsets = [1, 0], sizes = [8, 16], strides = [1, 1]} : vector<9x16xf32> to vector<8x16xf32>
    %236 = tpu.concatenate %206, %207, %210, %211, %214, %215, %218, %219, %222, %223, %226, %227, %230, %231, %234, %235 in 1 : vector<8x16xf32>, vector<8x16xf32>, vector<8x16xf32>, vector<8x16xf32>, vector<8x16xf32>, vector<8x16xf32>, vector<8x16xf32>, vector<8x16xf32>, vector<8x16xf32>, vector<8x16xf32>, vector<8x16xf32>, vector<8x16xf32>, vector<8x16xf32>, vector<8x16xf32>, vector<8x16xf32>, vector<8x16xf32> -> vector<8x256xf32>
    %237 = vector.extract_strided_slice %5 {offsets = [28, 0, 0], sizes = [1, 9, 16], strides = [1, 1, 1]} : vector<36x9x16xf32> to vector<1x9x16xf32>
    %238 = vector.shape_cast %237 : vector<1x9x16xf32> to vector<9x16xf32>
    %239 = vector.extract_strided_slice %238 {offsets = [0, 0], sizes = [8, 16], strides = [1, 1]} : vector<9x16xf32> to vector<8x16xf32>
    %240 = vector.extract_strided_slice %238 {offsets = [1, 0], sizes = [8, 16], strides = [1, 1]} : vector<9x16xf32> to vector<8x16xf32>
    %241 = vector.extract_strided_slice %5 {offsets = [29, 0, 0], sizes = [1, 9, 16], strides = [1, 1, 1]} : vector<36x9x16xf32> to vector<1x9x16xf32>
    %242 = vector.shape_cast %241 : vector<1x9x16xf32> to vector<9x16xf32>
    %243 = vector.extract_strided_slice %242 {offsets = [0, 0], sizes = [8, 16], strides = [1, 1]} : vector<9x16xf32> to vector<8x16xf32>
    %244 = vector.extract_strided_slice %242 {offsets = [1, 0], sizes = [8, 16], strides = [1, 1]} : vector<9x16xf32> to vector<8x16xf32>
    %245 = vector.extract_strided_slice %5 {offsets = [30, 0, 0], sizes = [1, 9, 16], strides = [1, 1, 1]} : vector<36x9x16xf32> to vector<1x9x16xf32>
    %246 = vector.shape_cast %245 : vector<1x9x16xf32> to vector<9x16xf32>
    %247 = vector.extract_strided_slice %246 {offsets = [0, 0], sizes = [8, 16], strides = [1, 1]} : vector<9x16xf32> to vector<8x16xf32>
    %248 = vector.extract_strided_slice %246 {offsets = [1, 0], sizes = [8, 16], strides = [1, 1]} : vector<9x16xf32> to vector<8x16xf32>
    %249 = vector.extract_strided_slice %5 {offsets = [31, 0, 0], sizes = [1, 9, 16], strides = [1, 1, 1]} : vector<36x9x16xf32> to vector<1x9x16xf32>
    %250 = vector.shape_cast %249 : vector<1x9x16xf32> to vector<9x16xf32>
    %251 = vector.extract_strided_slice %250 {offsets = [0, 0], sizes = [8, 16], strides = [1, 1]} : vector<9x16xf32> to vector<8x16xf32>
    %252 = vector.extract_strided_slice %250 {offsets = [1, 0], sizes = [8, 16], strides = [1, 1]} : vector<9x16xf32> to vector<8x16xf32>
    %253 = vector.extract_strided_slice %5 {offsets = [32, 0, 0], sizes = [1, 9, 16], strides = [1, 1, 1]} : vector<36x9x16xf32> to vector<1x9x16xf32>
    %254 = vector.shape_cast %253 : vector<1x9x16xf32> to vector<9x16xf32>
    %255 = vector.extract_strided_slice %254 {offsets = [0, 0], sizes = [8, 16], strides = [1, 1]} : vector<9x16xf32> to vector<8x16xf32>
    %256 = vector.extract_strided_slice %254 {offsets = [1, 0], sizes = [8, 16], strides = [1, 1]} : vector<9x16xf32> to vector<8x16xf32>
    %257 = vector.extract_strided_slice %5 {offsets = [33, 0, 0], sizes = [1, 9, 16], strides = [1, 1, 1]} : vector<36x9x16xf32> to vector<1x9x16xf32>
    %258 = vector.shape_cast %257 : vector<1x9x16xf32> to vector<9x16xf32>
    %259 = vector.extract_strided_slice %258 {offsets = [0, 0], sizes = [8, 16], strides = [1, 1]} : vector<9x16xf32> to vector<8x16xf32>
    %260 = vector.extract_strided_slice %258 {offsets = [1, 0], sizes = [8, 16], strides = [1, 1]} : vector<9x16xf32> to vector<8x16xf32>
    %261 = vector.extract_strided_slice %5 {offsets = [34, 0, 0], sizes = [1, 9, 16], strides = [1, 1, 1]} : vector<36x9x16xf32> to vector<1x9x16xf32>
    %262 = vector.shape_cast %261 : vector<1x9x16xf32> to vector<9x16xf32>
    %263 = vector.extract_strided_slice %262 {offsets = [0, 0], sizes = [8, 16], strides = [1, 1]} : vector<9x16xf32> to vector<8x16xf32>
    %264 = vector.extract_strided_slice %262 {offsets = [1, 0], sizes = [8, 16], strides = [1, 1]} : vector<9x16xf32> to vector<8x16xf32>
    %265 = vector.extract_strided_slice %5 {offsets = [35, 0, 0], sizes = [1, 9, 16], strides = [1, 1, 1]} : vector<36x9x16xf32> to vector<1x9x16xf32>
    %266 = vector.shape_cast %265 : vector<1x9x16xf32> to vector<9x16xf32>
    %267 = vector.extract_strided_slice %266 {offsets = [0, 0], sizes = [8, 16], strides = [1, 1]} : vector<9x16xf32> to vector<8x16xf32>
    %268 = vector.extract_strided_slice %266 {offsets = [1, 0], sizes = [8, 16], strides = [1, 1]} : vector<9x16xf32> to vector<8x16xf32>
    %269 = tpu.concatenate %239, %240, %243, %244, %247, %248, %251, %252, %255, %256, %259, %260, %263, %264, %267, %268 in 1 : vector<8x16xf32>, vector<8x16xf32>, vector<8x16xf32>, vector<8x16xf32>, vector<8x16xf32>, vector<8x16xf32>, vector<8x16xf32>, vector<8x16xf32>, vector<8x16xf32>, vector<8x16xf32>, vector<8x16xf32>, vector<8x16xf32>, vector<8x16xf32>, vector<8x16xf32>, vector<8x16xf32>, vector<8x16xf32> -> vector<8x256xf32>
    %270 = tpu.concatenate %38, %71, %104, %137, %170, %203, %236, %269 in 0 : vector<8x256xf32>, vector<8x256xf32>, vector<8x256xf32>, vector<8x256xf32>, vector<8x256xf32>, vector<8x256xf32>, vector<8x256xf32>, vector<8x256xf32> -> vector<64x256xf32>
    %271 = arith.truncf %270 : vector<64x256xf32> to vector<64x256xbf16>
    %c0_3 = arith.constant 0 : index
    %c0_4 = arith.constant 0 : index
    %272 = vector.load %arg2[%c0_3, %c0_4] : memref<256x32xf32, #tpu.memory_space<vmem>>, vector<256x32xf32>
    %273 = arith.truncf %272 : vector<256x32xf32> to vector<256x32xbf16>
    %cst_5 = arith.constant dense<0.000000e+00> : vector<64x32xf32>
    %274 = tpu.matmul %271, %273, %cst_5 {dimension_numbers = #tpu.dot_dimension_numbers<[1], [0], [0], [1], [0, 0, 1, 1], [], []>} : vector<64x256xbf16>, vector<256x32xbf16>, vector<64x32xf32> -> vector<64x32xf32>
    %c0_6 = arith.constant 0 : index
    %c0_7 = arith.constant 0 : index
    %275 = vector.load %arg3[%c0_6, %c0_7] : memref<1x32xf32, #tpu.memory_space<vmem>>, vector<1x32xf32>
    %276 = vector.broadcast %275 : vector<1x32xf32> to vector<64x32xf32>
    %277 = arith.addf %274, %276 : vector<64x32xf32>
    %cst_8 = arith.constant 0.000000e+00 : f32
    %278 = vector.broadcast %cst_8 : f32 to vector<64x32xf32>
    %279 = arith.maximumf %277, %278 : vector<64x32xf32>
    %c0_9 = arith.constant 0 : index
    %c0_10 = arith.constant 0 : index
    %c0_11 = arith.constant 0 : index
    %280 = vector.load %arg4[%c0_9, %c0_10, %c0_11] : memref<1x64x32xf32, #tpu.memory_space<vmem>>, vector<1x64x32xf32>
    %281 = vector.shape_cast %280 : vector<1x64x32xf32> to vector<64x32xf32>
    %282 = vector.shape_cast %279 : vector<64x32xf32> to vector<1x64x32xf32>
    tpu.vector_store %arg4[%c0_9, %c0_10, %c0_11], %282 {strides = array<i32>} : memref<1x64x32xf32, #tpu.memory_space<vmem>>, vector<1x64x32xf32>,
    return
  }
  func.func @transform_0(%arg0: i32) -> (i32, i32, i32, i32) {
    %c0_i32 = arith.constant 0 : i32
    %c0_i32_0 = arith.constant 0 : i32
    %c0_i32_1 = arith.constant 0 : i32
    %c0_i32_2 = arith.constant 0 : i32
    return %arg0, %c0_i32, %c0_i32_0, %c0_i32_1 : i32, i32, i32, i32
  }
  func.func @transform_1(%arg0: i32) -> (i32, i32) {
    %c0_i32 = arith.constant 0 : i32
    %c0_i32_0 = arith.constant 0 : i32
    %c0_i32_1 = arith.constant 0 : i32
    return %c0_i32, %c0_i32_0 : i32, i32
  }
  func.func @transform_2(%arg0: i32) -> (i32, i32) {
    %c0_i32 = arith.constant 0 : i32
    %c0_i32_0 = arith.constant 0 : i32
    %c0_i32_1 = arith.constant 0 : i32
    return %c0_i32, %c0_i32_0 : i32, i32
  }
  func.func @transform_3(%arg0: i32) -> (i32, i32, i32) {
    %c0_i32 = arith.constant 0 : i32
    %c0_i32_0 = arith.constant 0 : i32
    %c0_i32_1 = arith.constant 0 : i32
    return %arg0, %c0_i32, %c0_i32_0 : i32, i32, i32
  }
}

module attributes {stable_mosaic.version = 11 : i64} {
  func.func @_conv_im2col_kernel(%arg0: i32, %arg1: memref<1x8x4x64xf32, #tpu.memory_space<vmem>>, %arg2: memref<512x64xf32, #tpu.memory_space<vmem>>, %arg3: memref<1x64xf32, #tpu.memory_space<vmem>>, %arg4: memref<1x9x64xf32, #tpu.memory_space<vmem>>) attributes {dimension_semantics = [#tpu.dimension_semantics<parallel>], iteration_bounds = array<i64: 2>, scalar_prefetch = 0 : i64, scratch_operands = 0 : i64, tpu.core_type = #tpu.core_type<tc>, window_params = [{transform_indices = @transform_0, window_bounds = array<i64: 1, 8, 4, 64>}, {pipeline_mode = #tpu.pipeline_mode<synchronous>, transform_indices = @transform_1, window_bounds = array<i64: 512, 64>}, {pipeline_mode = #tpu.pipeline_mode<synchronous>, transform_indices = @transform_2, window_bounds = array<i64: 1, 64>}, {transform_indices = @transform_3, window_bounds = array<i64: 1, 9, 64>}]} {
    %c0 = arith.constant 0 : index
    %c0_0 = arith.constant 0 : index
    %c0_1 = arith.constant 0 : index
    %c0_2 = arith.constant 0 : index
    %0 = vector.load %arg1[%c0, %c0_0, %c0_1, %c0_2] : memref<1x8x4x64xf32, #tpu.memory_space<vmem>>, vector<1x8x4x64xf32>
    %1 = vector.shape_cast %0 : vector<1x8x4x64xf32> to vector<8x4x64xf32>
    %2 = vector.extract_strided_slice %1 {offsets = [0, 0, 0], sizes = [1, 4, 64], strides = [1, 1, 1]} : vector<8x4x64xf32> to vector<1x4x64xf32>
    %3 = vector.shape_cast %2 : vector<1x4x64xf32> to vector<4x64xf32>
    %4 = vector.extract_strided_slice %3 {offsets = [0, 0], sizes = [3, 64], strides = [1, 1]} : vector<4x64xf32> to vector<3x64xf32>
    %5 = vector.extract_strided_slice %3 {offsets = [1, 0], sizes = [3, 64], strides = [1, 1]} : vector<4x64xf32> to vector<3x64xf32>
    %6 = vector.extract_strided_slice %1 {offsets = [1, 0, 0], sizes = [1, 4, 64], strides = [1, 1, 1]} : vector<8x4x64xf32> to vector<1x4x64xf32>
    %7 = vector.shape_cast %6 : vector<1x4x64xf32> to vector<4x64xf32>
    %8 = vector.extract_strided_slice %7 {offsets = [0, 0], sizes = [3, 64], strides = [1, 1]} : vector<4x64xf32> to vector<3x64xf32>
    %9 = vector.extract_strided_slice %7 {offsets = [1, 0], sizes = [3, 64], strides = [1, 1]} : vector<4x64xf32> to vector<3x64xf32>
    %10 = vector.extract_strided_slice %1 {offsets = [2, 0, 0], sizes = [1, 4, 64], strides = [1, 1, 1]} : vector<8x4x64xf32> to vector<1x4x64xf32>
    %11 = vector.shape_cast %10 : vector<1x4x64xf32> to vector<4x64xf32>
    %12 = vector.extract_strided_slice %11 {offsets = [0, 0], sizes = [3, 64], strides = [1, 1]} : vector<4x64xf32> to vector<3x64xf32>
    %13 = vector.extract_strided_slice %11 {offsets = [1, 0], sizes = [3, 64], strides = [1, 1]} : vector<4x64xf32> to vector<3x64xf32>
    %14 = vector.extract_strided_slice %1 {offsets = [3, 0, 0], sizes = [1, 4, 64], strides = [1, 1, 1]} : vector<8x4x64xf32> to vector<1x4x64xf32>
    %15 = vector.shape_cast %14 : vector<1x4x64xf32> to vector<4x64xf32>
    %16 = vector.extract_strided_slice %15 {offsets = [0, 0], sizes = [3, 64], strides = [1, 1]} : vector<4x64xf32> to vector<3x64xf32>
    %17 = vector.extract_strided_slice %15 {offsets = [1, 0], sizes = [3, 64], strides = [1, 1]} : vector<4x64xf32> to vector<3x64xf32>
    %18 = tpu.concatenate %4, %5, %8, %9, %12, %13, %16, %17 in 1 : vector<3x64xf32>, vector<3x64xf32>, vector<3x64xf32>, vector<3x64xf32>, vector<3x64xf32>, vector<3x64xf32>, vector<3x64xf32>, vector<3x64xf32> -> vector<3x512xf32>
    %19 = vector.extract_strided_slice %1 {offsets = [2, 0, 0], sizes = [1, 4, 64], strides = [1, 1, 1]} : vector<8x4x64xf32> to vector<1x4x64xf32>
    %20 = vector.shape_cast %19 : vector<1x4x64xf32> to vector<4x64xf32>
    %21 = vector.extract_strided_slice %20 {offsets = [0, 0], sizes = [3, 64], strides = [1, 1]} : vector<4x64xf32> to vector<3x64xf32>
    %22 = vector.extract_strided_slice %20 {offsets = [1, 0], sizes = [3, 64], strides = [1, 1]} : vector<4x64xf32> to vector<3x64xf32>
    %23 = vector.extract_strided_slice %1 {offsets = [3, 0, 0], sizes = [1, 4, 64], strides = [1, 1, 1]} : vector<8x4x64xf32> to vector<1x4x64xf32>
    %24 = vector.shape_cast %23 : vector<1x4x64xf32> to vector<4x64xf32>
    %25 = vector.extract_strided_slice %24 {offsets = [0, 0], sizes = [3, 64], strides = [1, 1]} : vector<4x64xf32> to vector<3x64xf32>
    %26 = vector.extract_strided_slice %24 {offsets = [1, 0], sizes = [3, 64], strides = [1, 1]} : vector<4x64xf32> to vector<3x64xf32>
    %27 = vector.extract_strided_slice %1 {offsets = [4, 0, 0], sizes = [1, 4, 64], strides = [1, 1, 1]} : vector<8x4x64xf32> to vector<1x4x64xf32>
    %28 = vector.shape_cast %27 : vector<1x4x64xf32> to vector<4x64xf32>
    %29 = vector.extract_strided_slice %28 {offsets = [0, 0], sizes = [3, 64], strides = [1, 1]} : vector<4x64xf32> to vector<3x64xf32>
    %30 = vector.extract_strided_slice %28 {offsets = [1, 0], sizes = [3, 64], strides = [1, 1]} : vector<4x64xf32> to vector<3x64xf32>
    %31 = vector.extract_strided_slice %1 {offsets = [5, 0, 0], sizes = [1, 4, 64], strides = [1, 1, 1]} : vector<8x4x64xf32> to vector<1x4x64xf32>
    %32 = vector.shape_cast %31 : vector<1x4x64xf32> to vector<4x64xf32>
    %33 = vector.extract_strided_slice %32 {offsets = [0, 0], sizes = [3, 64], strides = [1, 1]} : vector<4x64xf32> to vector<3x64xf32>
    %34 = vector.extract_strided_slice %32 {offsets = [1, 0], sizes = [3, 64], strides = [1, 1]} : vector<4x64xf32> to vector<3x64xf32>
    %35 = tpu.concatenate %21, %22, %25, %26, %29, %30, %33, %34 in 1 : vector<3x64xf32>, vector<3x64xf32>, vector<3x64xf32>, vector<3x64xf32>, vector<3x64xf32>, vector<3x64xf32>, vector<3x64xf32>, vector<3x64xf32> -> vector<3x512xf32>
    %36 = vector.extract_strided_slice %1 {offsets = [4, 0, 0], sizes = [1, 4, 64], strides = [1, 1, 1]} : vector<8x4x64xf32> to vector<1x4x64xf32>
    %37 = vector.shape_cast %36 : vector<1x4x64xf32> to vector<4x64xf32>
    %38 = vector.extract_strided_slice %37 {offsets = [0, 0], sizes = [3, 64], strides = [1, 1]} : vector<4x64xf32> to vector<3x64xf32>
    %39 = vector.extract_strided_slice %37 {offsets = [1, 0], sizes = [3, 64], strides = [1, 1]} : vector<4x64xf32> to vector<3x64xf32>
    %40 = vector.extract_strided_slice %1 {offsets = [5, 0, 0], sizes = [1, 4, 64], strides = [1, 1, 1]} : vector<8x4x64xf32> to vector<1x4x64xf32>
    %41 = vector.shape_cast %40 : vector<1x4x64xf32> to vector<4x64xf32>
    %42 = vector.extract_strided_slice %41 {offsets = [0, 0], sizes = [3, 64], strides = [1, 1]} : vector<4x64xf32> to vector<3x64xf32>
    %43 = vector.extract_strided_slice %41 {offsets = [1, 0], sizes = [3, 64], strides = [1, 1]} : vector<4x64xf32> to vector<3x64xf32>
    %44 = vector.extract_strided_slice %1 {offsets = [6, 0, 0], sizes = [1, 4, 64], strides = [1, 1, 1]} : vector<8x4x64xf32> to vector<1x4x64xf32>
    %45 = vector.shape_cast %44 : vector<1x4x64xf32> to vector<4x64xf32>
    %46 = vector.extract_strided_slice %45 {offsets = [0, 0], sizes = [3, 64], strides = [1, 1]} : vector<4x64xf32> to vector<3x64xf32>
    %47 = vector.extract_strided_slice %45 {offsets = [1, 0], sizes = [3, 64], strides = [1, 1]} : vector<4x64xf32> to vector<3x64xf32>
    %48 = vector.extract_strided_slice %1 {offsets = [7, 0, 0], sizes = [1, 4, 64], strides = [1, 1, 1]} : vector<8x4x64xf32> to vector<1x4x64xf32>
    %49 = vector.shape_cast %48 : vector<1x4x64xf32> to vector<4x64xf32>
    %50 = vector.extract_strided_slice %49 {offsets = [0, 0], sizes = [3, 64], strides = [1, 1]} : vector<4x64xf32> to vector<3x64xf32>
    %51 = vector.extract_strided_slice %49 {offsets = [1, 0], sizes = [3, 64], strides = [1, 1]} : vector<4x64xf32> to vector<3x64xf32>
    %52 = tpu.concatenate %38, %39, %42, %43, %46, %47, %50, %51 in 1 : vector<3x64xf32>, vector<3x64xf32>, vector<3x64xf32>, vector<3x64xf32>, vector<3x64xf32>, vector<3x64xf32>, vector<3x64xf32>, vector<3x64xf32> -> vector<3x512xf32>
    %53 = tpu.concatenate %18, %35, %52 in 0 : vector<3x512xf32>, vector<3x512xf32>, vector<3x512xf32> -> vector<9x512xf32>
    %54 = arith.truncf %53 : vector<9x512xf32> to vector<9x512xbf16>
    %c0_3 = arith.constant 0 : index
    %c0_4 = arith.constant 0 : index
    %55 = vector.load %arg2[%c0_3, %c0_4] : memref<512x64xf32, #tpu.memory_space<vmem>>, vector<512x64xf32>
    %56 = arith.truncf %55 : vector<512x64xf32> to vector<512x64xbf16>
    %cst = arith.constant dense<0.000000e+00> : vector<9x64xf32>
    %57 = tpu.matmul %54, %56, %cst {dimension_numbers = #tpu.dot_dimension_numbers<[1], [0], [0], [1], [0, 0, 1, 1], [], []>} : vector<9x512xbf16>, vector<512x64xbf16>, vector<9x64xf32> -> vector<9x64xf32>
    %c0_5 = arith.constant 0 : index
    %c0_6 = arith.constant 0 : index
    %58 = vector.load %arg3[%c0_5, %c0_6] : memref<1x64xf32, #tpu.memory_space<vmem>>, vector<1x64xf32>
    %59 = vector.broadcast %58 : vector<1x64xf32> to vector<9x64xf32>
    %60 = arith.addf %57, %59 : vector<9x64xf32>
    %cst_7 = arith.constant 0.000000e+00 : f32
    %61 = vector.broadcast %cst_7 : f32 to vector<9x64xf32>
    %62 = arith.maximumf %60, %61 : vector<9x64xf32>
    %c0_8 = arith.constant 0 : index
    %c0_9 = arith.constant 0 : index
    %c0_10 = arith.constant 0 : index
    %63 = vector.load %arg4[%c0_8, %c0_9, %c0_10] : memref<1x9x64xf32, #tpu.memory_space<vmem>>, vector<1x9x64xf32>
    %64 = vector.shape_cast %63 : vector<1x9x64xf32> to vector<9x64xf32>
    %65 = vector.shape_cast %62 : vector<9x64xf32> to vector<1x9x64xf32>
    tpu.vector_store %arg4[%c0_8, %c0_9, %c0_10], %65 {strides = array<i32>} : memref<1x9x64xf32, #tpu.memory_space<vmem>>, vector<1x9x64xf32>,
    return
  }
  func.func @transform_0(%arg0: i32) -> (i32, i32, i32, i32) {
    %c0_i32 = arith.constant 0 : i32
    %c0_i32_0 = arith.constant 0 : i32
    %c0_i32_1 = arith.constant 0 : i32
    %c0_i32_2 = arith.constant 0 : i32
    return %arg0, %c0_i32, %c0_i32_0, %c0_i32_1 : i32, i32, i32, i32
  }
  func.func @transform_1(%arg0: i32) -> (i32, i32) {
    %c0_i32 = arith.constant 0 : i32
    %c0_i32_0 = arith.constant 0 : i32
    %c0_i32_1 = arith.constant 0 : i32
    return %c0_i32, %c0_i32_0 : i32, i32
  }
  func.func @transform_2(%arg0: i32) -> (i32, i32) {
    %c0_i32 = arith.constant 0 : i32
    %c0_i32_0 = arith.constant 0 : i32
    %c0_i32_1 = arith.constant 0 : i32
    return %c0_i32, %c0_i32_0 : i32, i32
  }
  func.func @transform_3(%arg0: i32) -> (i32, i32, i32) {
    %c0_i32 = arith.constant 0 : i32
    %c0_i32_0 = arith.constant 0 : i32
    %c0_i32_1 = arith.constant 0 : i32
    return %arg0, %c0_i32, %c0_i32_0 : i32, i32, i32
  }
}

module attributes {stable_mosaic.version = 11 : i64} {
  func.func @_conv_im2col_kernel(%arg0: i32, %arg1: memref<1x3x3x64xf32, #tpu.memory_space<vmem>>, %arg2: memref<576x64xf32, #tpu.memory_space<vmem>>, %arg3: memref<1x64xf32, #tpu.memory_space<vmem>>, %arg4: memref<1x1x64xf32, #tpu.memory_space<vmem>>) attributes {dimension_semantics = [#tpu.dimension_semantics<parallel>], iteration_bounds = array<i64: 2>, scalar_prefetch = 0 : i64, scratch_operands = 0 : i64, tpu.core_type = #tpu.core_type<tc>, window_params = [{transform_indices = @transform_0, window_bounds = array<i64: 1, 3, 3, 64>}, {pipeline_mode = #tpu.pipeline_mode<synchronous>, transform_indices = @transform_1, window_bounds = array<i64: 576, 64>}, {pipeline_mode = #tpu.pipeline_mode<synchronous>, transform_indices = @transform_2, window_bounds = array<i64: 1, 64>}, {transform_indices = @transform_3, window_bounds = array<i64: 1, 1, 64>}]} {
    %c0 = arith.constant 0 : index
    %c0_0 = arith.constant 0 : index
    %c0_1 = arith.constant 0 : index
    %c0_2 = arith.constant 0 : index
    %0 = vector.load %arg1[%c0, %c0_0, %c0_1, %c0_2] : memref<1x3x3x64xf32, #tpu.memory_space<vmem>>, vector<1x3x3x64xf32>
    %1 = vector.shape_cast %0 : vector<1x3x3x64xf32> to vector<3x3x64xf32>
    %2 = vector.extract_strided_slice %1 {offsets = [0, 0, 0], sizes = [1, 3, 64], strides = [1, 1, 1]} : vector<3x3x64xf32> to vector<1x3x64xf32>
    %3 = vector.shape_cast %2 : vector<1x3x64xf32> to vector<3x64xf32>
    %4 = vector.extract_strided_slice %3 {offsets = [0, 0], sizes = [1, 64], strides = [1, 1]} : vector<3x64xf32> to vector<1x64xf32>
    %5 = vector.extract_strided_slice %3 {offsets = [1, 0], sizes = [1, 64], strides = [1, 1]} : vector<3x64xf32> to vector<1x64xf32>
    %6 = vector.extract_strided_slice %3 {offsets = [2, 0], sizes = [1, 64], strides = [1, 1]} : vector<3x64xf32> to vector<1x64xf32>
    %7 = vector.extract_strided_slice %1 {offsets = [1, 0, 0], sizes = [1, 3, 64], strides = [1, 1, 1]} : vector<3x3x64xf32> to vector<1x3x64xf32>
    %8 = vector.shape_cast %7 : vector<1x3x64xf32> to vector<3x64xf32>
    %9 = vector.extract_strided_slice %8 {offsets = [0, 0], sizes = [1, 64], strides = [1, 1]} : vector<3x64xf32> to vector<1x64xf32>
    %10 = vector.extract_strided_slice %8 {offsets = [1, 0], sizes = [1, 64], strides = [1, 1]} : vector<3x64xf32> to vector<1x64xf32>
    %11 = vector.extract_strided_slice %8 {offsets = [2, 0], sizes = [1, 64], strides = [1, 1]} : vector<3x64xf32> to vector<1x64xf32>
    %12 = vector.extract_strided_slice %1 {offsets = [2, 0, 0], sizes = [1, 3, 64], strides = [1, 1, 1]} : vector<3x3x64xf32> to vector<1x3x64xf32>
    %13 = vector.shape_cast %12 : vector<1x3x64xf32> to vector<3x64xf32>
    %14 = vector.extract_strided_slice %13 {offsets = [0, 0], sizes = [1, 64], strides = [1, 1]} : vector<3x64xf32> to vector<1x64xf32>
    %15 = vector.extract_strided_slice %13 {offsets = [1, 0], sizes = [1, 64], strides = [1, 1]} : vector<3x64xf32> to vector<1x64xf32>
    %16 = vector.extract_strided_slice %13 {offsets = [2, 0], sizes = [1, 64], strides = [1, 1]} : vector<3x64xf32> to vector<1x64xf32>
    %17 = tpu.concatenate %4, %5, %6, %9, %10, %11, %14, %15, %16 in 1 : vector<1x64xf32>, vector<1x64xf32>, vector<1x64xf32>, vector<1x64xf32>, vector<1x64xf32>, vector<1x64xf32>, vector<1x64xf32>, vector<1x64xf32>, vector<1x64xf32> -> vector<1x576xf32>
    %18 = arith.truncf %17 : vector<1x576xf32> to vector<1x576xbf16>
    %c0_3 = arith.constant 0 : index
    %c0_4 = arith.constant 0 : index
    %19 = vector.load %arg2[%c0_3, %c0_4] : memref<576x64xf32, #tpu.memory_space<vmem>>, vector<576x64xf32>
    %20 = arith.truncf %19 : vector<576x64xf32> to vector<576x64xbf16>
    %cst = arith.constant dense<0.000000e+00> : vector<1x64xf32>
    %21 = tpu.matmul %18, %20, %cst {dimension_numbers = #tpu.dot_dimension_numbers<[1], [0], [0], [1], [0, 0, 1, 1], [], []>} : vector<1x576xbf16>, vector<576x64xbf16>, vector<1x64xf32> -> vector<1x64xf32>
    %c0_5 = arith.constant 0 : index
    %c0_6 = arith.constant 0 : index
    %22 = vector.load %arg3[%c0_5, %c0_6] : memref<1x64xf32, #tpu.memory_space<vmem>>, vector<1x64xf32>
    %23 = arith.addf %21, %22 : vector<1x64xf32>
    %cst_7 = arith.constant 0.000000e+00 : f32
    %24 = vector.broadcast %cst_7 : f32 to vector<1x64xf32>
    %25 = arith.maximumf %23, %24 : vector<1x64xf32>
    %c0_8 = arith.constant 0 : index
    %c0_9 = arith.constant 0 : index
    %c0_10 = arith.constant 0 : index
    %26 = vector.load %arg4[%c0_8, %c0_9, %c0_10] : memref<1x1x64xf32, #tpu.memory_space<vmem>>, vector<1x1x64xf32>
    %27 = vector.shape_cast %26 : vector<1x1x64xf32> to vector<1x64xf32>
    %28 = vector.shape_cast %25 : vector<1x64xf32> to vector<1x1x64xf32>
    tpu.vector_store %arg4[%c0_8, %c0_9, %c0_10], %28 {strides = array<i32>} : memref<1x1x64xf32, #tpu.memory_space<vmem>>, vector<1x1x64xf32>,
    return
  }
  func.func @transform_0(%arg0: i32) -> (i32, i32, i32, i32) {
    %c0_i32 = arith.constant 0 : i32
    %c0_i32_0 = arith.constant 0 : i32
    %c0_i32_1 = arith.constant 0 : i32
    %c0_i32_2 = arith.constant 0 : i32
    return %arg0, %c0_i32, %c0_i32_0, %c0_i32_1 : i32, i32, i32, i32
  }
  func.func @transform_1(%arg0: i32) -> (i32, i32) {
    %c0_i32 = arith.constant 0 : i32
    %c0_i32_0 = arith.constant 0 : i32
    %c0_i32_1 = arith.constant 0 : i32
    return %c0_i32, %c0_i32_0 : i32, i32
  }
  func.func @transform_2(%arg0: i32) -> (i32, i32) {
    %c0_i32 = arith.constant 0 : i32
    %c0_i32_0 = arith.constant 0 : i32
    %c0_i32_1 = arith.constant 0 : i32
    return %c0_i32, %c0_i32_0 : i32, i32
  }
  func.func @transform_3(%arg0: i32) -> (i32, i32, i32) {
    %c0_i32 = arith.constant 0 : i32
    %c0_i32_0 = arith.constant 0 : i32
    %c0_i32_1 = arith.constant 0 : i32
    return %arg0, %c0_i32, %c0_i32_0 : i32, i32, i32
  }
}

module attributes {stable_mosaic.version = 11 : i64} {
  func.func @_noisy_head_kernel(%arg0: i32, %arg1: i32, %arg2: memref<2x64xf32, #tpu.memory_space<vmem>>, %arg3: memref<512x64xf32, #tpu.memory_space<vmem>>, %arg4: memref<512x64xf32, #tpu.memory_space<vmem>>, %arg5: memref<512x64xf32, #tpu.memory_space<vmem>>, %arg6: memref<1x512xf32, #tpu.memory_space<vmem>>, %arg7: memref<128x512xf32, #tpu.memory_space<vmem>>, %arg8: memref<128x512xf32, #tpu.memory_space<vmem>>, %arg9: memref<128x512xf32, #tpu.memory_space<vmem>>, %arg10: memref<1x128xf32, #tpu.memory_space<vmem>>, %arg11: memref<2x128xf32, #tpu.memory_space<vmem>>, %arg12: memref<2x512xf32, #tpu.memory_space<vmem>>) attributes {dimension_semantics = [#tpu.dimension_semantics<parallel>, #tpu.dimension_semantics<arbitrary>], iteration_bounds = array<i64: 1, 1>, scalar_prefetch = 0 : i64, scratch_operands = 1 : i64, tpu.core_type = #tpu.core_type<tc>, window_params = [{transform_indices = @transform_0, window_bounds = array<i64: 2, 64>}, {transform_indices = @transform_1, window_bounds = array<i64: 512, 64>}, {transform_indices = @transform_2, window_bounds = array<i64: 512, 64>}, {transform_indices = @transform_3, window_bounds = array<i64: 512, 64>}, {pipeline_mode = #tpu.pipeline_mode<synchronous>, transform_indices = @transform_4, window_bounds = array<i64: 1, 512>}, {pipeline_mode = #tpu.pipeline_mode<synchronous>, transform_indices = @transform_5, window_bounds = array<i64: 128, 512>}, {pipeline_mode = #tpu.pipeline_mode<synchronous>, transform_indices = @transform_6, window_bounds = array<i64: 128, 512>}, {pipeline_mode = #tpu.pipeline_mode<synchronous>, transform_indices = @transform_7, window_bounds = array<i64: 128, 512>}, {pipeline_mode = #tpu.pipeline_mode<synchronous>, transform_indices = @transform_8, window_bounds = array<i64: 1, 128>}, {transform_indices = @transform_9, window_bounds = array<i64: 2, 128>}]} {
    %c0_i32 = arith.constant 0 : i32
    %0 = arith.cmpi eq, %arg1, %c0_i32 : i32
    %1 = arith.extui %0 : i1 to i32
    %c0_i32_0 = arith.constant 0 : i32
    %2 = arith.cmpi ne, %1, %c0_i32_0 : i32
    scf.if %2 {
      %cst_14 = arith.constant 0.000000e+00 : f32
      %18 = vector.broadcast %cst_14 : f32 to vector<2x512xf32>
      %c0_15 = arith.constant 0 : index
      %c0_16 = arith.constant 0 : index
      %19 = vector.load %arg12[%c0_15, %c0_16] : memref<2x512xf32, #tpu.memory_space<vmem>>, vector<2x512xf32>
      tpu.vector_store %arg12[%c0_15, %c0_16], %18 {strides = array<i32>} : memref<2x512xf32, #tpu.memory_space<vmem>>, vector<2x512xf32>,
    } else {
    }
    %c0 = arith.constant 0 : index
    %c0_1 = arith.constant 0 : index
    %3 = vector.load %arg3[%c0, %c0_1] : memref<512x64xf32, #tpu.memory_space<vmem>>, vector<512x64xf32>
    %c0_2 = arith.constant 0 : index
    %c0_3 = arith.constant 0 : index
    %4 = vector.load %arg4[%c0_2, %c0_3] : memref<512x64xf32, #tpu.memory_space<vmem>>, vector<512x64xf32>
    %c0_4 = arith.constant 0 : index
    %c0_5 = arith.constant 0 : index
    %5 = vector.load %arg5[%c0_4, %c0_5] : memref<512x64xf32, #tpu.memory_space<vmem>>, vector<512x64xf32>
    %6 = arith.mulf %4, %5 : vector<512x64xf32>
    %7 = arith.addf %3, %6 : vector<512x64xf32>
    %c0_6 = arith.constant 0 : index
    %c0_7 = arith.constant 0 : index
    %8 = vector.load %arg12[%c0_6, %c0_7] : memref<2x512xf32, #tpu.memory_space<vmem>>, vector<2x512xf32>
    %c0_8 = arith.constant 0 : index
    %c0_9 = arith.constant 0 : index
    %9 = vector.load %arg2[%c0_8, %c0_9] : memref<2x64xf32, #tpu.memory_space<vmem>>, vector<2x64xf32>
    %10 = arith.truncf %9 : vector<2x64xf32> to vector<2x64xbf16>
    %11 = arith.truncf %7 : vector<512x64xf32> to vector<512x64xbf16>
    %cst = arith.constant dense<0.000000e+00> : vector<2x512xf32>
    %12 = tpu.matmul %10, %11, %cst {dimension_numbers = #tpu.dot_dimension_numbers<[1], [1], [0], [0], [0, 0, 1, 0], [], []>} : vector<2x64xbf16>, vector<512x64xbf16>, vector<2x512xf32> -> vector<2x512xf32>
    %13 = arith.addf %8, %12 : vector<2x512xf32>
    %c0_10 = arith.constant 0 : index
    %c0_11 = arith.constant 0 : index
    %14 = vector.load %arg12[%c0_10, %c0_11] : memref<2x512xf32, #tpu.memory_space<vmem>>, vector<2x512xf32>
    tpu.vector_store %arg12[%c0_10, %c0_11], %13 {strides = array<i32>} : memref<2x512xf32, #tpu.memory_space<vmem>>, vector<2x512xf32>,
    %c0_i32_12 = arith.constant 0 : i32
    %15 = arith.cmpi eq, %arg1, %c0_i32_12 : i32
    %16 = arith.extui %15 : i1 to i32
    %c0_i32_13 = arith.constant 0 : i32
    %17 = arith.cmpi ne, %16, %c0_i32_13 : i32
    scf.if %17 {
      %c0_14 = arith.constant 0 : index
      %c0_15 = arith.constant 0 : index
      %18 = vector.load %arg12[%c0_14, %c0_15] : memref<2x512xf32, #tpu.memory_space<vmem>>, vector<2x512xf32>
      %c0_16 = arith.constant 0 : index
      %c0_17 = arith.constant 0 : index
      %19 = vector.load %arg6[%c0_16, %c0_17] : memref<1x512xf32, #tpu.memory_space<vmem>>, vector<1x512xf32>
      %20 = vector.broadcast %19 : vector<1x512xf32> to vector<2x512xf32>
      %21 = arith.addf %18, %20 : vector<2x512xf32>
      %cst_18 = arith.constant 0.000000e+00 : f32
      %22 = vector.broadcast %cst_18 : f32 to vector<2x512xf32>
      %23 = arith.maximumf %21, %22 : vector<2x512xf32>
      %c0_19 = arith.constant 0 : index
      %c0_20 = arith.constant 0 : index
      %24 = vector.load %arg7[%c0_19, %c0_20] : memref<128x512xf32, #tpu.memory_space<vmem>>, vector<128x512xf32>
      %c0_21 = arith.constant 0 : index
      %c0_22 = arith.constant 0 : index
      %25 = vector.load %arg8[%c0_21, %c0_22] : memref<128x512xf32, #tpu.memory_space<vmem>>, vector<128x512xf32>
      %c0_23 = arith.constant 0 : index
      %c0_24 = arith.constant 0 : index
      %26 = vector.load %arg9[%c0_23, %c0_24] : memref<128x512xf32, #tpu.memory_space<vmem>>, vector<128x512xf32>
      %27 = arith.mulf %25, %26 : vector<128x512xf32>
      %28 = arith.addf %24, %27 : vector<128x512xf32>
      %29 = arith.truncf %23 : vector<2x512xf32> to vector<2x512xbf16>
      %30 = arith.truncf %28 : vector<128x512xf32> to vector<128x512xbf16>
      %cst_25 = arith.constant dense<0.000000e+00> : vector<2x128xf32>
      %31 = tpu.matmul %29, %30, %cst_25 {dimension_numbers = #tpu.dot_dimension_numbers<[1], [1], [0], [0], [0, 0, 1, 0], [], []>} : vector<2x512xbf16>, vector<128x512xbf16>, vector<2x128xf32> -> vector<2x128xf32>
      %c0_26 = arith.constant 0 : index
      %c0_27 = arith.constant 0 : index
      %32 = vector.load %arg10[%c0_26, %c0_27] : memref<1x128xf32, #tpu.memory_space<vmem>>, vector<1x128xf32>
      %33 = vector.broadcast %32 : vector<1x128xf32> to vector<2x128xf32>
      %34 = arith.addf %31, %33 : vector<2x128xf32>
      %c0_28 = arith.constant 0 : index
      %c0_29 = arith.constant 0 : index
      %35 = vector.load %arg11[%c0_28, %c0_29] : memref<2x128xf32, #tpu.memory_space<vmem>>, vector<2x128xf32>
      tpu.vector_store %arg11[%c0_28, %c0_29], %34 {strides = array<i32>} : memref<2x128xf32, #tpu.memory_space<vmem>>, vector<2x128xf32>,
    } else {
    }
    return
  }
  func.func @transform_0(%arg0: i32, %arg1: i32) -> (i32, i32) {
    %c0_i32 = arith.constant 0 : i32
    return %arg0, %arg1 : i32, i32
  }
  func.func @transform_1(%arg0: i32, %arg1: i32) -> (i32, i32) {
    %c0_i32 = arith.constant 0 : i32
    %c0_i32_0 = arith.constant 0 : i32
    return %c0_i32, %arg1 : i32, i32
  }
  func.func @transform_2(%arg0: i32, %arg1: i32) -> (i32, i32) {
    %c0_i32 = arith.constant 0 : i32
    %c0_i32_0 = arith.constant 0 : i32
    return %c0_i32, %arg1 : i32, i32
  }
  func.func @transform_3(%arg0: i32, %arg1: i32) -> (i32, i32) {
    %c0_i32 = arith.constant 0 : i32
    %c0_i32_0 = arith.constant 0 : i32
    return %c0_i32, %arg1 : i32, i32
  }
  func.func @transform_4(%arg0: i32, %arg1: i32) -> (i32, i32) {
    %c0_i32 = arith.constant 0 : i32
    %c0_i32_0 = arith.constant 0 : i32
    %c0_i32_1 = arith.constant 0 : i32
    return %c0_i32, %c0_i32_0 : i32, i32
  }
  func.func @transform_5(%arg0: i32, %arg1: i32) -> (i32, i32) {
    %c0_i32 = arith.constant 0 : i32
    %c0_i32_0 = arith.constant 0 : i32
    %c0_i32_1 = arith.constant 0 : i32
    return %c0_i32, %c0_i32_0 : i32, i32
  }
  func.func @transform_6(%arg0: i32, %arg1: i32) -> (i32, i32) {
    %c0_i32 = arith.constant 0 : i32
    %c0_i32_0 = arith.constant 0 : i32
    %c0_i32_1 = arith.constant 0 : i32
    return %c0_i32, %c0_i32_0 : i32, i32
  }
  func.func @transform_7(%arg0: i32, %arg1: i32) -> (i32, i32) {
    %c0_i32 = arith.constant 0 : i32
    %c0_i32_0 = arith.constant 0 : i32
    %c0_i32_1 = arith.constant 0 : i32
    return %c0_i32, %c0_i32_0 : i32, i32
  }
  func.func @transform_8(%arg0: i32, %arg1: i32) -> (i32, i32) {
    %c0_i32 = arith.constant 0 : i32
    %c0_i32_0 = arith.constant 0 : i32
    %c0_i32_1 = arith.constant 0 : i32
    return %c0_i32, %c0_i32_0 : i32, i32
  }
  func.func @transform_9(%arg0: i32, %arg1: i32) -> (i32, i32) {
    %c0_i32 = arith.constant 0 : i32
    %c0_i32_0 = arith.constant 0 : i32
    return %arg0, %c0_i32 : i32, i32
  }
}

</mosaic_0001>

<llo_original>
// kernel: noisy_dqn_forward.7
$region0: #{noisy_dqn_forward.7}
  #allocation0 [shape = 'u32[]', space=smem, size = 0x4, offset = 0x4, fixed_abs, tag = 'smem constant byte address 0x4 - core index']
  #allocation1 [shape = 'u32[72,128]{1,0:T(1,128)}', space=vmem, size = 0x9000, scoped, tag = 'internal scratch']
  %s0 = inlined_call_operand.vmem [shape: f32[2,8,4,64], index: 0, kind: input, shape index: {}]
  %s1 = inlined_call_operand.vmem [shape: f32[512,64], index: 1, kind: input, shape index: {}]
  %s2 = inlined_call_operand.vmem [shape: f32[1,64], index: 2, kind: input, shape index: {}]
  %s3 = inlined_call_operand.vmem [shape: f32[2,9,64], index: 3, kind: output, shape index: {}]
  %s4 = sld [smem:[#allocation0]]
  $region45: #{noisy_dqn_forward.7} parent=0
    _
  %s6 = ssub.s32 1, %s4
  %s7 = scalar_select 0, %s6, %s4
  loop: start=0, step=1, limit=4
  $region2: #{noisy_dqn_forward.7} parent=0 // loop_pre_header
    _
  $region3: #{noisy_dqn_forward.7} parent=0 // loop_header
    %s9 = sphi 0, %s13
    %p10 = scmp.ge.s32.totalorder %s9, 4
    %s19 = sphi 0, %s21
    %s22 = sphi 0, %s19
    %s23 = sphi 0, %s22
    %s39 = sphi 0, %s23
    %s43 = sphi 0, %s43
    %s45 = sphi 0, %s43
    %s46 = sphi 0, %s45
    %s60 = sphi 0, %s46
    %s64 = sphi 0, %s64
    %s66 = sphi 0, %s64
    %s67 = sphi 0, %s66
    %s81 = sphi 0, %s67
    %s87 = sphi 0, %s89
    %s90 = sphi 0, %s87
    %s91 = sphi 0, %s90
    %s107 = sphi 0, %s91
  $region4: #{noisy_dqn_forward.7} parent=0 // loop_header_branch
    %12 = sbr.rel (%p10) target = $region8
  $region5: #{noisy_dqn_forward.7} parent=0 // loop_body
    %s14 = ssub.s32 %s9, 1
    %s15 = ssub.s32 %s9, 2
    %s16 = sadd.s32 %s9, 1
    %s17 = ssub.s32 %s9, %s16
    %p18 = scmp.eq.s32.totalorder %s17, 0
    %s20 = sadd.s32 %s19, 1
    %s21 = scalar_select %p18, %s19, %s20
    %p24 = pneg %p18
    %p25 = scmp.eq.s32.totalorder %s9, 1
    %p26 = por %p24, %p25
    %p27 = scmp.ne.s32.totalorder %s19, %s22
    %p28 = scmp.eq.s32.totalorder %s9, 0
    %p29 = por %p27, %p28
    %p30 = scmp.ne.s32.totalorder %s19, %s22
    %p31 = scmp.eq.s32.totalorder %s14, 1
    %p32 = por %p30, %p31
    %p33 = scmp.ne.s32.totalorder %s22, %s23
    %p34 = scmp.eq.s32.totalorder %s14, 0
    %p35 = por %p33, %p34
    %p36 = scmp.ne.s32.totalorder %s22, %s23
    %p37 = scmp.eq.s32.totalorder %s15, 1
    %p38 = por %p36, %p37
    %p40 = scmp.ne.s32.totalorder %s23, %s39
    %p41 = scmp.eq.s32.totalorder %s15, 0
    %p42 = por %p40, %p41
    %s44 = sadd.s32 %s43, 1
    %p47 = scmp.eq.s32.totalorder %s9, 1
    %p48 = scmp.ne.s32.totalorder %s43, %s45
    %p49 = scmp.eq.s32.totalorder %s9, 0
    %p50 = por %p48, %p49
    %p51 = scmp.ne.s32.totalorder %s43, %s45
    %p52 = scmp.eq.s32.totalorder %s14, 1
    %p53 = por %p51, %p52
    %p54 = scmp.ne.s32.totalorder %s45, %s46
    %p55 = scmp.eq.s32.totalorder %s14, 0
    %p56 = por %p54, %p55
    %p57 = scmp.ne.s32.totalorder %s45, %s46
    %p58 = scmp.eq.s32.totalorder %s15, 1
    %p59 = por %p57, %p58
    %p61 = scmp.ne.s32.totalorder %s46, %s60
    %p62 = scmp.eq.s32.totalorder %s15, 0
    %p63 = por %p61, %p62
    %s65 = sadd.s32 %s64, 1
    %p68 = scmp.eq.s32.totalorder %s9, 1
    %p69 = scmp.ne.s32.totalorder %s64, %s66
    %p70 = scmp.eq.s32.totalorder %s9, 0
    %p71 = por %p69, %p70
    %p72 = scmp.ne.s32.totalorder %s64, %s66
    %p73 = scmp.eq.s32.totalorder %s14, 1
    %p74 = por %p72, %p73
    %p75 = scmp.ne.s32.totalorder %s66, %s67
    %p76 = scmp.eq.s32.totalorder %s14, 0
    %p77 = por %p75, %p76
    %p78 = scmp.ne.s32.totalorder %s66, %s67
    %p79 = scmp.eq.s32.totalorder %s15, 1
    %p80 = por %p78, %p79
    %p82 = scmp.ne.s32.totalorder %s67, %s81
    %p83 = scmp.eq.s32.totalorder %s15, 0
    %p84 = por %p82, %p83
    %s85 = ssub.s32 %s9, %s16
    %p86 = scmp.eq.s32.totalorder %s85, 0
    %s88 = sadd.s32 %s87, 1
    %s89 = scalar_select %p86, %s87, %s88
    %p92 = pneg %p86
    %p93 = scmp.eq.s32.totalorder %s9, 1
    %p94 = por %p92, %p93
    %p95 = scmp.ne.s32.totalorder %s87, %s90
    %p96 = scmp.eq.s32.totalorder %s9, 0
    %p97 = por %p95, %p96
    %p98 = scmp.ne.s32.totalorder %s87, %s90
    %p99 = scmp.eq.s32.totalorder %s14, 1
    %p100 = por %p98, %p99
    %p101 = scmp.ne.s32.totalorder %s90, %s91
    %p102 = scmp.eq.s32.totalorder %s14, 0
    %p103 = por %p101, %p102
    %p104 = scmp.ne.s32.totalorder %s90, %s91
    %p105 = scmp.eq.s32.totalorder %s15, 1
    %p106 = por %p104, %p105
    %p108 = scmp.ne.s32.totalorder %s91, %s107
    %p109 = scmp.eq.s32.totalorder %s15, 0
    %p110 = por %p108, %p109
    %p111 = scmp.le.s32.totalorder 1, %s9
    %p112 = scmp.lt.s32.totalorder %s9, 3
    %p113 = pnand %p111, %p112
    %p114 = pneg %p113
    // Predicated region
    $region9: #{noisy_dqn_forward.7} parent=5 // pred_check
      _
    $region10: #{noisy_dqn_forward.7} parent=5 // pred_check_branch
      %116 = sbr.rel (%p113) target = $region12
    $region11: #{noisy_dqn_forward.7} parent=5 // pred_region
      %s117 = ssub.s32 %s9, 1
      // Predicated region
      $region13: #{noisy_dqn_forward.7} parent=11 // pred_check
        %p118 = pneg %p56
      $region14: #{noisy_dqn_forward.7} parent=11 // pred_check_branch
        %120 = sbr.rel (%p118) target = $region16
      $region15: #{noisy_dqn_forward.7} parent=11 // pred_region
        _
      $region16: #{noisy_dqn_forward.7} parent=11 // pred_fallthru
        _
      // Predicated region
      $region17: #{noisy_dqn_forward.7} parent=11 // pred_check
        %p121 = pneg %p77
      $region18: #{noisy_dqn_forward.7} parent=11 // pred_check_branch
        %123 = sbr.rel (%p121) target = $region20
      $region19: #{noisy_dqn_forward.7} parent=11 // pred_region
        _
      $region20: #{noisy_dqn_forward.7} parent=11 // pred_fallthru
        _
    $region12: #{noisy_dqn_forward.7} parent=5 // pred_fallthru
      _
    %p124 = scmp.lt.s32.totalorder %s9, 2
    // Predicated region
    $region21: #{noisy_dqn_forward.7} parent=5 // pred_check
      %p125 = pneg %p124
    $region22: #{noisy_dqn_forward.7} parent=5 // pred_check_branch
      %127 = sbr.rel (%p125) target = $region24
    $region23: #{noisy_dqn_forward.7} parent=5 // pred_region
      // Predicated region
      $region25: #{noisy_dqn_forward.7} parent=23 // pred_check
        %p128 = pneg %p29
      $region26: #{noisy_dqn_forward.7} parent=23 // pred_check_branch
        %130 = sbr.rel (%p128) target = $region28
      $region27: #{noisy_dqn_forward.7} parent=23 // pred_region
        %p131 = scmp.lt.s32.totalorder %s9, 1
        %s132 = scalar_select %p131, %s9, 1
        %s133 = smul.addr %s132, 8
        %s134 = smul.addr %s133, 4
        %s135 = scalar_lea.vmem %s0, %s134
      $region28: #{noisy_dqn_forward.7} parent=23 // pred_fallthru
        _
    $region24: #{noisy_dqn_forward.7} parent=5 // pred_fallthru
      _
    %p136 = scmp.le.s32.totalorder 1, %s9
    %p137 = scmp.lt.s32.totalorder %s9, 3
    %p138 = pnand %p136, %p137
    %p139 = pneg %p138
    // Predicated region
    $region29: #{noisy_dqn_forward.7} parent=5 // pred_check
      _
    $region30: #{noisy_dqn_forward.7} parent=5 // pred_check_branch
      %141 = sbr.rel (%p138) target = $region32
    $region31: #{noisy_dqn_forward.7} parent=5 // pred_region
      %s142 = ssub.s32 %s9, 1
      %p143 = scmp.lt.s32.totalorder %s14, 1
      %s144 = scalar_select %p143, %s14, 1
      %s145 = smul.addr %s144, 8
      %s146 = smul.addr %s145, 4
      %s147 = scalar_lea.vmem %s0, %s146
      %p148 = pneg %p35
      %p149 = pneg %p32
      %p150 = pneg %p56
      %p151 = pneg %p53
      %p152 = pneg %p77
      %p153 = pneg %p74
      %p154 = pneg %p103
      %p155 = pneg %p100
      %p156 = scmp.lt.s32.totalorder %s14, 1
      %s157 = scalar_select %p156, %s14, 1
      %s158 = smul.addr %s157, 2
      %s159 = smul.addr %s158, 8
      %s160 = scalar_lea.vmem %s3, %s159
      %p161 = scmp.lt.s32.totalorder %s14, 1
      %s162 = scalar_select %p161, %s14, 1
      %s163 = smul.addr %s162, 8
      %s164 = smul.addr %s163, 4
      %s165 = scalar_lea.vmem %s0, %s164
      %p166 = scmp.lt.s32.totalorder %s14, 1
      %s167 = scalar_select %p166, %s14, 1
      %s168 = smul.addr %s167, 2
      %s169 = smul.addr %s168, 8
      %s170 = scalar_lea.vmem %s3, %s169
      %v171 = vld [vmem:[%s165] sm:$0xf]
      %v172 = vld [vmem:[%s165 + $0x4] sm:$0xf]
      %v173 = vld [vmem:[%s165 + $0x8] sm:$0xf]
      %v174 = vld [vmem:[%s165 + $0xc] sm:$0xf]
      %v175 = vld [vmem:[%s165 + $0x10] sm:$0xf]
      %v176 = vld [vmem:[%s165 + $0x14] sm:$0xf]
      %v177 = vld [vmem:[%s165 + $0x18] sm:$0xf]
      %v178 = vld [vmem:[%s165 + $0x1c] sm:$0xf]
      %v180 = vrot.slane %v171, 1
      %181 = vrot.lane.b32.xlu0 %v180, 64
      %v182 = vpop.permute.xlu0 %181
      %v185 = vrot.slane %v172, 1
      %186 = vrot.lane.b32.xlu0 %v185, 64
      %v187 = vpop.permute.xlu0 %186
      %v190 = vrot.slane %v173, 1
      %191 = vrot.lane.b32.xlu0 %v190, 64
      %v192 = vpop.permute.xlu0 %191
      %v195 = vrot.slane %v174, 1
      %196 = vrot.lane.b32.xlu0 %v195, 64
      %v197 = vpop.permute.xlu0 %196
      %vm199 = vcmask 523264
      %v200 = vsel %vm199, %v171, %v182
      %v201 = vsel %vm199, %v172, %v187
      %v202 = vsel %vm199, %v173, %v192
      %v203 = vsel %vm199, %v174, %v197
      %v205 = vrot.slane %v175, 1
      %206 = vrot.lane.b32.xlu0 %v205, 64
      %v207 = vpop.permute.xlu0 %206
      %v210 = vrot.slane %v176, 1
      %211 = vrot.lane.b32.xlu0 %v210, 64
      %v212 = vpop.permute.xlu0 %211
      %v214 = vsel %vm199, %v175, %v207
      %v215 = vsel %vm199, %v176, %v212
      %v217 = vrot.slane %v177, 1
      %218 = vrot.lane.b32.xlu0 %v217, 64
      %v219 = vpop.permute.xlu0 %218
      %v222 = vrot.slane %v178, 1
      %223 = vrot.lane.b32.xlu0 %v222, 64
      %v224 = vpop.permute.xlu0 %223
      %v226 = vsel %vm199, %v177, %v219
      %v227 = vsel %vm199, %v178, %v224
      %v232 = vrot.slane %v202, 5
      %v233 = vrot.slane %v203, 5
      %v234 = vrot.slane %v214, 5
      %v235 = vrot.slane %v215, 5
      %v242 = vrot.slane %v214, 2
      %v243 = vrot.slane %v215, 2
      %v244 = vrot.slane %v226, 2
      %v245 = vrot.slane %v227, 2
      %vm250 = vcmask 1042432
      %v251 = vsel %vm250, %v200, %v232
      %v252 = vsel %vm250, %v201, %v233
      %v253 = vsel %vm250, %v202, %v234
      %v254 = vsel %vm250, %v203, %v235
      %vm255 = vcmask 1045504
      %v256 = vsel %vm255, %v251, %v242
      %v257 = vsel %vm255, %v252, %v243
      %v258 = vsel %vm255, %v253, %v244
      %v259 = vsel %vm255, %v254, %v245
      %v260 = vpack.c.bf16 %v242, %v256
      %v261 = vpack.c.bf16 %v243, %v257
      %v262 = vpack.c.bf16 %v244, %v258
      %v263 = vpack.c.bf16 %v245, %v259
      %v264 = vld [vmem:[%s1] sm:$0xff]
      %v265 = vld [vmem:[%s1 + $0x8] sm:$0xff]
      %v266 = vld [vmem:[%s1 + $0x10] sm:$0xff]
      %v267 = vld [vmem:[%s1 + $0x18] sm:$0xff]
      %v268 = vld [vmem:[%s1 + $0x20] sm:$0xff]
      %v269 = vld [vmem:[%s1 + $0x28] sm:$0xff]
      %v270 = vld [vmem:[%s1 + $0x30] sm:$0xff]
      %v271 = vld [vmem:[%s1 + $0x38] sm:$0xff]
      %v272 = vld [vmem:[%s1 + $0x40] sm:$0xff]
      %v273 = vld [vmem:[%s1 + $0x48] sm:$0xff]
      %v274 = vld [vmem:[%s1 + $0x50] sm:$0xff]
      %v275 = vld [vmem:[%s1 + $0x58] sm:$0xff]
      %v276 = vld [vmem:[%s1 + $0x60] sm:$0xff]
      %v277 = vld [vmem:[%s1 + $0x68] sm:$0xff]
      %v278 = vld [vmem:[%s1 + $0x70] sm:$0xff]
      %v279 = vld [vmem:[%s1 + $0x78] sm:$0xff]
      %v280 = vld [vmem:[%s1 + $0x80] sm:$0xff]
      %v281 = vld [vmem:[%s1 + $0x88] sm:$0xff]
      %v282 = vld [vmem:[%s1 + $0x90] sm:$0xff]
      %v283 = vld [vmem:[%s1 + $0x98] sm:$0xff]
      %v284 = vld [vmem:[%s1 + $0xa0] sm:$0xff]
      %v285 = vld [vmem:[%s1 + $0xa8] sm:$0xff]
      %v286 = vld [vmem:[%s1 + $0xb0] sm:$0xff]
      %v287 = vld [vmem:[%s1 + $0xb8] sm:$0xff]
      %v288 = vld [vmem:[%s1 + $0xc0] sm:$0xff]
      %v289 = vld [vmem:[%s1 + $0xc8] sm:$0xff]
      %v290 = vld [vmem:[%s1 + $0xd0] sm:$0xff]
      %v291 = vld [vmem:[%s1 + $0xd8] sm:$0xff]
      %v292 = vld [vmem:[%s1 + $0xe0] sm:$0xff]
      %v293 = vld [vmem:[%s1 + $0xe8] sm:$0xff]
      %v294 = vld [vmem:[%s1 + $0xf0] sm:$0xff]
      %v295 = vld [vmem:[%s1 + $0xf8] sm:$0xff]
      %v296 = vld [vmem:[%s1 + $0x100] sm:$0xff]
      %v297 = vld [vmem:[%s1 + $0x108] sm:$0xff]
      %v298 = vld [vmem:[%s1 + $0x110] sm:$0xff]
      %v299 = vld [vmem:[%s1 + $0x118] sm:$0xff]
      %v300 = vld [vmem:[%s1 + $0x120] sm:$0xff]
      %v301 = vld [vmem:[%s1 + $0x128] sm:$0xff]
      %v302 = vld [vmem:[%s1 + $0x130] sm:$0xff]
      %v303 = vld [vmem:[%s1 + $0x138] sm:$0xff]
      %v304 = vld [vmem:[%s1 + $0x140] sm:$0xff]
      %v305 = vld [vmem:[%s1 + $0x148] sm:$0xff]
      %v306 = vld [vmem:[%s1 + $0x150] sm:$0xff]
      %v307 = vld [vmem:[%s1 + $0x158] sm:$0xff]
      %v308 = vld [vmem:[%s1 + $0x160] sm:$0xff]
      %v309 = vld [vmem:[%s1 + $0x168] sm:$0xff]
      %v310 = vld [vmem:[%s1 + $0x170] sm:$0xff]
      %v311 = vld [vmem:[%s1 + $0x178] sm:$0xff]
      %v312 = vld [vmem:[%s1 + $0x180] sm:$0xff]
      %v313 = vld [vmem:[%s1 + $0x188] sm:$0xff]
      %v314 = vld [vmem:[%s1 + $0x190] sm:$0xff]
      %v315 = vld [vmem:[%s1 + $0x198] sm:$0xff]
      %v316 = vld [vmem:[%s1 + $0x1a0] sm:$0xff]
      %v317 = vld [vmem:[%s1 + $0x1a8] sm:$0xff]
      %v318 = vld [vmem:[%s1 + $0x1b0] sm:$0xff]
      %v319 = vld [vmem:[%s1 + $0x1b8] sm:$0xff]
      %v320 = vld [vmem:[%s1 + $0x1c0] sm:$0xff]
      %v321 = vld [vmem:[%s1 + $0x1c8] sm:$0xff]
      %v322 = vld [vmem:[%s1 + $0x1d0] sm:$0xff]
      %v323 = vld [vmem:[%s1 + $0x1d8] sm:$0xff]
      %v324 = vld [vmem:[%s1 + $0x1e0] sm:$0xff]
      %v325 = vld [vmem:[%s1 + $0x1e8] sm:$0xff]
      %v326 = vld [vmem:[%s1 + $0x1f0] sm:$0xff]
      %v327 = vld [vmem:[%s1 + $0x1f8] sm:$0xff]
      %v328 = vpack.c.bf16 %v265, %v264
      %v329 = vpack.c.bf16 %v267, %v266
      %v330 = vpack.c.bf16 %v269, %v268
      %v331 = vpack.c.bf16 %v271, %v270
      %v332 = vpack.c.bf16 %v273, %v272
      %v333 = vpack.c.bf16 %v275, %v274
      %v334 = vpack.c.bf16 %v277, %v276
      %v335 = vpack.c.bf16 %v279, %v278
      %v336 = vpack.c.bf16 %v281, %v280
      %v337 = vpack.c.bf16 %v283, %v282
      %v338 = vpack.c.bf16 %v285, %v284
      %v339 = vpack.c.bf16 %v287, %v286
      %v340 = vpack.c.bf16 %v289, %v288
      %v341 = vpack.c.bf16 %v291, %v290
      %v342 = vpack.c.bf16 %v293, %v292
      %v343 = vpack.c.bf16 %v295, %v294
      %v344 = vpack.c.bf16 %v297, %v296
      %v345 = vpack.c.bf16 %v299, %v298
      %v346 = vpack.c.bf16 %v301, %v300
      %v347 = vpack.c.bf16 %v303, %v302
      %v348 = vpack.c.bf16 %v305, %v304
      %v349 = vpack.c.bf16 %v307, %v306
      %v350 = vpack.c.bf16 %v309, %v308
      %v351 = vpack.c.bf16 %v311, %v310
      %v352 = vpack.c.bf16 %v313, %v312
      %v353 = vpack.c.bf16 %v315, %v314
      %v354 = vpack.c.bf16 %v317, %v316
      %v355 = vpack.c.bf16 %v319, %v318
      %v356 = vpack.c.bf16 %v321, %v320
      %v357 = vpack.c.bf16 %v323, %v322
      %v358 = vpack.c.bf16 %v325, %v324
      %v359 = vpack.c.bf16 %v327, %v326
      %v360 = vld [vmem:[%s2] sm:$0x1]
      %v362 = vperm.slane %v360, 0
      %364 = vmatpush.bf16.msra.mxu0 %v335
      %365 = vmatpush.bf16.msra.mxu0 %v334
      %366 = vmatpush.bf16.msra.mxu0 %v333
      %367 = vmatpush.bf16.msra.mxu0 %v332
      %368 = vmatpush.bf16.msra.mxu0 %v331
      %369 = vmatpush.bf16.msra.mxu0 %v330
      %370 = vmatpush.bf16.msra.mxu0 %v329
      %371 = vmatpush.bf16.msra.mxu0 %v328
      %372 = vmatmul.bf16.gmra.mxu0 %v260
      %v373 = vpop.f32.mrf.mxu0
      %v374 = vadd.f32 %v362, %v373
      %v375 = vpop.f32.mrf.mxu0
      %v376 = vadd.f32 %v362, %v375
      %377 = vdwg.mxu0
      %378 = vmatpush.bf16.msra.mxu0 %v343
      %379 = vmatpush.bf16.msra.mxu0 %v342
      %380 = vmatpush.bf16.msra.mxu0 %v341
      %381 = vmatpush.bf16.msra.mxu0 %v340
      %382 = vmatpush.bf16.msra.mxu0 %v339
      %383 = vmatpush.bf16.msra.mxu0 %v338
      %384 = vmatpush.bf16.msra.mxu0 %v337
      %385 = vmatpush.bf16.msra.mxu0 %v336
      %386 = vmatmul.bf16.gmra.mxu0 %v261
      %v387 = vpop.f32.mrf.mxu0
      %v388 = vadd.f32 %v374, %v387
      %v389 = vpop.f32.mrf.mxu0
      %v390 = vadd.f32 %v376, %v389
      %391 = vdwg.mxu0
      %392 = vmatpush.bf16.msra.mxu0 %v351
      %393 = vmatpush.bf16.msra.mxu0 %v350
      %394 = vmatpush.bf16.msra.mxu0 %v349
      %395 = vmatpush.bf16.msra.mxu0 %v348
      %396 = vmatpush.bf16.msra.mxu0 %v347
      %397 = vmatpush.bf16.msra.mxu0 %v346
      %398 = vmatpush.bf16.msra.mxu0 %v345
      %399 = vmatpush.bf16.msra.mxu0 %v344
      %400 = vmatmul.bf16.gmra.mxu0 %v262
      %v401 = vpop.f32.mrf.mxu0
      %v402 = vadd.f32 %v388, %v401
      %v403 = vpop.f32.mrf.mxu0
      %v404 = vadd.f32 %v390, %v403
      %405 = vdwg.mxu0
      %406 = vmatpush.bf16.msra.mxu0 %v359
      %407 = vmatpush.bf16.msra.mxu0 %v358
      %408 = vmatpush.bf16.msra.mxu0 %v357
      %409 = vmatpush.bf16.msra.mxu0 %v356
      %410 = vmatpush.bf16.msra.mxu0 %v355
      %411 = vmatpush.bf16.msra.mxu0 %v354
      %412 = vmatpush.bf16.msra.mxu0 %v353
      %413 = vmatpush.bf16.msra.mxu0 %v352
      %414 = vmatmul.bf16.gmra.mxu0 %v263
      %v415 = vpop.f32.mrf.mxu0
      %v416 = vadd.f32 %v402, %v415
      %v417 = vpop.f32.mrf.mxu0
      %v418 = vadd.f32 %v404, %v417
      %419 = vdwg.mxu0
      %v420 = vmax.f32 %v416, 0.0
      %v421 = vmax.f32 %v418, 0.0
      %422 = vst.msk [vmem:[%s170] sm:$0xff] %vm199, %v420
      %vm423 = vcmask 516096
      %424 = vst.msk [vmem:[%s170 + $0x8] sm:$0x1] %vm423, %v421
      %p425 = scmp.lt.s32.totalorder %s14, 1
      %s426 = scalar_select %p425, %s14, 1
      %s427 = smul.addr %s426, 2
      %s428 = smul.addr %s427, 8
      %s429 = scalar_lea.vmem %s3, %s428
      // Predicated region
      $region33: #{noisy_dqn_forward.7} parent=31 // pred_check
        %p430 = pneg %p100
      $region34: #{noisy_dqn_forward.7} parent=31 // pred_check_branch
        %432 = sbr.rel (%p430) target = $region36
      $region35: #{noisy_dqn_forward.7} parent=31 // pred_region
        _
      $region36: #{noisy_dqn_forward.7} parent=31 // pred_fallthru
        _
    $region32: #{noisy_dqn_forward.7} parent=5 // pred_fallthru
      _
    %p433 = scmp.le.s32.totalorder 2, %s9
    // Predicated region
    $region37: #{noisy_dqn_forward.7} parent=5 // pred_check
      %p434 = pneg %p433
    $region38: #{noisy_dqn_forward.7} parent=5 // pred_check_branch
      %436 = sbr.rel (%p434) target = $region40
    $region39: #{noisy_dqn_forward.7} parent=5 // pred_region
      %s437 = ssub.s32 %s9, 2
      // Predicated region
      $region41: #{noisy_dqn_forward.7} parent=39 // pred_check
        %p438 = pneg %p106
      $region42: #{noisy_dqn_forward.7} parent=39 // pred_check_branch
        %440 = sbr.rel (%p438) target = $region44
      $region43: #{noisy_dqn_forward.7} parent=39 // pred_region
        %p441 = scmp.lt.s32.totalorder %s15, 1
        %s442 = scalar_select %p441, %s15, 1
        %s443 = smul.addr %s442, 2
        %s444 = smul.addr %s443, 8
        %s445 = scalar_lea.vmem %s3, %s444
      $region44: #{noisy_dqn_forward.7} parent=39 // pred_fallthru
        _
    $region40: #{noisy_dqn_forward.7} parent=5 // pred_fallthru
      _
  $region6: #{noisy_dqn_forward.7} parent=0 // loop_footer
    %s13 = sadd.s32 1, %s9
  $region7: #{noisy_dqn_forward.7} parent=0 // loop_footer_branch
    %8 = sbr.rel target = $region3
  $region8: #{noisy_dqn_forward.7} parent=0 // loop_exit
    _

// kernel: noisy_dqn_forward.6
$region0: #{noisy_dqn_forward.6}
  #allocation0 [shape = 'u32[]', space=smem, size = 0x4, offset = 0x4, fixed_abs, tag = 'smem constant byte address 0x4 - core index']
  #allocation1 [shape = 'u32[72,128]{1,0:T(1,128)}', space=vmem, size = 0x9000, scoped, tag = 'internal scratch']
  %s0 = inlined_call_operand.vmem [shape: u8[2,36,9,16], index: 0, kind: input, shape index: {}]
  %s1 = inlined_call_operand.vmem [shape: f32[256,32], index: 1, kind: input, shape index: {}]
  %s2 = inlined_call_operand.vmem [shape: f32[1,32], index: 2, kind: input, shape index: {}]
  %s3 = inlined_call_operand.vmem [shape: f32[2,64,32], index: 3, kind: output, shape index: {}]
  %s4 = sld [smem:[#allocation0]]
  $region45: #{noisy_dqn_forward.6} parent=0
    _
  %s6 = ssub.s32 1, %s4
  %s7 = scalar_select 0, %s6, %s4
  loop: start=0, step=1, limit=4
  $region2: #{noisy_dqn_forward.6} parent=0 // loop_pre_header
    _
  $region3: #{noisy_dqn_forward.6} parent=0 // loop_header
    %s9 = sphi 0, %s13
    %p10 = scmp.ge.s32.totalorder %s9, 4
    %s19 = sphi 0, %s21
    %s22 = sphi 0, %s19
    %s23 = sphi 0, %s22
    %s39 = sphi 0, %s23
    %s43 = sphi 0, %s43
    %s45 = sphi 0, %s43
    %s46 = sphi 0, %s45
    %s60 = sphi 0, %s46
    %s64 = sphi 0, %s64
    %s66 = sphi 0, %s64
    %s67 = sphi 0, %s66
    %s81 = sphi 0, %s67
    %s87 = sphi 0, %s89
    %s90 = sphi 0, %s87
    %s91 = sphi 0, %s90
    %s107 = sphi 0, %s91
  $region4: #{noisy_dqn_forward.6} parent=0 // loop_header_branch
    %12 = sbr.rel (%p10) target = $region8
  $region5: #{noisy_dqn_forward.6} parent=0 // loop_body
    %s14 = ssub.s32 %s9, 1
    %s15 = ssub.s32 %s9, 2
    %s16 = sadd.s32 %s9, 1
    %s17 = ssub.s32 %s9, %s16
    %p18 = scmp.eq.s32.totalorder %s17, 0
    %s20 = sadd.s32 %s19, 1
    %s21 = scalar_select %p18, %s19, %s20
    %p24 = pneg %p18
    %p25 = scmp.eq.s32.totalorder %s9, 1
    %p26 = por %p24, %p25
    %p27 = scmp.ne.s32.totalorder %s19, %s22
    %p28 = scmp.eq.s32.totalorder %s9, 0
    %p29 = por %p27, %p28
    %p30 = scmp.ne.s32.totalorder %s19, %s22
    %p31 = scmp.eq.s32.totalorder %s14, 1
    %p32 = por %p30, %p31
    %p33 = scmp.ne.s32.totalorder %s22, %s23
    %p34 = scmp.eq.s32.totalorder %s14, 0
    %p35 = por %p33, %p34
    %p36 = scmp.ne.s32.totalorder %s22, %s23
    %p37 = scmp.eq.s32.totalorder %s15, 1
    %p38 = por %p36, %p37
    %p40 = scmp.ne.s32.totalorder %s23, %s39
    %p41 = scmp.eq.s32.totalorder %s15, 0
    %p42 = por %p40, %p41
    %s44 = sadd.s32 %s43, 1
    %p47 = scmp.eq.s32.totalorder %s9, 1
    %p48 = scmp.ne.s32.totalorder %s43, %s45
    %p49 = scmp.eq.s32.totalorder %s9, 0
    %p50 = por %p48, %p49
    %p51 = scmp.ne.s32.totalorder %s43, %s45
    %p52 = scmp.eq.s32.totalorder %s14, 1
    %p53 = por %p51, %p52
    %p54 = scmp.ne.s32.totalorder %s45, %s46
    %p55 = scmp.eq.s32.totalorder %s14, 0
    %p56 = por %p54, %p55
    %p57 = scmp.ne.s32.totalorder %s45, %s46
    %p58 = scmp.eq.s32.totalorder %s15, 1
    %p59 = por %p57, %p58
    %p61 = scmp.ne.s32.totalorder %s46, %s60
    %p62 = scmp.eq.s32.totalorder %s15, 0
    %p63 = por %p61, %p62
    %s65 = sadd.s32 %s64, 1
    %p68 = scmp.eq.s32.totalorder %s9, 1
    %p69 = scmp.ne.s32.totalorder %s64, %s66
    %p70 = scmp.eq.s32.totalorder %s9, 0
    %p71 = por %p69, %p70
    %p72 = scmp.ne.s32.totalorder %s64, %s66
    %p73 = scmp.eq.s32.totalorder %s14, 1
    %p74 = por %p72, %p73
    %p75 = scmp.ne.s32.totalorder %s66, %s67
    %p76 = scmp.eq.s32.totalorder %s14, 0
    %p77 = por %p75, %p76
    %p78 = scmp.ne.s32.totalorder %s66, %s67
    %p79 = scmp.eq.s32.totalorder %s15, 1
    %p80 = por %p78, %p79
    %p82 = scmp.ne.s32.totalorder %s67, %s81
    %p83 = scmp.eq.s32.totalorder %s15, 0
    %p84 = por %p82, %p83
    %s85 = ssub.s32 %s9, %s16
    %p86 = scmp.eq.s32.totalorder %s85, 0
    %s88 = sadd.s32 %s87, 1
    %s89 = scalar_select %p86, %s87, %s88
    %p92 = pneg %p86
    %p93 = scmp.eq.s32.totalorder %s9, 1
    %p94 = por %p92, %p93
    %p95 = scmp.ne.s32.totalorder %s87, %s90
    %p96 = scmp.eq.s32.totalorder %s9, 0
    %p97 = por %p95, %p96
    %p98 = scmp.ne.s32.totalorder %s87, %s90
    %p99 = scmp.eq.s32.totalorder %s14, 1
    %p100 = por %p98, %p99
    %p101 = scmp.ne.s32.totalorder %s90, %s91
    %p102 = scmp.eq.s32.totalorder %s14, 0
    %p103 = por %p101, %p102
    %p104 = scmp.ne.s32.totalorder %s90, %s91
    %p105 = scmp.eq.s32.totalorder %s15, 1
    %p106 = por %p104, %p105
    %p108 = scmp.ne.s32.totalorder %s91, %s107
    %p109 = scmp.eq.s32.totalorder %s15, 0
    %p110 = por %p108, %p109
    %p111 = scmp.le.s32.totalorder 1, %s9
    %p112 = scmp.lt.s32.totalorder %s9, 3
    %p113 = pnand %p111, %p112
    %p114 = pneg %p113
    // Predicated region
    $region9: #{noisy_dqn_forward.6} parent=5 // pred_check
      _
    $region10: #{noisy_dqn_forward.6} parent=5 // pred_check_branch
      %116 = sbr.rel (%p113) target = $region12
    $region11: #{noisy_dqn_forward.6} parent=5 // pred_region
      %s117 = ssub.s32 %s9, 1
      // Predicated region
      $region13: #{noisy_dqn_forward.6} parent=11 // pred_check
        %p118 = pneg %p56
      $region14: #{noisy_dqn_forward.6} parent=11 // pred_check_branch
        %120 = sbr.rel (%p118) target = $region16
      $region15: #{noisy_dqn_forward.6} parent=11 // pred_region
        _
      $region16: #{noisy_dqn_forward.6} parent=11 // pred_fallthru
        _
      // Predicated region
      $region17: #{noisy_dqn_forward.6} parent=11 // pred_check
        %p121 = pneg %p77
      $region18: #{noisy_dqn_forward.6} parent=11 // pred_check_branch
        %123 = sbr.rel (%p121) target = $region20
      $region19: #{noisy_dqn_forward.6} parent=11 // pred_region
        _
      $region20: #{noisy_dqn_forward.6} parent=11 // pred_fallthru
        _
    $region12: #{noisy_dqn_forward.6} parent=5 // pred_fallthru
      _
    %p124 = scmp.lt.s32.totalorder %s9, 2
    // Predicated region
    $region21: #{noisy_dqn_forward.6} parent=5 // pred_check
      %p125 = pneg %p124
    $region22: #{noisy_dqn_forward.6} parent=5 // pred_check_branch
      %127 = sbr.rel (%p125) target = $region24
    $region23: #{noisy_dqn_forward.6} parent=5 // pred_region
      // Predicated region
      $region25: #{noisy_dqn_forward.6} parent=23 // pred_check
        %p128 = pneg %p29
      $region26: #{noisy_dqn_forward.6} parent=23 // pred_check_branch
        %130 = sbr.rel (%p128) target = $region28
      $region27: #{noisy_dqn_forward.6} parent=23 // pred_region
        %p131 = scmp.lt.s32.totalorder %s9, 1
        %s132 = scalar_select %p131, %s9, 1
        %s133 = smul.addr %s132, 72
        %s134 = smul.addr %s133, 2
        %s135 = scalar_lea.vmem %s0, %s134
      $region28: #{noisy_dqn_forward.6} parent=23 // pred_fallthru
        _
    $region24: #{noisy_dqn_forward.6} parent=5 // pred_fallthru
      _
    %p136 = scmp.le.s32.totalorder 1, %s9
    %p137 = scmp.lt.s32.totalorder %s9, 3
    %p138 = pnand %p136, %p137
    %p139 = pneg %p138
    // Predicated region
    $region29: #{noisy_dqn_forward.6} parent=5 // pred_check
      _
    $region30: #{noisy_dqn_forward.6} parent=5 // pred_check_branch
      %141 = sbr.rel (%p138) target = $region32
    $region31: #{noisy_dqn_forward.6} parent=5 // pred_region
      %s142 = ssub.s32 %s9, 1
      %p143 = scmp.lt.s32.totalorder %s14, 1
      %s144 = scalar_select %p143, %s14, 1
      %s145 = smul.addr %s144, 72
      %s146 = smul.addr %s145, 2
      %s147 = scalar_lea.vmem %s0, %s146
      %p148 = pneg %p35
      %p149 = pneg %p32
      %p150 = pneg %p56
      %p151 = pneg %p53
      %p152 = pneg %p77
      %p153 = pneg %p74
      %p154 = pneg %p103
      %p155 = pneg %p100
      %p156 = scmp.lt.s32.totalorder %s14, 1
      %s157 = scalar_select %p156, %s14, 1
      %s158 = smul.addr %s157, 8
      %s159 = smul.addr %s158, 8
      %s160 = scalar_lea.vmem %s3, %s159
      %p161 = scmp.lt.s32.totalorder %s14, 1
      %s162 = scalar_select %p161, %s14, 1
      %s163 = smul.addr %s162, 72
      %s164 = smul.addr %s163, 2
      %s165 = scalar_lea.vmem %s0, %s164
      %p166 = scmp.lt.s32.totalorder %s14, 1
      %s167 = scalar_select %p166, %s14, 1
      %s168 = smul.addr %s167, 8
      %s169 = smul.addr %s168, 8
      %s170 = scalar_lea.vmem %s3, %s169
      %v171 = vld [vmem:[%s165] sm:$0x3]
      %v172 = vld [vmem:[%s165 + $0x2] sm:$0x1]
      %v173 = vld [vmem:[%s165 + $0x4] sm:$0x3]
      %v174 = vld [vmem:[%s165 + $0x6] sm:$0x1]
      %v175 = vld [vmem:[%s165 + $0x8] sm:$0x3]
      %v176 = vld [vmem:[%s165 + $0xa] sm:$0x1]
      %v177 = vld [vmem:[%s165 + $0xc] sm:$0x3]
      %v178 = vld [vmem:[%s165 + $0xe] sm:$0x1]
      %v179 = vld [vmem:[%s165 + $0x10] sm:$0x3]
      %v180 = vld [vmem:[%s165 + $0x12] sm:$0x1]
      %v181 = vld [vmem:[%s165 + $0x14] sm:$0x3]
      %v182 = vld [vmem:[%s165 + $0x16] sm:$0x1]
      %v183 = vld [vmem:[%s165 + $0x18] sm:$0x3]
      %v184 = vld [vmem:[%s165 + $0x1a] sm:$0x1]
      %v185 = vld [vmem:[%s165 + $0x1c] sm:$0x3]
      %v186 = vld [vmem:[%s165 + $0x1e] sm:$0x1]
      %v187 = vld [vmem:[%s165 + $0x20] sm:$0x3]
      %v188 = vld [vmem:[%s165 + $0x22] sm:$0x1]
      %v189 = vld [vmem:[%s165 + $0x24] sm:$0x3]
      %v190 = vld [vmem:[%s165 + $0x26] sm:$0x1]
      %v191 = vld [vmem:[%s165 + $0x28] sm:$0x3]
      %v192 = vld [vmem:[%s165 + $0x2a] sm:$0x1]
      %v193 = vld [vmem:[%s165 + $0x2c] sm:$0x3]
      %v194 = vld [vmem:[%s165 + $0x2e] sm:$0x1]
      %v195 = vld [vmem:[%s165 + $0x30] sm:$0x3]
      %v196 = vld [vmem:[%s165 + $0x32] sm:$0x1]
      %v197 = vld [vmem:[%s165 + $0x34] sm:$0x3]
      %v198 = vld [vmem:[%s165 + $0x36] sm:$0x1]
      %v199 = vld [vmem:[%s165 + $0x38] sm:$0x3]
      %v200 = vld [vmem:[%s165 + $0x3a] sm:$0x1]
      %v201 = vld [vmem:[%s165 + $0x3c] sm:$0x3]
      %v202 = vld [vmem:[%s165 + $0x3e] sm:$0x1]
      %v203 = vld [vmem:[%s165 + $0x40] sm:$0x3]
      %v204 = vld [vmem:[%s165 + $0x42] sm:$0x1]
      %v205 = vld [vmem:[%s165 + $0x44] sm:$0x3]
      %v206 = vld [vmem:[%s165 + $0x46] sm:$0x1]
      %v207 = vld [vmem:[%s165 + $0x48] sm:$0x3]
      %v208 = vld [vmem:[%s165 + $0x4a] sm:$0x1]
      %v209 = vld [vmem:[%s165 + $0x4c] sm:$0x3]
      %v210 = vld [vmem:[%s165 + $0x4e] sm:$0x1]
      %v211 = vld [vmem:[%s165 + $0x50] sm:$0x3]
      %v212 = vld [vmem:[%s165 + $0x52] sm:$0x1]
      %v213 = vld [vmem:[%s165 + $0x54] sm:$0x3]
      %v214 = vld [vmem:[%s165 + $0x56] sm:$0x1]
      %v215 = vld [vmem:[%s165 + $0x58] sm:$0x3]
      %v216 = vld [vmem:[%s165 + $0x5a] sm:$0x1]
      %v217 = vld [vmem:[%s165 + $0x5c] sm:$0x3]
      %v218 = vld [vmem:[%s165 + $0x5e] sm:$0x1]
      %v219 = vld [vmem:[%s165 + $0x60] sm:$0x3]
      %v220 = vld [vmem:[%s165 + $0x62] sm:$0x1]
      %v221 = vld [vmem:[%s165 + $0x64] sm:$0x3]
      %v222 = vld [vmem:[%s165 + $0x66] sm:$0x1]
      %v223 = vld [vmem:[%s165 + $0x68] sm:$0x3]
      %v224 = vld [vmem:[%s165 + $0x6a] sm:$0x1]
      %v225 = vld [vmem:[%s165 + $0x6c] sm:$0x3]
      %v226 = vld [vmem:[%s165 + $0x6e] sm:$0x1]
      %v227 = vld [vmem:[%s165 + $0x70] sm:$0x3]
      %v228 = vld [vmem:[%s165 + $0x72] sm:$0x1]
      %v229 = vld [vmem:[%s165 + $0x74] sm:$0x3]
      %v230 = vld [vmem:[%s165 + $0x76] sm:$0x1]
      %v231 = vld [vmem:[%s165 + $0x78] sm:$0x3]
      %v232 = vld [vmem:[%s165 + $0x7a] sm:$0x1]
      %v233 = vld [vmem:[%s165 + $0x7c] sm:$0x3]
      %v234 = vld [vmem:[%s165 + $0x7e] sm:$0x1]
      %v235 = vld [vmem:[%s165 + $0x80] sm:$0x3]
      %v236 = vld [vmem:[%s165 + $0x82] sm:$0x1]
      %v237 = vld [vmem:[%s165 + $0x84] sm:$0x3]
      %v238 = vld [vmem:[%s165 + $0x86] sm:$0x1]
      %v239 = vld [vmem:[%s165 + $0x88] sm:$0x3]
      %v240 = vld [vmem:[%s165 + $0x8a] sm:$0x1]
      %v241 = vld [vmem:[%s165 + $0x8c] sm:$0x3]
      %v242 = vld [vmem:[%s165 + $0x8e] sm:$0x1]
      %v243 = vunpack.c.0.s8 %v171
      %v244 = vunpack.c.0.s8 %v172
      %v245 = vunpack.c.0.s8 %v173
      %v246 = vunpack.c.0.s8 %v174
      %v247 = vunpack.c.0.s8 %v175
      %v248 = vunpack.c.0.s8 %v176
      %v249 = vunpack.c.0.s8 %v177
      %v250 = vunpack.c.0.s8 %v178
      %v251 = vunpack.c.0.s8 %v179
      %v252 = vunpack.c.0.s8 %v180
      %v253 = vunpack.c.0.s8 %v181
      %v254 = vunpack.c.0.s8 %v182
      %v255 = vunpack.c.0.s8 %v183
      %v256 = vunpack.c.0.s8 %v184
      %v257 = vunpack.c.0.s8 %v185
      %v258 = vunpack.c.0.s8 %v186
      %v259 = vunpack.c.0.s8 %v187
      %v260 = vunpack.c.0.s8 %v188
      %v261 = vunpack.c.0.s8 %v189
      %v262 = vunpack.c.0.s8 %v190
      %v263 = vunpack.c.0.s8 %v191
      %v264 = vunpack.c.0.s8 %v192
      %v265 = vunpack.c.0.s8 %v193
      %v266 = vunpack.c.0.s8 %v194
      %v267 = vunpack.c.0.s8 %v195
      %v268 = vunpack.c.0.s8 %v196
      %v269 = vunpack.c.0.s8 %v197
      %v270 = vunpack.c.0.s8 %v198
      %v271 = vunpack.c.0.s8 %v199
      %v272 = vunpack.c.0.s8 %v200
      %v273 = vunpack.c.0.s8 %v201
      %v274 = vunpack.c.0.s8 %v202
      %v275 = vunpack.c.0.s8 %v203
      %v276 = vunpack.c.0.s8 %v204
      %v277 = vunpack.c.0.s8 %v205
      %v278 = vunpack.c.0.s8 %v206
      %v279 = vunpack.c.0.s8 %v207
      %v280 = vunpack.c.0.s8 %v208
      %v281 = vunpack.c.0.s8 %v209
      %v282 = vunpack.c.0.s8 %v210
      %v283 = vunpack.c.0.s8 %v211
      %v284 = vunpack.c.0.s8 %v212
      %v285 = vunpack.c.0.s8 %v213
      %v286 = vunpack.c.0.s8 %v214
      %v287 = vunpack.c.0.s8 %v215
      %v288 = vunpack.c.0.s8 %v216
      %v289 = vunpack.c.0.s8 %v217
      %v290 = vunpack.c.0.s8 %v218
      %v291 = vunpack.c.0.s8 %v219
      %v292 = vunpack.c.0.s8 %v220
      %v293 = vunpack.c.0.s8 %v221
      %v294 = vunpack.c.0.s8 %v222
      %v295 = vunpack.c.0.s8 %v223
      %v296 = vunpack.c.0.s8 %v224
      %v297 = vunpack.c.0.s8 %v225
      %v298 = vunpack.c.0.s8 %v226
      %v299 = vunpack.c.0.s8 %v227
      %v300 = vunpack.c.0.s8 %v228
      %v301 = vunpack.c.0.s8 %v229
      %v302 = vunpack.c.0.s8 %v230
      %v303 = vunpack.c.0.s8 %v231
      %v304 = vunpack.c.0.s8 %v232
      %v305 = vunpack.c.0.s8 %v233
      %v306 = vunpack.c.0.s8 %v234
      %v307 = vunpack.c.0.s8 %v235
      %v308 = vunpack.c.0.s8 %v236
      %v309 = vunpack.c.0.s8 %v237
      %v310 = vunpack.c.0.s8 %v238
      %v311 = vunpack.c.0.s8 %v239
      %v312 = vunpack.c.0.s8 %v240
      %v313 = vunpack.c.0.s8 %v241
      %v314 = vunpack.c.0.s8 %v242
      %v315 = vand.u32 %v243, 255
      %v316 = vand.u32 %v244, 255
      %v317 = vand.u32 %v245, 255
      %v318 = vand.u32 %v246, 255
      %v319 = vand.u32 %v247, 255
      %v320 = vand.u32 %v248, 255
      %v321 = vand.u32 %v249, 255
      %v322 = vand.u32 %v250, 255
      %v323 = vand.u32 %v251, 255
      %v324 = vand.u32 %v252, 255
      %v325 = vand.u32 %v253, 255
      %v326 = vand.u32 %v254, 255
      %v327 = vand.u32 %v255, 255
      %v328 = vand.u32 %v256, 255
      %v329 = vand.u32 %v257, 255
      %v330 = vand.u32 %v258, 255
      %v331 = vand.u32 %v259, 255
      %v332 = vand.u32 %v260, 255
      %v333 = vand.u32 %v261, 255
      %v334 = vand.u32 %v262, 255
      %v335 = vand.u32 %v263, 255
      %v336 = vand.u32 %v264, 255
      %v337 = vand.u32 %v265, 255
      %v338 = vand.u32 %v266, 255
      %v339 = vand.u32 %v267, 255
      %v340 = vand.u32 %v268, 255
      %v341 = vand.u32 %v269, 255
      %v342 = vand.u32 %v270, 255
      %v343 = vand.u32 %v271, 255
      %v344 = vand.u32 %v272, 255
      %v345 = vand.u32 %v273, 255
      %v346 = vand.u32 %v274, 255
      %v347 = vand.u32 %v275, 255
      %v348 = vand.u32 %v276, 255
      %v349 = vand.u32 %v277, 255
      %v350 = vand.u32 %v278, 255
      %v351 = vand.u32 %v279, 255
      %v352 = vand.u32 %v280, 255
      %v353 = vand.u32 %v281, 255
      %v354 = vand.u32 %v282, 255
      %v355 = vand.u32 %v283, 255
      %v356 = vand.u32 %v284, 255
      %v357 = vand.u32 %v285, 255
      %v358 = vand.u32 %v286, 255
      %v359 = vand.u32 %v287, 255
      %v360 = vand.u32 %v288, 255
      %v361 = vand.u32 %v289, 255
      %v362 = vand.u32 %v290, 255
      %v363 = vand.u32 %v291, 255
      %v364 = vand.u32 %v292, 255
      %v365 = vand.u32 %v293, 255
      %v366 = vand.u32 %v294, 255
      %v367 = vand.u32 %v295, 255
      %v368 = vand.u32 %v296, 255
      %v369 = vand.u32 %v297, 255
      %v370 = vand.u32 %v298, 255
      %v371 = vand.u32 %v299, 255
      %v372 = vand.u32 %v300, 255
      %v373 = vand.u32 %v301, 255
      %v374 = vand.u32 %v302, 255
      %v375 = vand.u32 %v303, 255
      %v376 = vand.u32 %v304, 255
      %v377 = vand.u32 %v305, 255
      %v378 = vand.u32 %v306, 255
      %v379 = vand.u32 %v307, 255
      %v380 = vand.u32 %v308, 255
      %v381 = vand.u32 %v309, 255
      %v382 = vand.u32 %v310, 255
      %v383 = vand.u32 %v311, 255
      %v384 = vand.u32 %v312, 255
      %v385 = vand.u32 %v313, 255
      %v386 = vand.u32 %v314, 255
      %v387 = vcvt.s32.f32 %v315
      %v388 = vcvt.s32.f32 %v316
      %v389 = vcvt.s32.f32 %v317
      %v390 = vcvt.s32.f32 %v318
      %v391 = vcvt.s32.f32 %v319
      %v392 = vcvt.s32.f32 %v320
      %v393 = vcvt.s32.f32 %v321
      %v394 = vcvt.s32.f32 %v322
      %v395 = vcvt.s32.f32 %v323
      %v396 = vcvt.s32.f32 %v324
      %v397 = vcvt.s32.f32 %v325
      %v398 = vcvt.s32.f32 %v326
      %v399 = vcvt.s32.f32 %v327
      %v400 = vcvt.s32.f32 %v328
      %v401 = vcvt.s32.f32 %v329
      %v402 = vcvt.s32.f32 %v330
      %v403 = vcvt.s32.f32 %v331
      %v404 = vcvt.s32.f32 %v332
      %v405 = vcvt.s32.f32 %v333
      %v406 = vcvt.s32.f32 %v334
      %v407 = vcvt.s32.f32 %v335
      %v408 = vcvt.s32.f32 %v336
      %v409 = vcvt.s32.f32 %v337
      %v410 = vcvt.s32.f32 %v338
      %v411 = vcvt.s32.f32 %v339
      %v412 = vcvt.s32.f32 %v340
      %v413 = vcvt.s32.f32 %v341
      %v414 = vcvt.s32.f32 %v342
      %v415 = vcvt.s32.f32 %v343
      %v416 = vcvt.s32.f32 %v344
      %v417 = vcvt.s32.f32 %v345
      %v418 = vcvt.s32.f32 %v346
      %v419 = vcvt.s32.f32 %v347
      %v420 = vcvt.s32.f32 %v348
      %v421 = vcvt.s32.f32 %v349
      %v422 = vcvt.s32.f32 %v350
      %v423 = vcvt.s32.f32 %v351
      %v424 = vcvt.s32.f32 %v352
      %v425 = vcvt.s32.f32 %v353
      %v426 = vcvt.s32.f32 %v354
      %v427 = vcvt.s32.f32 %v355
      %v428 = vcvt.s32.f32 %v356
      %v429 = vcvt.s32.f32 %v357
      %v430 = vcvt.s32.f32 %v358
      %v431 = vcvt.s32.f32 %v359
      %v432 = vcvt.s32.f32 %v360
      %v433 = vcvt.s32.f32 %v361
      %v434 = vcvt.s32.f32 %v362
      %v435 = vcvt.s32.f32 %v363
      %v436 = vcvt.s32.f32 %v364
      %v437 = vcvt.s32.f32 %v365
      %v438 = vcvt.s32.f32 %v366
      %v439 = vcvt.s32.f32 %v367
      %v440 = vcvt.s32.f32 %v368
      %v441 = vcvt.s32.f32 %v369
      %v442 = vcvt.s32.f32 %v370
      %v443 = vcvt.s32.f32 %v371
      %v444 = vcvt.s32.f32 %v372
      %v445 = vcvt.s32.f32 %v373
      %v446 = vcvt.s32.f32 %v374
      %v447 = vcvt.s32.f32 %v375
      %v448 = vcvt.s32.f32 %v376
      %v449 = vcvt.s32.f32 %v377
      %v450 = vcvt.s32.f32 %v378
      %v451 = vcvt.s32.f32 %v379
      %v452 = vcvt.s32.f32 %v380
      %v453 = vcvt.s32.f32 %v381
      %v454 = vcvt.s32.f32 %v382
      %v455 = vcvt.s32.f32 %v383
      %v456 = vcvt.s32.f32 %v384
      %v457 = vcvt.s32.f32 %v385
      %v458 = vcvt.s32.f32 %v386
      %v459 = vmul.f32 %v387, 0.00390625
      %v460 = vmul.f32 %v388, 0.00390625
      %v461 = vmul.f32 %v389, 0.00390625
      %v462 = vmul.f32 %v390, 0.00390625
      %v463 = vmul.f32 %v391, 0.00390625
      %v464 = vmul.f32 %v392, 0.00390625
      %v465 = vmul.f32 %v393, 0.00390625
      %v466 = vmul.f32 %v394, 0.00390625
      %v467 = vmul.f32 %v395, 0.00390625
      %v468 = vmul.f32 %v396, 0.00390625
      %v469 = vmul.f32 %v397, 0.00390625
      %v470 = vmul.f32 %v398, 0.00390625
      %v471 = vmul.f32 %v399, 0.00390625
      %v472 = vmul.f32 %v400, 0.00390625
      %v473 = vmul.f32 %v401, 0.00390625
      %v474 = vmul.f32 %v402, 0.00390625
      %v475 = vmul.f32 %v403, 0.00390625
      %v476 = vmul.f32 %v404, 0.00390625
      %v477 = vmul.f32 %v405, 0.00390625
      %v478 = vmul.f32 %v406, 0.00390625
      %v479 = vmul.f32 %v407, 0.00390625
      %v480 = vmul.f32 %v408, 0.00390625
      %v481 = vmul.f32 %v409, 0.00390625
      %v482 = vmul.f32 %v410, 0.00390625
      %v483 = vmul.f32 %v411, 0.00390625
      %v484 = vmul.f32 %v412, 0.00390625
      %v485 = vmul.f32 %v413, 0.00390625
      %v486 = vmul.f32 %v414, 0.00390625
      %v487 = vmul.f32 %v415, 0.00390625
      %v488 = vmul.f32 %v416, 0.00390625
      %v489 = vmul.f32 %v417, 0.00390625
      %v490 = vmul.f32 %v418, 0.00390625
      %v491 = vmul.f32 %v419, 0.00390625
      %v492 = vmul.f32 %v420, 0.00390625
      %v493 = vmul.f32 %v421, 0.00390625
      %v494 = vmul.f32 %v422, 0.00390625
      %v495 = vmul.f32 %v423, 0.00390625
      %v496 = vmul.f32 %v424, 0.00390625
      %v497 = vmul.f32 %v425, 0.00390625
      %v498 = vmul.f32 %v426, 0.00390625
      %v499 = vmul.f32 %v427, 0.00390625
      %v500 = vmul.f32 %v428, 0.00390625
      %v501 = vmul.f32 %v429, 0.00390625
      %v502 = vmul.f32 %v430, 0.00390625
      %v503 = vmul.f32 %v431, 0.00390625
      %v504 = vmul.f32 %v432, 0.00390625
      %v505 = vmul.f32 %v433, 0.00390625
      %v506 = vmul.f32 %v434, 0.00390625
      %v507 = vmul.f32 %v435, 0.00390625
      %v508 = vmul.f32 %v436, 0.00390625
      %v509 = vmul.f32 %v437, 0.00390625
      %v510 = vmul.f32 %v438, 0.00390625
      %v511 = vmul.f32 %v439, 0.00390625
      %v512 = vmul.f32 %v440, 0.00390625
      %v513 = vmul.f32 %v441, 0.00390625
      %v514 = vmul.f32 %v442, 0.00390625
      %v515 = vmul.f32 %v443, 0.00390625
      %v516 = vmul.f32 %v444, 0.00390625
      %v517 = vmul.f32 %v445, 0.00390625
      %v518 = vmul.f32 %v446, 0.00390625
      %v519 = vmul.f32 %v447, 0.00390625
      %v520 = vmul.f32 %v448, 0.00390625
      %v521 = vmul.f32 %v449, 0.00390625
      %v522 = vmul.f32 %v450, 0.00390625
      %v523 = vmul.f32 %v451, 0.00390625
      %v524 = vmul.f32 %v452, 0.00390625
      %v525 = vmul.f32 %v453, 0.00390625
      %v526 = vmul.f32 %v454, 0.00390625
      %v527 = vmul.f32 %v455, 0.00390625
      %v528 = vmul.f32 %v456, 0.00390625
      %v529 = vmul.f32 %v457, 0.00390625
      %v530 = vmul.f32 %v458, 0.00390625
      %vm533 = vcmask 1046528
      %v534 = vrot.slane %v459, 1
      %v535 = vrot.slane %v460, 1
      %v536 = vsel %vm533, %v534, %v535
      %537 = vrot.lane.b32.xlu0 %v536, 16
      %v538 = vpop.permute.xlu0 %537
      %541 = vrot.lane.b32.xlu0 %v461, 32
      %v542 = vpop.permute.xlu0 %541
      %v545 = vrot.slane %v461, 1
      %v546 = vrot.slane %v462, 1
      %v547 = vsel %vm533, %v545, %v546
      %548 = vrot.lane.b32.xlu0 %v547, 48
      %v549 = vpop.permute.xlu0 %548
      %552 = vrot.lane.b32.xlu0 %v463, 64
      %v553 = vpop.permute.xlu0 %552
      %v556 = vrot.slane %v463, 1
      %v557 = vrot.slane %v464, 1
      %v558 = vsel %vm533, %v556, %v557
      %559 = vrot.lane.b32.xlu0 %v558, 80
      %v560 = vpop.permute.xlu0 %559
      %563 = vrot.lane.b32.xlu0 %v465, 96
      %v564 = vpop.permute.xlu0 %563
      %v567 = vrot.slane %v465, 1
      %v568 = vrot.slane %v466, 1
      %v569 = vsel %vm533, %v567, %v568
      %570 = vrot.lane.b32.xlu0 %v569, 112
      %v571 = vpop.permute.xlu0 %570
      %v575 = vrot.slane %v467, 1
      %v576 = vrot.slane %v468, 1
      %v577 = vsel %vm533, %v575, %v576
      %578 = vrot.lane.b32.xlu0 %v577, 16
      %v579 = vpop.permute.xlu0 %578
      %582 = vrot.lane.b32.xlu0 %v469, 32
      %v583 = vpop.permute.xlu0 %582
      %v586 = vrot.slane %v469, 1
      %v587 = vrot.slane %v470, 1
      %v588 = vsel %vm533, %v586, %v587
      %589 = vrot.lane.b32.xlu0 %v588, 48
      %v590 = vpop.permute.xlu0 %589
      %593 = vrot.lane.b32.xlu0 %v471, 64
      %v594 = vpop.permute.xlu0 %593
      %v597 = vrot.slane %v471, 1
      %v598 = vrot.slane %v472, 1
      %v599 = vsel %vm533, %v597, %v598
      %600 = vrot.lane.b32.xlu0 %v599, 80
      %v601 = vpop.permute.xlu0 %600
      %604 = vrot.lane.b32.xlu0 %v473, 96
      %v605 = vpop.permute.xlu0 %604
      %v608 = vrot.slane %v473, 1
      %v609 = vrot.slane %v474, 1
      %v610 = vsel %vm533, %v608, %v609
      %611 = vrot.lane.b32.xlu0 %v610, 112
      %v612 = vpop.permute.xlu0 %611
      %vm614 = vcmask 130048
      %v615 = vsel %vm614, %v459, %v538
      %vm616 = vcmask 261120
      %v617 = vsel %vm616, %v615, %v542
      %vm618 = vcmask 392192
      %v619 = vsel %vm618, %v617, %v549
      %vm620 = vcmask 523264
      %v621 = vsel %vm620, %v619, %v553
      %vm622 = vcmask 654336
      %v623 = vsel %vm622, %v621, %v560
      %vm624 = vcmask 785408
      %v625 = vsel %vm624, %v623, %v564
      %vm626 = vcmask 916480
      %v627 = vsel %vm626, %v625, %v571
      %v628 = vsel %vm614, %v467, %v579
      %v629 = vsel %vm616, %v628, %v583
      %v630 = vsel %vm618, %v629, %v590
      %v631 = vsel %vm620, %v630, %v594
      %v632 = vsel %vm622, %v631, %v601
      %v633 = vsel %vm624, %v632, %v605
      %v634 = vsel %vm626, %v633, %v612
      %v637 = vrot.slane %v475, 1
      %v638 = vrot.slane %v476, 1
      %v639 = vsel %vm533, %v637, %v638
      %640 = vrot.lane.b32.xlu0 %v639, 16
      %v641 = vpop.permute.xlu0 %640
      %644 = vrot.lane.b32.xlu0 %v477, 32
      %v645 = vpop.permute.xlu0 %644
      %v648 = vrot.slane %v477, 1
      %v649 = vrot.slane %v478, 1
      %v650 = vsel %vm533, %v648, %v649
      %651 = vrot.lane.b32.xlu0 %v650, 48
      %v652 = vpop.permute.xlu0 %651
      %655 = vrot.lane.b32.xlu0 %v479, 64
      %v656 = vpop.permute.xlu0 %655
      %v659 = vrot.slane %v479, 1
      %v660 = vrot.slane %v480, 1
      %v661 = vsel %vm533, %v659, %v660
      %662 = vrot.lane.b32.xlu0 %v661, 80
      %v663 = vpop.permute.xlu0 %662
      %666 = vrot.lane.b32.xlu0 %v481, 96
      %v667 = vpop.permute.xlu0 %666
      %v670 = vrot.slane %v481, 1
      %v671 = vrot.slane %v482, 1
      %v672 = vsel %vm533, %v670, %v671
      %673 = vrot.lane.b32.xlu0 %v672, 112
      %v674 = vpop.permute.xlu0 %673
      %v676 = vsel %vm614, %v475, %v641
      %v677 = vsel %vm616, %v676, %v645
      %v678 = vsel %vm618, %v677, %v652
      %v679 = vsel %vm620, %v678, %v656
      %v680 = vsel %vm622, %v679, %v663
      %v681 = vsel %vm624, %v680, %v667
      %v682 = vsel %vm626, %v681, %v674
      %v685 = vrot.slane %v483, 1
      %v686 = vrot.slane %v484, 1
      %v687 = vsel %vm533, %v685, %v686
      %688 = vrot.lane.b32.xlu0 %v687, 16
      %v689 = vpop.permute.xlu0 %688
      %692 = vrot.lane.b32.xlu0 %v485, 32
      %v693 = vpop.permute.xlu0 %692
      %v696 = vrot.slane %v485, 1
      %v697 = vrot.slane %v486, 1
      %v698 = vsel %vm533, %v696, %v697
      %699 = vrot.lane.b32.xlu0 %v698, 48
      %v700 = vpop.permute.xlu0 %699
      %703 = vrot.lane.b32.xlu0 %v487, 64
      %v704 = vpop.permute.xlu0 %703
      %v707 = vrot.slane %v487, 1
      %v708 = vrot.slane %v488, 1
      %v709 = vsel %vm533, %v707, %v708
      %710 = vrot.lane.b32.xlu0 %v709, 80
      %v711 = vpop.permute.xlu0 %710
      %714 = vrot.lane.b32.xlu0 %v489, 96
      %v715 = vpop.permute.xlu0 %714
      %v718 = vrot.slane %v489, 1
      %v719 = vrot.slane %v490, 1
      %v720 = vsel %vm533, %v718, %v719
      %721 = vrot.lane.b32.xlu0 %v720, 112
      %v722 = vpop.permute.xlu0 %721
      %v724 = vsel %vm614, %v483, %v689
      %v725 = vsel %vm616, %v724, %v693
      %v726 = vsel %vm618, %v725, %v700
      %v727 = vsel %vm620, %v726, %v704
      %v728 = vsel %vm622, %v727, %v711
      %v729 = vsel %vm624, %v728, %v715
      %v730 = vsel %vm626, %v729, %v722
      %v733 = vrot.slane %v491, 1
      %v734 = vrot.slane %v492, 1
      %v735 = vsel %vm533, %v733, %v734
      %736 = vrot.lane.b32.xlu0 %v735, 16
      %v737 = vpop.permute.xlu0 %736
      %740 = vrot.lane.b32.xlu0 %v493, 32
      %v741 = vpop.permute.xlu0 %740
      %v744 = vrot.slane %v493, 1
      %v745 = vrot.slane %v494, 1
      %v746 = vsel %vm533, %v744, %v745
      %747 = vrot.lane.b32.xlu0 %v746, 48
      %v748 = vpop.permute.xlu0 %747
      %751 = vrot.lane.b32.xlu0 %v495, 64
      %v752 = vpop.permute.xlu0 %751
      %v755 = vrot.slane %v495, 1
      %v756 = vrot.slane %v496, 1
      %v757 = vsel %vm533, %v755, %v756
      %758 = vrot.lane.b32.xlu0 %v757, 80
      %v759 = vpop.permute.xlu0 %758
      %762 = vrot.lane.b32.xlu0 %v497, 96
      %v763 = vpop.permute.xlu0 %762
      %v766 = vrot.slane %v497, 1
      %v767 = vrot.slane %v498, 1
      %v768 = vsel %vm533, %v766, %v767
      %769 = vrot.lane.b32.xlu0 %v768, 112
      %v770 = vpop.permute.xlu0 %769
      %v772 = vsel %vm614, %v491, %v737
      %v773 = vsel %vm616, %v772, %v741
      %v774 = vsel %vm618, %v773, %v748
      %v775 = vsel %vm620, %v774, %v752
      %v776 = vsel %vm622, %v775, %v759
      %v777 = vsel %vm624, %v776, %v763
      %v778 = vsel %vm626, %v777, %v770
      %v781 = vrot.slane %v499, 1
      %v782 = vrot.slane %v500, 1
      %v783 = vsel %vm533, %v781, %v782
      %784 = vrot.lane.b32.xlu0 %v783, 16
      %v785 = vpop.permute.xlu0 %784
      %788 = vrot.lane.b32.xlu0 %v501, 32
      %v789 = vpop.permute.xlu0 %788
      %v792 = vrot.slane %v501, 1
      %v793 = vrot.slane %v502, 1
      %v794 = vsel %vm533, %v792, %v793
      %795 = vrot.lane.b32.xlu0 %v794, 48
      %v796 = vpop.permute.xlu0 %795
      %799 = vrot.lane.b32.xlu0 %v503, 64
      %v800 = vpop.permute.xlu0 %799
      %v803 = vrot.slane %v503, 1
      %v804 = vrot.slane %v504, 1
      %v805 = vsel %vm533, %v803, %v804
      %806 = vrot.lane.b32.xlu0 %v805, 80
      %v807 = vpop.permute.xlu0 %806
      %810 = vrot.lane.b32.xlu0 %v505, 96
      %v811 = vpop.permute.xlu0 %810
      %v814 = vrot.slane %v505, 1
      %v815 = vrot.slane %v506, 1
      %v816 = vsel %vm533, %v814, %v815
      %817 = vrot.lane.b32.xlu0 %v816, 112
      %v818 = vpop.permute.xlu0 %817
      %v820 = vsel %vm614, %v499, %v785
      %v821 = vsel %vm616, %v820, %v789
      %v822 = vsel %vm618, %v821, %v796
      %v823 = vsel %vm620, %v822, %v800
      %v824 = vsel %vm622, %v823, %v807
      %v825 = vsel %vm624, %v824, %v811
      %v826 = vsel %vm626, %v825, %v818
      %v829 = vrot.slane %v507, 1
      %v830 = vrot.slane %v508, 1
      %v831 = vsel %vm533, %v829, %v830
      %832 = vrot.lane.b32.xlu0 %v831, 16
      %v833 = vpop.permute.xlu0 %832
      %836 = vrot.lane.b32.xlu0 %v509, 32
      %v837 = vpop.permute.xlu0 %836
      %v840 = vrot.slane %v509, 1
      %v841 = vrot.slane %v510, 1
      %v842 = vsel %vm533, %v840, %v841
      %843 = vrot.lane.b32.xlu0 %v842, 48
      %v844 = vpop.permute.xlu0 %843
      %847 = vrot.lane.b32.xlu0 %v511, 64
      %v848 = vpop.permute.xlu0 %847
      %v851 = vrot.slane %v511, 1
      %v852 = vrot.slane %v512, 1
      %v853 = vsel %vm533, %v851, %v852
      %854 = vrot.lane.b32.xlu0 %v853, 80
      %v855 = vpop.permute.xlu0 %854
      %858 = vrot.lane.b32.xlu0 %v513, 96
      %v859 = vpop.permute.xlu0 %858
      %v862 = vrot.slane %v513, 1
      %v863 = vrot.slane %v514, 1
      %v864 = vsel %vm533, %v862, %v863
      %865 = vrot.lane.b32.xlu0 %v864, 112
      %v866 = vpop.permute.xlu0 %865
      %v868 = vsel %vm614, %v507, %v833
      %v869 = vsel %vm616, %v868, %v837
      %v870 = vsel %vm618, %v869, %v844
      %v871 = vsel %vm620, %v870, %v848
      %v872 = vsel %vm622, %v871, %v855
      %v873 = vsel %vm624, %v872, %v859
      %v874 = vsel %vm626, %v873, %v866
      %v877 = vrot.slane %v515, 1
      %v878 = vrot.slane %v516, 1
      %v879 = vsel %vm533, %v877, %v878
      %880 = vrot.lane.b32.xlu0 %v879, 16
      %v881 = vpop.permute.xlu0 %880
      %884 = vrot.lane.b32.xlu0 %v517, 32
      %v885 = vpop.permute.xlu0 %884
      %v888 = vrot.slane %v517, 1
      %v889 = vrot.slane %v518, 1
      %v890 = vsel %vm533, %v888, %v889
      %891 = vrot.lane.b32.xlu0 %v890, 48
      %v892 = vpop.permute.xlu0 %891
      %895 = vrot.lane.b32.xlu0 %v519, 64
      %v896 = vpop.permute.xlu0 %895
      %v899 = vrot.slane %v519, 1
      %v900 = vrot.slane %v520, 1
      %v901 = vsel %vm533, %v899, %v900
      %902 = vrot.lane.b32.xlu0 %v901, 80
      %v903 = vpop.permute.xlu0 %902
      %906 = vrot.lane.b32.xlu0 %v521, 96
      %v907 = vpop.permute.xlu0 %906
      %v910 = vrot.slane %v521, 1
      %v911 = vrot.slane %v522, 1
      %v912 = vsel %vm533, %v910, %v911
      %913 = vrot.lane.b32.xlu0 %v912, 112
      %v914 = vpop.permute.xlu0 %913
      %v916 = vsel %vm614, %v515, %v881
      %v917 = vsel %vm616, %v916, %v885
      %v918 = vsel %vm618, %v917, %v892
      %v919 = vsel %vm620, %v918, %v896
      %v920 = vsel %vm622, %v919, %v903
      %v921 = vsel %vm624, %v920, %v907
      %v922 = vsel %vm626, %v921, %v914
      %v925 = vrot.slane %v523, 1
      %v926 = vrot.slane %v524, 1
      %v927 = vsel %vm533, %v925, %v926
      %928 = vrot.lane.b32.xlu0 %v927, 16
      %v929 = vpop.permute.xlu0 %928
      %932 = vrot.lane.b32.xlu0 %v525, 32
      %v933 = vpop.permute.xlu0 %932
      %v936 = vrot.slane %v525, 1
      %v937 = vrot.slane %v526, 1
      %v938 = vsel %vm533, %v936, %v937
      %939 = vrot.lane.b32.xlu0 %v938, 48
      %v940 = vpop.permute.xlu0 %939
      %943 = vrot.lane.b32.xlu0 %v527, 64
      %v944 = vpop.permute.xlu0 %943
      %v947 = vrot.slane %v527, 1
      %v948 = vrot.slane %v528, 1
      %v949 = vsel %vm533, %v947, %v948
      %950 = vrot.lane.b32.xlu0 %v949, 80
      %v951 = vpop.permute.xlu0 %950
      %954 = vrot.lane.b32.xlu0 %v529, 96
      %v955 = vpop.permute.xlu0 %954
      %v958 = vrot.slane %v529, 1
      %v959 = vrot.slane %v530, 1
      %v960 = vsel %vm533, %v958, %v959
      %961 = vrot.lane.b32.xlu0 %v960, 112
      %v962 = vpop.permute.xlu0 %961
      %v964 = vsel %vm614, %v523, %v929
      %v965 = vsel %vm616, %v964, %v933
      %v966 = vsel %vm618, %v965, %v940
      %v967 = vsel %vm620, %v966, %v944
      %v968 = vsel %vm622, %v967, %v951
      %v969 = vsel %vm624, %v968, %v955
      %v970 = vsel %vm626, %v969, %v962
      %v971 = vpack.c.bf16 %v634, %v627
      %v972 = vpack.c.bf16 %v682, %v634
      %v973 = vpack.c.bf16 %v730, %v682
      %v974 = vpack.c.bf16 %v778, %v730
      %v975 = vpack.c.bf16 %v826, %v778
      %v976 = vpack.c.bf16 %v874, %v826
      %v977 = vpack.c.bf16 %v922, %v874
      %v978 = vpack.c.bf16 %v970, %v922
      %v979 = vld [vmem:[%s1] sm:$0xff]
      %v980 = vld [vmem:[%s1 + $0x8] sm:$0xff]
      %v981 = vld [vmem:[%s1 + $0x10] sm:$0xff]
      %v982 = vld [vmem:[%s1 + $0x18] sm:$0xff]
      %v983 = vld [vmem:[%s1 + $0x20] sm:$0xff]
      %v984 = vld [vmem:[%s1 + $0x28] sm:$0xff]
      %v985 = vld [vmem:[%s1 + $0x30] sm:$0xff]
      %v986 = vld [vmem:[%s1 + $0x38] sm:$0xff]
      %v987 = vld [vmem:[%s1 + $0x40] sm:$0xff]
      %v988 = vld [vmem:[%s1 + $0x48] sm:$0xff]
      %v989 = vld [vmem:[%s1 + $0x50] sm:$0xff]
      %v990 = vld [vmem:[%s1 + $0x58] sm:$0xff]
      %v991 = vld [vmem:[%s1 + $0x60] sm:$0xff]
      %v992 = vld [vmem:[%s1 + $0x68] sm:$0xff]
      %v993 = vld [vmem:[%s1 + $0x70] sm:$0xff]
      %v994 = vld [vmem:[%s1 + $0x78] sm:$0xff]
      %v995 = vld [vmem:[%s1 + $0x80] sm:$0xff]
      %v996 = vld [vmem:[%s1 + $0x88] sm:$0xff]
      %v997 = vld [vmem:[%s1 + $0x90] sm:$0xff]
      %v998 = vld [vmem:[%s1 + $0x98] sm:$0xff]
      %v999 = vld [vmem:[%s1 + $0xa0] sm:$0xff]
      %v1000 = vld [vmem:[%s1 + $0xa8] sm:$0xff]
      %v1001 = vld [vmem:[%s1 + $0xb0] sm:$0xff]
      %v1002 = vld [vmem:[%s1 + $0xb8] sm:$0xff]
      %v1003 = vld [vmem:[%s1 + $0xc0] sm:$0xff]
      %v1004 = vld [vmem:[%s1 + $0xc8] sm:$0xff]
      %v1005 = vld [vmem:[%s1 + $0xd0] sm:$0xff]
      %v1006 = vld [vmem:[%s1 + $0xd8] sm:$0xff]
      %v1007 = vld [vmem:[%s1 + $0xe0] sm:$0xff]
      %v1008 = vld [vmem:[%s1 + $0xe8] sm:$0xff]
      %v1009 = vld [vmem:[%s1 + $0xf0] sm:$0xff]
      %v1010 = vld [vmem:[%s1 + $0xf8] sm:$0xff]
      %v1011 = vpack.c.bf16 %v980, %v979
      %v1012 = vpack.c.bf16 %v982, %v981
      %v1013 = vpack.c.bf16 %v984, %v983
      %v1014 = vpack.c.bf16 %v986, %v985
      %v1015 = vpack.c.bf16 %v988, %v987
      %v1016 = vpack.c.bf16 %v990, %v989
      %v1017 = vpack.c.bf16 %v992, %v991
      %v1018 = vpack.c.bf16 %v994, %v993
      %v1019 = vpack.c.bf16 %v996, %v995
      %v1020 = vpack.c.bf16 %v998, %v997
      %v1021 = vpack.c.bf16 %v1000, %v999
      %v1022 = vpack.c.bf16 %v1002, %v1001
      %v1023 = vpack.c.bf16 %v1004, %v1003
      %v1024 = vpack.c.bf16 %v1006, %v1005
      %v1025 = vpack.c.bf16 %v1008, %v1007
      %v1026 = vpack.c.bf16 %v1010, %v1009
      %v1027 = vld [vmem:[%s2] sm:$0x1]
      %v1029 = vperm.slane %v1027, 0
      %1031 = vmatpush.bf16.msra.mxu0 %v1018
      %1032 = vmatpush.bf16.msra.mxu0 %v1017
      %1033 = vmatpush.bf16.msra.mxu0 %v1016
      %1034 = vmatpush.bf16.msra.mxu0 %v1015
      %1035 = vmatpush.bf16.msra.mxu0 %v1014
      %1036 = vmatpush.bf16.msra.mxu0 %v1013
      %1037 = vmatpush.bf16.msra.mxu0 %v1012
      %1038 = vmatpush.bf16.msra.mxu0 %v1011
      %1039 = vmatmul.bf16.gmra.mxu0 %v971
      %v1040 = vpop.f32.mrf.mxu0
      %v1041 = vadd.f32 %v1029, %v1040
      %v1042 = vpop.f32.mrf.mxu0
      %v1043 = vadd.f32 %v1029, %v1042
      %1044 = vmatmul.bf16.gmra.mxu0 %v973
      %v1045 = vpop.f32.mrf.mxu0
      %v1046 = vadd.f32 %v1029, %v1045
      %v1047 = vpop.f32.mrf.mxu0
      %v1048 = vadd.f32 %v1029, %v1047
      %1049 = vmatmul.bf16.gmra.mxu0 %v975
      %v1050 = vpop.f32.mrf.mxu0
      %v1051 = vadd.f32 %v1029, %v1050
      %v1052 = vpop.f32.mrf.mxu0
      %v1053 = vadd.f32 %v1029, %v1052
      %1054 = vmatmul.bf16.gmra.mxu0 %v977
      %v1055 = vpop.f32.mrf.mxu0
      %v1056 = vadd.f32 %v1029, %v1055
      %v1057 = vpop.f32.mrf.mxu0
      %v1058 = vadd.f32 %v1029, %v1057
      %1059 = vdwg.mxu0
      %1060 = vmatpush.bf16.msra.mxu0 %v1026
      %1061 = vmatpush.bf16.msra.mxu0 %v1025
      %1062 = vmatpush.bf16.msra.mxu0 %v1024
      %1063 = vmatpush.bf16.msra.mxu0 %v1023
      %1064 = vmatpush.bf16.msra.mxu0 %v1022
      %1065 = vmatpush.bf16.msra.mxu0 %v1021
      %1066 = vmatpush.bf16.msra.mxu0 %v1020
      %1067 = vmatpush.bf16.msra.mxu0 %v1019
      %1068 = vmatmul.bf16.gmra.mxu0 %v972
      %v1069 = vpop.f32.mrf.mxu0
      %v1070 = vadd.f32 %v1041, %v1069
      %v1071 = vpop.f32.mrf.mxu0
      %v1072 = vadd.f32 %v1043, %v1071
      %1073 = vmatmul.bf16.gmra.mxu0 %v974
      %v1074 = vpop.f32.mrf.mxu0
      %v1075 = vadd.f32 %v1046, %v1074
      %v1076 = vpop.f32.mrf.mxu0
      %v1077 = vadd.f32 %v1048, %v1076
      %1078 = vmatmul.bf16.gmra.mxu0 %v976
      %v1079 = vpop.f32.mrf.mxu0
      %v1080 = vadd.f32 %v1051, %v1079
      %v1081 = vpop.f32.mrf.mxu0
      %v1082 = vadd.f32 %v1053, %v1081
      %1083 = vmatmul.bf16.gmra.mxu0 %v978
      %v1084 = vpop.f32.mrf.mxu0
      %v1085 = vadd.f32 %v1056, %v1084
      %v1086 = vpop.f32.mrf.mxu0
      %v1087 = vadd.f32 %v1058, %v1086
      %1088 = vdwg.mxu0
      %v1089 = vmax.f32 %v1070, 0.0
      %v1090 = vmax.f32 %v1072, 0.0
      %v1091 = vmax.f32 %v1075, 0.0
      %v1092 = vmax.f32 %v1077, 0.0
      %v1093 = vmax.f32 %v1080, 0.0
      %v1094 = vmax.f32 %v1082, 0.0
      %v1095 = vmax.f32 %v1085, 0.0
      %v1096 = vmax.f32 %v1087, 0.0
      %1097 = vst.msk [vmem:[%s170] sm:$0xff] %vm616, %v1089
      %1098 = vst.msk [vmem:[%s170 + $0x8] sm:$0xff] %vm616, %v1090
      %1099 = vst.msk [vmem:[%s170 + $0x10] sm:$0xff] %vm616, %v1091
      %1100 = vst.msk [vmem:[%s170 + $0x18] sm:$0xff] %vm616, %v1092
      %1101 = vst.msk [vmem:[%s170 + $0x20] sm:$0xff] %vm616, %v1093
      %1102 = vst.msk [vmem:[%s170 + $0x28] sm:$0xff] %vm616, %v1094
      %1103 = vst.msk [vmem:[%s170 + $0x30] sm:$0xff] %vm616, %v1095
      %1104 = vst.msk [vmem:[%s170 + $0x38] sm:$0xff] %vm616, %v1096
      %p1105 = scmp.lt.s32.totalorder %s14, 1
      %s1106 = scalar_select %p1105, %s14, 1
      %s1107 = smul.addr %s1106, 8
      %s1108 = smul.addr %s1107, 8
      %s1109 = scalar_lea.vmem %s3, %s1108
      // Predicated region
      $region33: #{noisy_dqn_forward.6} parent=31 // pred_check
        %p1110 = pneg %p100
      $region34: #{noisy_dqn_forward.6} parent=31 // pred_check_branch
        %1112 = sbr.rel (%p1110) target = $region36
      $region35: #{noisy_dqn_forward.6} parent=31 // pred_region
        _
      $region36: #{noisy_dqn_forward.6} parent=31 // pred_fallthru
        _
    $region32: #{noisy_dqn_forward.6} parent=5 // pred_fallthru
      _
    %p1113 = scmp.le.s32.totalorder 2, %s9
    // Predicated region
    $region37: #{noisy_dqn_forward.6} parent=5 // pred_check
      %p1114 = pneg %p1113
    $region38: #{noisy_dqn_forward.6} parent=5 // pred_check_branch
      %1116 = sbr.rel (%p1114) target = $region40
    $region39: #{noisy_dqn_forward.6} parent=5 // pred_region
      %s1117 = ssub.s32 %s9, 2
      // Predicated region
      $region41: #{noisy_dqn_forward.6} parent=39 // pred_check
        %p1118 = pneg %p106
      $region42: #{noisy_dqn_forward.6} parent=39 // pred_check_branch
        %1120 = sbr.rel (%p1118) target = $region44
      $region43: #{noisy_dqn_forward.6} parent=39 // pred_region
        %p1121 = scmp.lt.s32.totalorder %s15, 1
        %s1122 = scalar_select %p1121, %s15, 1
        %s1123 = smul.addr %s1122, 8
        %s1124 = smul.addr %s1123, 8
        %s1125 = scalar_lea.vmem %s3, %s1124
      $region44: #{noisy_dqn_forward.6} parent=39 // pred_fallthru
        _
    $region40: #{noisy_dqn_forward.6} parent=5 // pred_fallthru
      _
  $region6: #{noisy_dqn_forward.6} parent=0 // loop_footer
    %s13 = sadd.s32 1, %s9
  $region7: #{noisy_dqn_forward.6} parent=0 // loop_footer_branch
    %8 = sbr.rel target = $region3
  $region8: #{noisy_dqn_forward.6} parent=0 // loop_exit
    _

// kernel: noisy_dqn_forward.8
$region0: #{noisy_dqn_forward.8}
  #allocation0 [shape = 'u32[]', space=smem, size = 0x4, offset = 0x4, fixed_abs, tag = 'smem constant byte address 0x4 - core index']
  #allocation1 [shape = 'u32[72,128]{1,0:T(1,128)}', space=vmem, size = 0x9000, scoped, tag = 'internal scratch']
  %s0 = inlined_call_operand.vmem [shape: f32[2,3,3,64], index: 0, kind: input, shape index: {}]
  %s1 = inlined_call_operand.vmem [shape: f32[576,64], index: 1, kind: input, shape index: {}]
  %s2 = inlined_call_operand.vmem [shape: f32[1,64], index: 2, kind: input, shape index: {}]
  %s3 = inlined_call_operand.vmem [shape: f32[2,1,64], index: 3, kind: output, shape index: {}]
  %s4 = sld [smem:[#allocation0]]
  $region45: #{noisy_dqn_forward.8} parent=0
    _
  %s6 = ssub.s32 1, %s4
  %s7 = scalar_select 0, %s6, %s4
  loop: start=0, step=1, limit=4
  $region2: #{noisy_dqn_forward.8} parent=0 // loop_pre_header
    _
  $region3: #{noisy_dqn_forward.8} parent=0 // loop_header
    %s9 = sphi 0, %s13
    %p10 = scmp.ge.s32.totalorder %s9, 4
    %s19 = sphi 0, %s21
    %s22 = sphi 0, %s19
    %s23 = sphi 0, %s22
    %s39 = sphi 0, %s23
    %s43 = sphi 0, %s43
    %s45 = sphi 0, %s43
    %s46 = sphi 0, %s45
    %s60 = sphi 0, %s46
    %s64 = sphi 0, %s64
    %s66 = sphi 0, %s64
    %s67 = sphi 0, %s66
    %s81 = sphi 0, %s67
    %s87 = sphi 0, %s89
    %s90 = sphi 0, %s87
    %s91 = sphi 0, %s90
    %s107 = sphi 0, %s91
  $region4: #{noisy_dqn_forward.8} parent=0 // loop_header_branch
    %12 = sbr.rel (%p10) target = $region8
  $region5: #{noisy_dqn_forward.8} parent=0 // loop_body
    %s14 = ssub.s32 %s9, 1
    %s15 = ssub.s32 %s9, 2
    %s16 = sadd.s32 %s9, 1
    %s17 = ssub.s32 %s9, %s16
    %p18 = scmp.eq.s32.totalorder %s17, 0
    %s20 = sadd.s32 %s19, 1
    %s21 = scalar_select %p18, %s19, %s20
    %p24 = pneg %p18
    %p25 = scmp.eq.s32.totalorder %s9, 1
    %p26 = por %p24, %p25
    %p27 = scmp.ne.s32.totalorder %s19, %s22
    %p28 = scmp.eq.s32.totalorder %s9, 0
    %p29 = por %p27, %p28
    %p30 = scmp.ne.s32.totalorder %s19, %s22
    %p31 = scmp.eq.s32.totalorder %s14, 1
    %p32 = por %p30, %p31
    %p33 = scmp.ne.s32.totalorder %s22, %s23
    %p34 = scmp.eq.s32.totalorder %s14, 0
    %p35 = por %p33, %p34
    %p36 = scmp.ne.s32.totalorder %s22, %s23
    %p37 = scmp.eq.s32.totalorder %s15, 1
    %p38 = por %p36, %p37
    %p40 = scmp.ne.s32.totalorder %s23, %s39
    %p41 = scmp.eq.s32.totalorder %s15, 0
    %p42 = por %p40, %p41
    %s44 = sadd.s32 %s43, 1
    %p47 = scmp.eq.s32.totalorder %s9, 1
    %p48 = scmp.ne.s32.totalorder %s43, %s45
    %p49 = scmp.eq.s32.totalorder %s9, 0
    %p50 = por %p48, %p49
    %p51 = scmp.ne.s32.totalorder %s43, %s45
    %p52 = scmp.eq.s32.totalorder %s14, 1
    %p53 = por %p51, %p52
    %p54 = scmp.ne.s32.totalorder %s45, %s46
    %p55 = scmp.eq.s32.totalorder %s14, 0
    %p56 = por %p54, %p55
    %p57 = scmp.ne.s32.totalorder %s45, %s46
    %p58 = scmp.eq.s32.totalorder %s15, 1
    %p59 = por %p57, %p58
    %p61 = scmp.ne.s32.totalorder %s46, %s60
    %p62 = scmp.eq.s32.totalorder %s15, 0
    %p63 = por %p61, %p62
    %s65 = sadd.s32 %s64, 1
    %p68 = scmp.eq.s32.totalorder %s9, 1
    %p69 = scmp.ne.s32.totalorder %s64, %s66
    %p70 = scmp.eq.s32.totalorder %s9, 0
    %p71 = por %p69, %p70
    %p72 = scmp.ne.s32.totalorder %s64, %s66
    %p73 = scmp.eq.s32.totalorder %s14, 1
    %p74 = por %p72, %p73
    %p75 = scmp.ne.s32.totalorder %s66, %s67
    %p76 = scmp.eq.s32.totalorder %s14, 0
    %p77 = por %p75, %p76
    %p78 = scmp.ne.s32.totalorder %s66, %s67
    %p79 = scmp.eq.s32.totalorder %s15, 1
    %p80 = por %p78, %p79
    %p82 = scmp.ne.s32.totalorder %s67, %s81
    %p83 = scmp.eq.s32.totalorder %s15, 0
    %p84 = por %p82, %p83
    %s85 = ssub.s32 %s9, %s16
    %p86 = scmp.eq.s32.totalorder %s85, 0
    %s88 = sadd.s32 %s87, 1
    %s89 = scalar_select %p86, %s87, %s88
    %p92 = pneg %p86
    %p93 = scmp.eq.s32.totalorder %s9, 1
    %p94 = por %p92, %p93
    %p95 = scmp.ne.s32.totalorder %s87, %s90
    %p96 = scmp.eq.s32.totalorder %s9, 0
    %p97 = por %p95, %p96
    %p98 = scmp.ne.s32.totalorder %s87, %s90
    %p99 = scmp.eq.s32.totalorder %s14, 1
    %p100 = por %p98, %p99
    %p101 = scmp.ne.s32.totalorder %s90, %s91
    %p102 = scmp.eq.s32.totalorder %s14, 0
    %p103 = por %p101, %p102
    %p104 = scmp.ne.s32.totalorder %s90, %s91
    %p105 = scmp.eq.s32.totalorder %s15, 1
    %p106 = por %p104, %p105
    %p108 = scmp.ne.s32.totalorder %s91, %s107
    %p109 = scmp.eq.s32.totalorder %s15, 0
    %p110 = por %p108, %p109
    %p111 = scmp.le.s32.totalorder 1, %s9
    %p112 = scmp.lt.s32.totalorder %s9, 3
    %p113 = pnand %p111, %p112
    %p114 = pneg %p113
    // Predicated region
    $region9: #{noisy_dqn_forward.8} parent=5 // pred_check
      _
    $region10: #{noisy_dqn_forward.8} parent=5 // pred_check_branch
      %116 = sbr.rel (%p113) target = $region12
    $region11: #{noisy_dqn_forward.8} parent=5 // pred_region
      %s117 = ssub.s32 %s9, 1
      // Predicated region
      $region13: #{noisy_dqn_forward.8} parent=11 // pred_check
        %p118 = pneg %p56
      $region14: #{noisy_dqn_forward.8} parent=11 // pred_check_branch
        %120 = sbr.rel (%p118) target = $region16
      $region15: #{noisy_dqn_forward.8} parent=11 // pred_region
        _
      $region16: #{noisy_dqn_forward.8} parent=11 // pred_fallthru
        _
      // Predicated region
      $region17: #{noisy_dqn_forward.8} parent=11 // pred_check
        %p121 = pneg %p77
      $region18: #{noisy_dqn_forward.8} parent=11 // pred_check_branch
        %123 = sbr.rel (%p121) target = $region20
      $region19: #{noisy_dqn_forward.8} parent=11 // pred_region
        _
      $region20: #{noisy_dqn_forward.8} parent=11 // pred_fallthru
        _
    $region12: #{noisy_dqn_forward.8} parent=5 // pred_fallthru
      _
    %p124 = scmp.lt.s32.totalorder %s9, 2
    // Predicated region
    $region21: #{noisy_dqn_forward.8} parent=5 // pred_check
      %p125 = pneg %p124
    $region22: #{noisy_dqn_forward.8} parent=5 // pred_check_branch
      %127 = sbr.rel (%p125) target = $region24
    $region23: #{noisy_dqn_forward.8} parent=5 // pred_region
      // Predicated region
      $region25: #{noisy_dqn_forward.8} parent=23 // pred_check
        %p128 = pneg %p29
      $region26: #{noisy_dqn_forward.8} parent=23 // pred_check_branch
        %130 = sbr.rel (%p128) target = $region28
      $region27: #{noisy_dqn_forward.8} parent=23 // pred_region
        %p131 = scmp.lt.s32.totalorder %s9, 1
        %s132 = scalar_select %p131, %s9, 1
        %s133 = smul.addr %s132, 3
        %s134 = smul.addr %s133, 4
        %s135 = scalar_lea.vmem %s0, %s134
      $region28: #{noisy_dqn_forward.8} parent=23 // pred_fallthru
        _
    $region24: #{noisy_dqn_forward.8} parent=5 // pred_fallthru
      _
    %p136 = scmp.le.s32.totalorder 1, %s9
    %p137 = scmp.lt.s32.totalorder %s9, 3
    %p138 = pnand %p136, %p137
    %p139 = pneg %p138
    // Predicated region
    $region29: #{noisy_dqn_forward.8} parent=5 // pred_check
      _
    $region30: #{noisy_dqn_forward.8} parent=5 // pred_check_branch
      %141 = sbr.rel (%p138) target = $region32
    $region31: #{noisy_dqn_forward.8} parent=5 // pred_region
      %s142 = ssub.s32 %s9, 1
      %p143 = scmp.lt.s32.totalorder %s14, 1
      %s144 = scalar_select %p143, %s14, 1
      %s145 = smul.addr %s144, 3
      %s146 = smul.addr %s145, 4
      %s147 = scalar_lea.vmem %s0, %s146
      %p148 = pneg %p35
      %p149 = pneg %p32
      %p150 = pneg %p56
      %p151 = pneg %p53
      %p152 = pneg %p77
      %p153 = pneg %p74
      %p154 = pneg %p103
      %p155 = pneg %p100
      %p156 = scmp.lt.s32.totalorder %s14, 1
      %s157 = scalar_select %p156, %s14, 1
      %s158 = scalar_lea.vmem %s3, %s157
      %p159 = scmp.lt.s32.totalorder %s14, 1
      %s160 = scalar_select %p159, %s14, 1
      %s161 = smul.addr %s160, 3
      %s162 = smul.addr %s161, 4
      %s163 = scalar_lea.vmem %s0, %s162
      %p164 = scmp.lt.s32.totalorder %s14, 1
      %s165 = scalar_select %p164, %s14, 1
      %s166 = scalar_lea.vmem %s3, %s165
      %v168 = vld [vmem:[%s163] sm:$0x7]
      %v169 = vld [vmem:[%s163 + $0x4] sm:$0x7]
      %v170 = vld [vmem:[%s163 + $0x8] sm:$0x7]
      %v172 = vrot.slane %v168, 1
      %173 = vrot.lane.b32.xlu0 %v172, 64
      %v174 = vpop.permute.xlu0 %173
      %v176 = vrot.slane %v168, 2
      %179 = vrot.lane.b32.xlu0 %v169, 64
      %v180 = vpop.permute.xlu0 %179
      %v182 = vrot.slane %v169, 1
      %v184 = vrot.slane %v169, 2
      %185 = vrot.lane.b32.xlu0 %v184, 64
      %v186 = vpop.permute.xlu0 %185
      %v189 = vrot.slane %v170, 1
      %190 = vrot.lane.b32.xlu0 %v189, 64
      %v191 = vpop.permute.xlu0 %190
      %v193 = vrot.slane %v170, 2
      %vm195 = vcmask 523264
      %v196 = vsel %vm195, %v168, %v174
      %v197 = vsel %vm195, %v176, %v180
      %v198 = vsel %vm195, %v182, %v186
      %v199 = vsel %vm195, %v170, %v191
      %v200 = vpack.c.bf16 %v196, %v196
      %v201 = vpack.c.bf16 %v197, %v197
      %v202 = vpack.c.bf16 %v198, %v198
      %v203 = vpack.c.bf16 %v199, %v199
      %v204 = vpack.c.bf16 %v193, %v193
      %v205 = vld [vmem:[%s1] sm:$0xff]
      %v206 = vld [vmem:[%s1 + $0x8] sm:$0xff]
      %v207 = vld [vmem:[%s1 + $0x10] sm:$0xff]
      %v208 = vld [vmem:[%s1 + $0x18] sm:$0xff]
      %v209 = vld [vmem:[%s1 + $0x20] sm:$0xff]
      %v210 = vld [vmem:[%s1 + $0x28] sm:$0xff]
      %v211 = vld [vmem:[%s1 + $0x30] sm:$0xff]
      %v212 = vld [vmem:[%s1 + $0x38] sm:$0xff]
      %v213 = vld [vmem:[%s1 + $0x40] sm:$0xff]
      %v214 = vld [vmem:[%s1 + $0x48] sm:$0xff]
      %v215 = vld [vmem:[%s1 + $0x50] sm:$0xff]
      %v216 = vld [vmem:[%s1 + $0x58] sm:$0xff]
      %v217 = vld [vmem:[%s1 + $0x60] sm:$0xff]
      %v218 = vld [vmem:[%s1 + $0x68] sm:$0xff]
      %v219 = vld [vmem:[%s1 + $0x70] sm:$0xff]
      %v220 = vld [vmem:[%s1 + $0x78] sm:$0xff]
      %v221 = vld [vmem:[%s1 + $0x80] sm:$0xff]
      %v222 = vld [vmem:[%s1 + $0x88] sm:$0xff]
      %v223 = vld [vmem:[%s1 + $0x90] sm:$0xff]
      %v224 = vld [vmem:[%s1 + $0x98] sm:$0xff]
      %v225 = vld [vmem:[%s1 + $0xa0] sm:$0xff]
      %v226 = vld [vmem:[%s1 + $0xa8] sm:$0xff]
      %v227 = vld [vmem:[%s1 + $0xb0] sm:$0xff]
      %v228 = vld [vmem:[%s1 + $0xb8] sm:$0xff]
      %v229 = vld [vmem:[%s1 + $0xc0] sm:$0xff]
      %v230 = vld [vmem:[%s1 + $0xc8] sm:$0xff]
      %v231 = vld [vmem:[%s1 + $0xd0] sm:$0xff]
      %v232 = vld [vmem:[%s1 + $0xd8] sm:$0xff]
      %v233 = vld [vmem:[%s1 + $0xe0] sm:$0xff]
      %v234 = vld [vmem:[%s1 + $0xe8] sm:$0xff]
      %v235 = vld [vmem:[%s1 + $0xf0] sm:$0xff]
      %v236 = vld [vmem:[%s1 + $0xf8] sm:$0xff]
      %v237 = vld [vmem:[%s1 + $0x100] sm:$0xff]
      %v238 = vld [vmem:[%s1 + $0x108] sm:$0xff]
      %v239 = vld [vmem:[%s1 + $0x110] sm:$0xff]
      %v240 = vld [vmem:[%s1 + $0x118] sm:$0xff]
      %v241 = vld [vmem:[%s1 + $0x120] sm:$0xff]
      %v242 = vld [vmem:[%s1 + $0x128] sm:$0xff]
      %v243 = vld [vmem:[%s1 + $0x130] sm:$0xff]
      %v244 = vld [vmem:[%s1 + $0x138] sm:$0xff]
      %v245 = vld [vmem:[%s1 + $0x140] sm:$0xff]
      %v246 = vld [vmem:[%s1 + $0x148] sm:$0xff]
      %v247 = vld [vmem:[%s1 + $0x150] sm:$0xff]
      %v248 = vld [vmem:[%s1 + $0x158] sm:$0xff]
      %v249 = vld [vmem:[%s1 + $0x160] sm:$0xff]
      %v250 = vld [vmem:[%s1 + $0x168] sm:$0xff]
      %v251 = vld [vmem:[%s1 + $0x170] sm:$0xff]
      %v252 = vld [vmem:[%s1 + $0x178] sm:$0xff]
      %v253 = vld [vmem:[%s1 + $0x180] sm:$0xff]
      %v254 = vld [vmem:[%s1 + $0x188] sm:$0xff]
      %v255 = vld [vmem:[%s1 + $0x190] sm:$0xff]
      %v256 = vld [vmem:[%s1 + $0x198] sm:$0xff]
      %v257 = vld [vmem:[%s1 + $0x1a0] sm:$0xff]
      %v258 = vld [vmem:[%s1 + $0x1a8] sm:$0xff]
      %v259 = vld [vmem:[%s1 + $0x1b0] sm:$0xff]
      %v260 = vld [vmem:[%s1 + $0x1b8] sm:$0xff]
      %v261 = vld [vmem:[%s1 + $0x1c0] sm:$0xff]
      %v262 = vld [vmem:[%s1 + $0x1c8] sm:$0xff]
      %v263 = vld [vmem:[%s1 + $0x1d0] sm:$0xff]
      %v264 = vld [vmem:[%s1 + $0x1d8] sm:$0xff]
      %v265 = vld [vmem:[%s1 + $0x1e0] sm:$0xff]
      %v266 = vld [vmem:[%s1 + $0x1e8] sm:$0xff]
      %v267 = vld [vmem:[%s1 + $0x1f0] sm:$0xff]
      %v268 = vld [vmem:[%s1 + $0x1f8] sm:$0xff]
      %v269 = vld [vmem:[%s1 + $0x200] sm:$0xff]
      %v270 = vld [vmem:[%s1 + $0x208] sm:$0xff]
      %v271 = vld [vmem:[%s1 + $0x210] sm:$0xff]
      %v272 = vld [vmem:[%s1 + $0x218] sm:$0xff]
      %v273 = vld [vmem:[%s1 + $0x220] sm:$0xff]
      %v274 = vld [vmem:[%s1 + $0x228] sm:$0xff]
      %v275 = vld [vmem:[%s1 + $0x230] sm:$0xff]
      %v276 = vld [vmem:[%s1 + $0x238] sm:$0xff]
      %v277 = vpack.c.bf16 %v206, %v205
      %v278 = vpack.c.bf16 %v208, %v207
      %v279 = vpack.c.bf16 %v210, %v209
      %v280 = vpack.c.bf16 %v212, %v211
      %v281 = vpack.c.bf16 %v214, %v213
      %v282 = vpack.c.bf16 %v216, %v215
      %v283 = vpack.c.bf16 %v218, %v217
      %v284 = vpack.c.bf16 %v220, %v219
      %v285 = vpack.c.bf16 %v222, %v221
      %v286 = vpack.c.bf16 %v224, %v223
      %v287 = vpack.c.bf16 %v226, %v225
      %v288 = vpack.c.bf16 %v228, %v227
      %v289 = vpack.c.bf16 %v230, %v229
      %v290 = vpack.c.bf16 %v232, %v231
      %v291 = vpack.c.bf16 %v234, %v233
      %v292 = vpack.c.bf16 %v236, %v235
      %v293 = vpack.c.bf16 %v238, %v237
      %v294 = vpack.c.bf16 %v240, %v239
      %v295 = vpack.c.bf16 %v242, %v241
      %v296 = vpack.c.bf16 %v244, %v243
      %v297 = vpack.c.bf16 %v246, %v245
      %v298 = vpack.c.bf16 %v248, %v247
      %v299 = vpack.c.bf16 %v250, %v249
      %v300 = vpack.c.bf16 %v252, %v251
      %v301 = vpack.c.bf16 %v254, %v253
      %v302 = vpack.c.bf16 %v256, %v255
      %v303 = vpack.c.bf16 %v258, %v257
      %v304 = vpack.c.bf16 %v260, %v259
      %v305 = vpack.c.bf16 %v262, %v261
      %v306 = vpack.c.bf16 %v264, %v263
      %v307 = vpack.c.bf16 %v266, %v265
      %v308 = vpack.c.bf16 %v268, %v267
      %v309 = vpack.c.bf16 %v270, %v269
      %v310 = vpack.c.bf16 %v272, %v271
      %v311 = vpack.c.bf16 %v274, %v273
      %v312 = vpack.c.bf16 %v276, %v275
      %v313 = vld [vmem:[%s2] sm:$0x1]
      %v315 = vsel %vm195, %v204, 0
      %317 = vmatpush.bf16.msra.mxu0 %v284
      %318 = vmatpush.bf16.msra.mxu0 %v283
      %319 = vmatpush.bf16.msra.mxu0 %v282
      %320 = vmatpush.bf16.msra.mxu0 %v281
      %321 = vmatpush.bf16.msra.mxu0 %v280
      %322 = vmatpush.bf16.msra.mxu0 %v279
      %323 = vmatpush.bf16.msra.mxu0 %v278
      %324 = vmatpush.bf16.msra.mxu0 %v277
      %325 = vmatmul.bf16.gmra.mxu0 %v200
      %v326 = vpop.f32.mrf.mxu0
      %v327 = vadd.f32 %v313, %v326
      %v328 = vpop.f32.mrf.mxu0
      %329 = vdwg.mxu0
      %330 = vmatpush.bf16.msra.mxu0 %v292
      %331 = vmatpush.bf16.msra.mxu0 %v291
      %332 = vmatpush.bf16.msra.mxu0 %v290
      %333 = vmatpush.bf16.msra.mxu0 %v289
      %334 = vmatpush.bf16.msra.mxu0 %v288
      %335 = vmatpush.bf16.msra.mxu0 %v287
      %336 = vmatpush.bf16.msra.mxu0 %v286
      %337 = vmatpush.bf16.msra.mxu0 %v285
      %338 = vmatmul.bf16.gmra.mxu0 %v201
      %v339 = vpop.f32.mrf.mxu0
      %v340 = vadd.f32 %v327, %v339
      %v341 = vpop.f32.mrf.mxu0
      %342 = vdwg.mxu0
      %343 = vmatpush.bf16.msra.mxu0 %v300
      %344 = vmatpush.bf16.msra.mxu0 %v299
      %345 = vmatpush.bf16.msra.mxu0 %v298
      %346 = vmatpush.bf16.msra.mxu0 %v297
      %347 = vmatpush.bf16.msra.mxu0 %v296
      %348 = vmatpush.bf16.msra.mxu0 %v295
      %349 = vmatpush.bf16.msra.mxu0 %v294
      %350 = vmatpush.bf16.msra.mxu0 %v293
      %351 = vmatmul.bf16.gmra.mxu0 %v202
      %v352 = vpop.f32.mrf.mxu0
      %v353 = vadd.f32 %v340, %v352
      %v354 = vpop.f32.mrf.mxu0
      %355 = vdwg.mxu0
      %356 = vmatpush.bf16.msra.mxu0 %v308
      %357 = vmatpush.bf16.msra.mxu0 %v307
      %358 = vmatpush.bf16.msra.mxu0 %v306
      %359 = vmatpush.bf16.msra.mxu0 %v305
      %360 = vmatpush.bf16.msra.mxu0 %v304
      %361 = vmatpush.bf16.msra.mxu0 %v303
      %362 = vmatpush.bf16.msra.mxu0 %v302
      %363 = vmatpush.bf16.msra.mxu0 %v301
      %364 = vmatmul.bf16.gmra.mxu0 %v203
      %v365 = vpop.f32.mrf.mxu0
      %v366 = vadd.f32 %v353, %v365
      %v367 = vpop.f32.mrf.mxu0
      %368 = vdwg.mxu0
      %369 = vmatpush.bf16.msra.mxu0 0
      %370 = vmatpush.bf16.msra.mxu0 0
      %371 = vmatpush.bf16.msra.mxu0 0
      %372 = vmatpush.bf16.msra.mxu0 0
      %373 = vmatpush.bf16.msra.mxu0 %v312
      %374 = vmatpush.bf16.msra.mxu0 %v311
      %375 = vmatpush.bf16.msra.mxu0 %v310
      %376 = vmatpush.bf16.msra.mxu0 %v309
      %377 = vmatmul.bf16.gmra.mxu0 %v315
      %v378 = vpop.f32.mrf.mxu0
      %v379 = vadd.f32 %v366, %v378
      %v380 = vpop.f32.mrf.mxu0
      %381 = vdwg.mxu0
      %v382 = vmax.f32 %v379, 0.0
      %vm383 = vcmask 516096
      %384 = vst.msk [vmem:[%s166] sm:$0x1] %vm383, %v382
      %p385 = scmp.lt.s32.totalorder %s14, 1
      %s386 = scalar_select %p385, %s14, 1
      %s387 = scalar_lea.vmem %s3, %s386
      // Predicated region
      $region33: #{noisy_dqn_forward.8} parent=31 // pred_check
        %p388 = pneg %p100
      $region34: #{noisy_dqn_forward.8} parent=31 // pred_check_branch
        %390 = sbr.rel (%p388) target = $region36
      $region35: #{noisy_dqn_forward.8} parent=31 // pred_region
        _
      $region36: #{noisy_dqn_forward.8} parent=31 // pred_fallthru
        _
    $region32: #{noisy_dqn_forward.8} parent=5 // pred_fallthru
      _
    %p391 = scmp.le.s32.totalorder 2, %s9
    // Predicated region
    $region37: #{noisy_dqn_forward.8} parent=5 // pred_check
      %p392 = pneg %p391
    $region38: #{noisy_dqn_forward.8} parent=5 // pred_check_branch
      %394 = sbr.rel (%p392) target = $region40
    $region39: #{noisy_dqn_forward.8} parent=5 // pred_region
      %s395 = ssub.s32 %s9, 2
      // Predicated region
      $region41: #{noisy_dqn_forward.8} parent=39 // pred_check
        %p396 = pneg %p106
      $region42: #{noisy_dqn_forward.8} parent=39 // pred_check_branch
        %398 = sbr.rel (%p396) target = $region44
      $region43: #{noisy_dqn_forward.8} parent=39 // pred_region
        %p399 = scmp.lt.s32.totalorder %s15, 1
        %s400 = scalar_select %p399, %s15, 1
        %s401 = scalar_lea.vmem %s3, %s400
      $region44: #{noisy_dqn_forward.8} parent=39 // pred_fallthru
        _
    $region40: #{noisy_dqn_forward.8} parent=5 // pred_fallthru
      _
  $region6: #{noisy_dqn_forward.8} parent=0 // loop_footer
    %s13 = sadd.s32 1, %s9
  $region7: #{noisy_dqn_forward.8} parent=0 // loop_footer_branch
    %8 = sbr.rel target = $region3
  $region8: #{noisy_dqn_forward.8} parent=0 // loop_exit
    _

// kernel: noisy_dqn_forward.9
$region0: #{noisy_dqn_forward.9}
  #allocation0 [shape = 'u32[]', space=smem, size = 0x4, offset = 0x4, fixed_abs, tag = 'smem constant byte address 0x4 - core index']
  #allocation1 [shape = 'u32[72,128]{1,0:T(1,128)}', space=vmem, size = 0x9000, scoped, tag = 'internal scratch']
  #allocation2 [shape = 'f32[2,512]{1,0:T(2,128)}', space=vmem, size = 0x1000, scoped, tag = 'scratch operand']
  %s0 = inlined_call_operand.vmem [shape: f32[2,64], index: 0, kind: input, shape index: {}]
  %s1 = inlined_call_operand.vmem [shape: f32[512,64], index: 1, kind: input, shape index: {}]
  %s2 = inlined_call_operand.vmem [shape: f32[512,64], index: 2, kind: input, shape index: {}]
  %s3 = inlined_call_operand.vmem [shape: f32[512,64], index: 3, kind: input, shape index: {}]
  %s4 = inlined_call_operand.vmem [shape: f32[1,512], index: 4, kind: input, shape index: {}]
  %s5 = inlined_call_operand.vmem [shape: f32[128,512], index: 5, kind: input, shape index: {}]
  %s6 = inlined_call_operand.vmem [shape: f32[128,512], index: 6, kind: input, shape index: {}]
  %s7 = inlined_call_operand.vmem [shape: f32[128,512], index: 7, kind: input, shape index: {}]
  %s8 = inlined_call_operand.vmem [shape: f32[1,128], index: 8, kind: input, shape index: {}]
  %s9 = inlined_call_operand.hbm [shape: f32[2,128], index: 9, kind: output, shape index: {}]
  %s10 = sld [smem:[#allocation0]]
  $region54: #{noisy_dqn_forward.9} parent=0
    _
  %s12 = ssub.s32 1, %s10
  %s13 = scalar_select 0, %s12, %s10
  $region1: #{noisy_dqn_forward.9} parent=0
    #allocation3 [shape = 'u8[1024]{0}', space=vmem, size = 0x400, scoped, tag = 'output window, operand 0, single buffered']
    #allocation4 [shape = 's32[1]{0}', space=sflag, size = 0x4, scoped, tag = 'scoped memory for noisy_dqn_forward.9']
    %14 = vsyncpa [#allocation4], 0
    // Predicated region
    $region2: #{noisy_dqn_forward.9} parent=1 // pred_check
      _
    $region3: #{noisy_dqn_forward.9} parent=1 // pred_check_branch
      %16 = sbr.rel (0) target = $region5
    $region4: #{noisy_dqn_forward.9} parent=1 // pred_region
      _
    $region5: #{noisy_dqn_forward.9} parent=1 // pred_fallthru
      _
    // Predicated region
    $region6: #{noisy_dqn_forward.9} parent=1 // pred_check
      _
    $region7: #{noisy_dqn_forward.9} parent=1 // pred_check_branch
      %18 = sbr.rel (0) target = $region9
    $region8: #{noisy_dqn_forward.9} parent=1 // pred_region
      _
    $region9: #{noisy_dqn_forward.9} parent=1 // pred_fallthru
      _
    // Predicated region
    $region10: #{noisy_dqn_forward.9} parent=1 // pred_check
      _
    $region11: #{noisy_dqn_forward.9} parent=1 // pred_check_branch
      %20 = sbr.rel (0) target = $region13
    $region12: #{noisy_dqn_forward.9} parent=1 // pred_region
      _
    $region13: #{noisy_dqn_forward.9} parent=1 // pred_fallthru
      _
    // Predicated region
    $region14: #{noisy_dqn_forward.9} parent=1 // pred_check
      _
    $region15: #{noisy_dqn_forward.9} parent=1 // pred_check_branch
      %22 = sbr.rel (0) target = $region17
    $region16: #{noisy_dqn_forward.9} parent=1 // pred_region
      _
    $region17: #{noisy_dqn_forward.9} parent=1 // pred_fallthru
      _
    // Predicated region
    $region18: #{noisy_dqn_forward.9} parent=1 // pred_check
      _
    $region19: #{noisy_dqn_forward.9} parent=1 // pred_check_branch
      %24 = sbr.rel (0) target = $region21
    $region20: #{noisy_dqn_forward.9} parent=1 // pred_region
      _
    $region21: #{noisy_dqn_forward.9} parent=1 // pred_fallthru
      _
    // Predicated region
    $region22: #{noisy_dqn_forward.9} parent=1 // pred_check
      _
    $region23: #{noisy_dqn_forward.9} parent=1 // pred_check_branch
      %26 = sbr.rel (0) target = $region25
    $region24: #{noisy_dqn_forward.9} parent=1 // pred_region
      _
    $region25: #{noisy_dqn_forward.9} parent=1 // pred_fallthru
      _
    // Predicated region
    $region26: #{noisy_dqn_forward.9} parent=1 // pred_check
      _
    $region27: #{noisy_dqn_forward.9} parent=1 // pred_check_branch
      %28 = sbr.rel (0) target = $region29
    $region28: #{noisy_dqn_forward.9} parent=1 // pred_region
      _
    $region29: #{noisy_dqn_forward.9} parent=1 // pred_fallthru
      _
    // Predicated region
    $region30: #{noisy_dqn_forward.9} parent=1 // pred_check
      _
    $region31: #{noisy_dqn_forward.9} parent=1 // pred_check_branch
      %30 = sbr.rel (0) target = $region33
    $region32: #{noisy_dqn_forward.9} parent=1 // pred_region
      _
    $region33: #{noisy_dqn_forward.9} parent=1 // pred_fallthru
      _
    // Predicated region
    $region34: #{noisy_dqn_forward.9} parent=1 // pred_check
      _
    $region35: #{noisy_dqn_forward.9} parent=1 // pred_check_branch
      %32 = sbr.rel (0) target = $region37
    $region36: #{noisy_dqn_forward.9} parent=1 // pred_region
      _
    $region37: #{noisy_dqn_forward.9} parent=1 // pred_fallthru
      _
    %p33 = scmp.eq.s32.totalorder 0, 0
    // Predicated region
    $region38: #{noisy_dqn_forward.9} parent=1 // pred_check
      %p34 = pneg %p33
    $region39: #{noisy_dqn_forward.9} parent=1 // pred_check_branch
      %36 = sbr.rel (%p34) target = $region41
    $region40: #{noisy_dqn_forward.9} parent=1 // pred_region
      %37 = vst [vmem:[#allocation2] sm:$0xff] 0.0
    $region41: #{noisy_dqn_forward.9} parent=1 // pred_fallthru
      _
    %v38 = vld [vmem:[%s1] sm:$0xff]
    %v39 = vld [vmem:[%s1 + $0x8] sm:$0xff]
    %v40 = vld [vmem:[%s1 + $0x10] sm:$0xff]
    %v41 = vld [vmem:[%s1 + $0x18] sm:$0xff]
    %v42 = vld [vmem:[%s1 + $0x20] sm:$0xff]
    %v43 = vld [vmem:[%s1 + $0x28] sm:$0xff]
    %v44 = vld [vmem:[%s1 + $0x30] sm:$0xff]
    %v45 = vld [vmem:[%s1 + $0x38] sm:$0xff]
    %v46 = vld [vmem:[%s1 + $0x40] sm:$0xff]
    %v47 = vld [vmem:[%s1 + $0x48] sm:$0xff]
    %v48 = vld [vmem:[%s1 + $0x50] sm:$0xff]
    %v49 = vld [vmem:[%s1 + $0x58] sm:$0xff]
    %v50 = vld [vmem:[%s1 + $0x60] sm:$0xff]
    %v51 = vld [vmem:[%s1 + $0x68] sm:$0xff]
    %v52 = vld [vmem:[%s1 + $0x70] sm:$0xff]
    %v53 = vld [vmem:[%s1 + $0x78] sm:$0xff]
    %v54 = vld [vmem:[%s1 + $0x80] sm:$0xff]
    %v55 = vld [vmem:[%s1 + $0x88] sm:$0xff]
    %v56 = vld [vmem:[%s1 + $0x90] sm:$0xff]
    %v57 = vld [vmem:[%s1 + $0x98] sm:$0xff]
    %v58 = vld [vmem:[%s1 + $0xa0] sm:$0xff]
    %v59 = vld [vmem:[%s1 + $0xa8] sm:$0xff]
    %v60 = vld [vmem:[%s1 + $0xb0] sm:$0xff]
    %v61 = vld [vmem:[%s1 + $0xb8] sm:$0xff]
    %v62 = vld [vmem:[%s1 + $0xc0] sm:$0xff]
    %v63 = vld [vmem:[%s1 + $0xc8] sm:$0xff]
    %v64 = vld [vmem:[%s1 + $0xd0] sm:$0xff]
    %v65 = vld [vmem:[%s1 + $0xd8] sm:$0xff]
    %v66 = vld [vmem:[%s1 + $0xe0] sm:$0xff]
    %v67 = vld [vmem:[%s1 + $0xe8] sm:$0xff]
    %v68 = vld [vmem:[%s1 + $0xf0] sm:$0xff]
    %v69 = vld [vmem:[%s1 + $0xf8] sm:$0xff]
    %v70 = vld [vmem:[%s1 + $0x100] sm:$0xff]
    %v71 = vld [vmem:[%s1 + $0x108] sm:$0xff]
    %v72 = vld [vmem:[%s1 + $0x110] sm:$0xff]
    %v73 = vld [vmem:[%s1 + $0x118] sm:$0xff]
    %v74 = vld [vmem:[%s1 + $0x120] sm:$0xff]
    %v75 = vld [vmem:[%s1 + $0x128] sm:$0xff]
    %v76 = vld [vmem:[%s1 + $0x130] sm:$0xff]
    %v77 = vld [vmem:[%s1 + $0x138] sm:$0xff]
    %v78 = vld [vmem:[%s1 + $0x140] sm:$0xff]
    %v79 = vld [vmem:[%s1 + $0x148] sm:$0xff]
    %v80 = vld [vmem:[%s1 + $0x150] sm:$0xff]
    %v81 = vld [vmem:[%s1 + $0x158] sm:$0xff]
    %v82 = vld [vmem:[%s1 + $0x160] sm:$0xff]
    %v83 = vld [vmem:[%s1 + $0x168] sm:$0xff]
    %v84 = vld [vmem:[%s1 + $0x170] sm:$0xff]
    %v85 = vld [vmem:[%s1 + $0x178] sm:$0xff]
    %v86 = vld [vmem:[%s1 + $0x180] sm:$0xff]
    %v87 = vld [vmem:[%s1 + $0x188] sm:$0xff]
    %v88 = vld [vmem:[%s1 + $0x190] sm:$0xff]
    %v89 = vld [vmem:[%s1 + $0x198] sm:$0xff]
    %v90 = vld [vmem:[%s1 + $0x1a0] sm:$0xff]
    %v91 = vld [vmem:[%s1 + $0x1a8] sm:$0xff]
    %v92 = vld [vmem:[%s1 + $0x1b0] sm:$0xff]
    %v93 = vld [vmem:[%s1 + $0x1b8] sm:$0xff]
    %v94 = vld [vmem:[%s1 + $0x1c0] sm:$0xff]
    %v95 = vld [vmem:[%s1 + $0x1c8] sm:$0xff]
    %v96 = vld [vmem:[%s1 + $0x1d0] sm:$0xff]
    %v97 = vld [vmem:[%s1 + $0x1d8] sm:$0xff]
    %v98 = vld [vmem:[%s1 + $0x1e0] sm:$0xff]
    %v99 = vld [vmem:[%s1 + $0x1e8] sm:$0xff]
    %v100 = vld [vmem:[%s1 + $0x1f0] sm:$0xff]
    %v101 = vld [vmem:[%s1 + $0x1f8] sm:$0xff]
    %v102 = vld [vmem:[%s2] sm:$0xff]
    %v103 = vld [vmem:[%s2 + $0x8] sm:$0xff]
    %v104 = vld [vmem:[%s2 + $0x10] sm:$0xff]
    %v105 = vld [vmem:[%s2 + $0x18] sm:$0xff]
    %v106 = vld [vmem:[%s2 + $0x20] sm:$0xff]
    %v107 = vld [vmem:[%s2 + $0x28] sm:$0xff]
    %v108 = vld [vmem:[%s2 + $0x30] sm:$0xff]
    %v109 = vld [vmem:[%s2 + $0x38] sm:$0xff]
    %v110 = vld [vmem:[%s2 + $0x40] sm:$0xff]
    %v111 = vld [vmem:[%s2 + $0x48] sm:$0xff]
    %v112 = vld [vmem:[%s2 + $0x50] sm:$0xff]
    %v113 = vld [vmem:[%s2 + $0x58] sm:$0xff]
    %v114 = vld [vmem:[%s2 + $0x60] sm:$0xff]
    %v115 = vld [vmem:[%s2 + $0x68] sm:$0xff]
    %v116 = vld [vmem:[%s2 + $0x70] sm:$0xff]
    %v117 = vld [vmem:[%s2 + $0x78] sm:$0xff]
    %v118 = vld [vmem:[%s2 + $0x80] sm:$0xff]
    %v119 = vld [vmem:[%s2 + $0x88] sm:$0xff]
    %v120 = vld [vmem:[%s2 + $0x90] sm:$0xff]
    %v121 = vld [vmem:[%s2 + $0x98] sm:$0xff]
    %v122 = vld [vmem:[%s2 + $0xa0] sm:$0xff]
    %v123 = vld [vmem:[%s2 + $0xa8] sm:$0xff]
    %v124 = vld [vmem:[%s2 + $0xb0] sm:$0xff]
    %v125 = vld [vmem:[%s2 + $0xb8] sm:$0xff]
    %v126 = vld [vmem:[%s2 + $0xc0] sm:$0xff]
    %v127 = vld [vmem:[%s2 + $0xc8] sm:$0xff]
    %v128 = vld [vmem:[%s2 + $0xd0] sm:$0xff]
    %v129 = vld [vmem:[%s2 + $0xd8] sm:$0xff]
    %v130 = vld [vmem:[%s2 + $0xe0] sm:$0xff]
    %v131 = vld [vmem:[%s2 + $0xe8] sm:$0xff]
    %v132 = vld [vmem:[%s2 + $0xf0] sm:$0xff]
    %v133 = vld [vmem:[%s2 + $0xf8] sm:$0xff]
    %v134 = vld [vmem:[%s2 + $0x100] sm:$0xff]
    %v135 = vld [vmem:[%s2 + $0x108] sm:$0xff]
    %v136 = vld [vmem:[%s2 + $0x110] sm:$0xff]
    %v137 = vld [vmem:[%s2 + $0x118] sm:$0xff]
    %v138 = vld [vmem:[%s2 + $0x120] sm:$0xff]
    %v139 = vld [vmem:[%s2 + $0x128] sm:$0xff]
    %v140 = vld [vmem:[%s2 + $0x130] sm:$0xff]
    %v141 = vld [vmem:[%s2 + $0x138] sm:$0xff]
    %v142 = vld [vmem:[%s2 + $0x140] sm:$0xff]
    %v143 = vld [vmem:[%s2 + $0x148] sm:$0xff]
    %v144 = vld [vmem:[%s2 + $0x150] sm:$0xff]
    %v145 = vld [vmem:[%s2 + $0x158] sm:$0xff]
    %v146 = vld [vmem:[%s2 + $0x160] sm:$0xff]
    %v147 = vld [vmem:[%s2 + $0x168] sm:$0xff]
    %v148 = vld [vmem:[%s2 + $0x170] sm:$0xff]
    %v149 = vld [vmem:[%s2 + $0x178] sm:$0xff]
    %v150 = vld [vmem:[%s2 + $0x180] sm:$0xff]
    %v151 = vld [vmem:[%s2 + $0x188] sm:$0xff]
    %v152 = vld [vmem:[%s2 + $0x190] sm:$0xff]
    %v153 = vld [vmem:[%s2 + $0x198] sm:$0xff]
    %v154 = vld [vmem:[%s2 + $0x1a0] sm:$0xff]
    %v155 = vld [vmem:[%s2 + $0x1a8] sm:$0xff]
    %v156 = vld [vmem:[%s2 + $0x1b0] sm:$0xff]
    %v157 = vld [vmem:[%s2 + $0x1b8] sm:$0xff]
    %v158 = vld [vmem:[%s2 + $0x1c0] sm:$0xff]
    %v159 = vld [vmem:[%s2 + $0x1c8] sm:$0xff]
    %v160 = vld [vmem:[%s2 + $0x1d0] sm:$0xff]
    %v161 = vld [vmem:[%s2 + $0x1d8] sm:$0xff]
    %v162 = vld [vmem:[%s2 + $0x1e0] sm:$0xff]
    %v163 = vld [vmem:[%s2 + $0x1e8] sm:$0xff]
    %v164 = vld [vmem:[%s2 + $0x1f0] sm:$0xff]
    %v165 = vld [vmem:[%s2 + $0x1f8] sm:$0xff]
    %v166 = vld [vmem:[%s3] sm:$0xff]
    %v167 = vld [vmem:[%s3 + $0x8] sm:$0xff]
    %v168 = vld [vmem:[%s3 + $0x10] sm:$0xff]
    %v169 = vld [vmem:[%s3 + $0x18] sm:$0xff]
    %v170 = vld [vmem:[%s3 + $0x20] sm:$0xff]
    %v171 = vld [vmem:[%s3 + $0x28] sm:$0xff]
    %v172 = vld [vmem:[%s3 + $0x30] sm:$0xff]
    %v173 = vld [vmem:[%s3 + $0x38] sm:$0xff]
    %v174 = vld [vmem:[%s3 + $0x40] sm:$0xff]
    %v175 = vld [vmem:[%s3 + $0x48] sm:$0xff]
    %v176 = vld [vmem:[%s3 + $0x50] sm:$0xff]
    %v177 = vld [vmem:[%s3 + $0x58] sm:$0xff]
    %v178 = vld [vmem:[%s3 + $0x60] sm:$0xff]
    %v179 = vld [vmem:[%s3 + $0x68] sm:$0xff]
    %v180 = vld [vmem:[%s3 + $0x70] sm:$0xff]
    %v181 = vld [vmem:[%s3 + $0x78] sm:$0xff]
    %v182 = vld [vmem:[%s3 + $0x80] sm:$0xff]
    %v183 = vld [vmem:[%s3 + $0x88] sm:$0xff]
    %v184 = vld [vmem:[%s3 + $0x90] sm:$0xff]
    %v185 = vld [vmem:[%s3 + $0x98] sm:$0xff]
    %v186 = vld [vmem:[%s3 + $0xa0] sm:$0xff]
    %v187 = vld [vmem:[%s3 + $0xa8] sm:$0xff]
    %v188 = vld [vmem:[%s3 + $0xb0] sm:$0xff]
    %v189 = vld [vmem:[%s3 + $0xb8] sm:$0xff]
    %v190 = vld [vmem:[%s3 + $0xc0] sm:$0xff]
    %v191 = vld [vmem:[%s3 + $0xc8] sm:$0xff]
    %v192 = vld [vmem:[%s3 + $0xd0] sm:$0xff]
    %v193 = vld [vmem:[%s3 + $0xd8] sm:$0xff]
    %v194 = vld [vmem:[%s3 + $0xe0] sm:$0xff]
    %v195 = vld [vmem:[%s3 + $0xe8] sm:$0xff]
    %v196 = vld [vmem:[%s3 + $0xf0] sm:$0xff]
    %v197 = vld [vmem:[%s3 + $0xf8] sm:$0xff]
    %v198 = vld [vmem:[%s3 + $0x100] sm:$0xff]
    %v199 = vld [vmem:[%s3 + $0x108] sm:$0xff]
    %v200 = vld [vmem:[%s3 + $0x110] sm:$0xff]
    %v201 = vld [vmem:[%s3 + $0x118] sm:$0xff]
    %v202 = vld [vmem:[%s3 + $0x120] sm:$0xff]
    %v203 = vld [vmem:[%s3 + $0x128] sm:$0xff]
    %v204 = vld [vmem:[%s3 + $0x130] sm:$0xff]
    %v205 = vld [vmem:[%s3 + $0x138] sm:$0xff]
    %v206 = vld [vmem:[%s3 + $0x140] sm:$0xff]
    %v207 = vld [vmem:[%s3 + $0x148] sm:$0xff]
    %v208 = vld [vmem:[%s3 + $0x150] sm:$0xff]
    %v209 = vld [vmem:[%s3 + $0x158] sm:$0xff]
    %v210 = vld [vmem:[%s3 + $0x160] sm:$0xff]
    %v211 = vld [vmem:[%s3 + $0x168] sm:$0xff]
    %v212 = vld [vmem:[%s3 + $0x170] sm:$0xff]
    %v213 = vld [vmem:[%s3 + $0x178] sm:$0xff]
    %v214 = vld [vmem:[%s3 + $0x180] sm:$0xff]
    %v215 = vld [vmem:[%s3 + $0x188] sm:$0xff]
    %v216 = vld [vmem:[%s3 + $0x190] sm:$0xff]
    %v217 = vld [vmem:[%s3 + $0x198] sm:$0xff]
    %v218 = vld [vmem:[%s3 + $0x1a0] sm:$0xff]
    %v219 = vld [vmem:[%s3 + $0x1a8] sm:$0xff]
    %v220 = vld [vmem:[%s3 + $0x1b0] sm:$0xff]
    %v221 = vld [vmem:[%s3 + $0x1b8] sm:$0xff]
    %v222 = vld [vmem:[%s3 + $0x1c0] sm:$0xff]
    %v223 = vld [vmem:[%s3 + $0x1c8] sm:$0xff]
    %v224 = vld [vmem:[%s3 + $0x1d0] sm:$0xff]
    %v225 = vld [vmem:[%s3 + $0x1d8] sm:$0xff]
    %v226 = vld [vmem:[%s3 + $0x1e0] sm:$0xff]
    %v227 = vld [vmem:[%s3 + $0x1e8] sm:$0xff]
    %v228 = vld [vmem:[%s3 + $0x1f0] sm:$0xff]
    %v229 = vld [vmem:[%s3 + $0x1f8] sm:$0xff]
    %v230 = vmul.f32 %v102, %v166
    %v231 = vmul.f32 %v103, %v167
    %v232 = vmul.f32 %v104, %v168
    %v233 = vmul.f32 %v105, %v169
    %v234 = vmul.f32 %v106, %v170
    %v235 = vmul.f32 %v107, %v171
    %v236 = vmul.f32 %v108, %v172
    %v237 = vmul.f32 %v109, %v173
    %v238 = vmul.f32 %v110, %v174
    %v239 = vmul.f32 %v111, %v175
    %v240 = vmul.f32 %v112, %v176
    %v241 = vmul.f32 %v113, %v177
    %v242 = vmul.f32 %v114, %v178
    %v243 = vmul.f32 %v115, %v179
    %v244 = vmul.f32 %v116, %v180
    %v245 = vmul.f32 %v117, %v181
    %v246 = vmul.f32 %v118, %v182
    %v247 = vmul.f32 %v119, %v183
    %v248 = vmul.f32 %v120, %v184
    %v249 = vmul.f32 %v121, %v185
    %v250 = vmul.f32 %v122, %v186
    %v251 = vmul.f32 %v123, %v187
    %v252 = vmul.f32 %v124, %v188
    %v253 = vmul.f32 %v125, %v189
    %v254 = vmul.f32 %v126, %v190
    %v255 = vmul.f32 %v127, %v191
    %v256 = vmul.f32 %v128, %v192
    %v257 = vmul.f32 %v129, %v193
    %v258 = vmul.f32 %v130, %v194
    %v259 = vmul.f32 %v131, %v195
    %v260 = vmul.f32 %v132, %v196
    %v261 = vmul.f32 %v133, %v197
    %v262 = vmul.f32 %v134, %v198
    %v263 = vmul.f32 %v135, %v199
    %v264 = vmul.f32 %v136, %v200
    %v265 = vmul.f32 %v137, %v201
    %v266 = vmul.f32 %v138, %v202
    %v267 = vmul.f32 %v139, %v203
    %v268 = vmul.f32 %v140, %v204
    %v269 = vmul.f32 %v141, %v205
    %v270 = vmul.f32 %v142, %v206
    %v271 = vmul.f32 %v143, %v207
    %v272 = vmul.f32 %v144, %v208
    %v273 = vmul.f32 %v145, %v209
    %v274 = vmul.f32 %v146, %v210
    %v275 = vmul.f32 %v147, %v211
    %v276 = vmul.f32 %v148, %v212
    %v277 = vmul.f32 %v149, %v213
    %v278 = vmul.f32 %v150, %v214
    %v279 = vmul.f32 %v151, %v215
    %v280 = vmul.f32 %v152, %v216
    %v281 = vmul.f32 %v153, %v217
    %v282 = vmul.f32 %v154, %v218
    %v283 = vmul.f32 %v155, %v219
    %v284 = vmul.f32 %v156, %v220
    %v285 = vmul.f32 %v157, %v221
    %v286 = vmul.f32 %v158, %v222
    %v287 = vmul.f32 %v159, %v223
    %v288 = vmul.f32 %v160, %v224
    %v289 = vmul.f32 %v161, %v225
    %v290 = vmul.f32 %v162, %v226
    %v291 = vmul.f32 %v163, %v227
    %v292 = vmul.f32 %v164, %v228
    %v293 = vmul.f32 %v165, %v229
    %v294 = vadd.f32 %v38, %v230
    %v295 = vadd.f32 %v39, %v231
    %v296 = vadd.f32 %v40, %v232
    %v297 = vadd.f32 %v41, %v233
    %v298 = vadd.f32 %v42, %v234
    %v299 = vadd.f32 %v43, %v235
    %v300 = vadd.f32 %v44, %v236
    %v301 = vadd.f32 %v45, %v237
    %v302 = vadd.f32 %v46, %v238
    %v303 = vadd.f32 %v47, %v239
    %v304 = vadd.f32 %v48, %v240
    %v305 = vadd.f32 %v49, %v241
    %v306 = vadd.f32 %v50, %v242
    %v307 = vadd.f32 %v51, %v243
    %v308 = vadd.f32 %v52, %v244
    %v309 = vadd.f32 %v53, %v245
    %v310 = vadd.f32 %v54, %v246
    %v311 = vadd.f32 %v55, %v247
    %v312 = vadd.f32 %v56, %v248
    %v313 = vadd.f32 %v57, %v249
    %v314 = vadd.f32 %v58, %v250
    %v315 = vadd.f32 %v59, %v251
    %v316 = vadd.f32 %v60, %v252
    %v317 = vadd.f32 %v61, %v253
    %v318 = vadd.f32 %v62, %v254
    %v319 = vadd.f32 %v63, %v255
    %v320 = vadd.f32 %v64, %v256
    %v321 = vadd.f32 %v65, %v257
    %v322 = vadd.f32 %v66, %v258
    %v323 = vadd.f32 %v67, %v259
    %v324 = vadd.f32 %v68, %v260
    %v325 = vadd.f32 %v69, %v261
    %v326 = vadd.f32 %v70, %v262
    %v327 = vadd.f32 %v71, %v263
    %v328 = vadd.f32 %v72, %v264
    %v329 = vadd.f32 %v73, %v265
    %v330 = vadd.f32 %v74, %v266
    %v331 = vadd.f32 %v75, %v267
    %v332 = vadd.f32 %v76, %v268
    %v333 = vadd.f32 %v77, %v269
    %v334 = vadd.f32 %v78, %v270
    %v335 = vadd.f32 %v79, %v271
    %v336 = vadd.f32 %v80, %v272
    %v337 = vadd.f32 %v81, %v273
    %v338 = vadd.f32 %v82, %v274
    %v339 = vadd.f32 %v83, %v275
    %v340 = vadd.f32 %v84, %v276
    %v341 = vadd.f32 %v85, %v277
    %v342 = vadd.f32 %v86, %v278
    %v343 = vadd.f32 %v87, %v279
    %v344 = vadd.f32 %v88, %v280
    %v345 = vadd.f32 %v89, %v281
    %v346 = vadd.f32 %v90, %v282
    %v347 = vadd.f32 %v91, %v283
    %v348 = vadd.f32 %v92, %v284
    %v349 = vadd.f32 %v93, %v285
    %v350 = vadd.f32 %v94, %v286
    %v351 = vadd.f32 %v95, %v287
    %v352 = vadd.f32 %v96, %v288
    %v353 = vadd.f32 %v97, %v289
    %v354 = vadd.f32 %v98, %v290
    %v355 = vadd.f32 %v99, %v291
    %v356 = vadd.f32 %v100, %v292
    %v357 = vadd.f32 %v101, %v293
    %v358 = vld [vmem:[#allocation2] sm:$0xff]
    %v359 = vld [vmem:[%s0] sm:$0x3]
    %v360 = vpack.c.bf16 %v359, %v359
    %v361 = vpack.c.bf16 %v295, %v294
    %v362 = vpack.c.bf16 %v297, %v296
    %v363 = vpack.c.bf16 %v299, %v298
    %v364 = vpack.c.bf16 %v301, %v300
    %v365 = vpack.c.bf16 %v303, %v302
    %v366 = vpack.c.bf16 %v305, %v304
    %v367 = vpack.c.bf16 %v307, %v306
    %v368 = vpack.c.bf16 %v309, %v308
    %v369 = vpack.c.bf16 %v311, %v310
    %v370 = vpack.c.bf16 %v313, %v312
    %v371 = vpack.c.bf16 %v315, %v314
    %v372 = vpack.c.bf16 %v317, %v316
    %v373 = vpack.c.bf16 %v319, %v318
    %v374 = vpack.c.bf16 %v321, %v320
    %v375 = vpack.c.bf16 %v323, %v322
    %v376 = vpack.c.bf16 %v325, %v324
    %v377 = vpack.c.bf16 %v327, %v326
    %v378 = vpack.c.bf16 %v329, %v328
    %v379 = vpack.c.bf16 %v331, %v330
    %v380 = vpack.c.bf16 %v333, %v332
    %v381 = vpack.c.bf16 %v335, %v334
    %v382 = vpack.c.bf16 %v337, %v336
    %v383 = vpack.c.bf16 %v339, %v338
    %v384 = vpack.c.bf16 %v341, %v340
    %v385 = vpack.c.bf16 %v343, %v342
    %v386 = vpack.c.bf16 %v345, %v344
    %v387 = vpack.c.bf16 %v347, %v346
    %v388 = vpack.c.bf16 %v349, %v348
    %v389 = vpack.c.bf16 %v351, %v350
    %v390 = vpack.c.bf16 %v353, %v352
    %v391 = vpack.c.bf16 %v355, %v354
    %v392 = vpack.c.bf16 %v357, %v356
    %vm393 = vcmask 523264
    %v395 = vsel %vm393, %v360, 0
    %v398 = vsel %vm393, %v361, 0
    %v401 = vsel %vm393, %v362, 0
    %v404 = vsel %vm393, %v363, 0
    %v407 = vsel %vm393, %v364, 0
    %v410 = vsel %vm393, %v365, 0
    %v413 = vsel %vm393, %v366, 0
    %v416 = vsel %vm393, %v367, 0
    %v419 = vsel %vm393, %v368, 0
    %v422 = vsel %vm393, %v369, 0
    %v425 = vsel %vm393, %v370, 0
    %v428 = vsel %vm393, %v371, 0
    %v431 = vsel %vm393, %v372, 0
    %v434 = vsel %vm393, %v373, 0
    %v437 = vsel %vm393, %v374, 0
    %v440 = vsel %vm393, %v375, 0
    %v443 = vsel %vm393, %v376, 0
    %v446 = vsel %vm393, %v377, 0
    %v449 = vsel %vm393, %v378, 0
    %v452 = vsel %vm393, %v379, 0
    %v455 = vsel %vm393, %v380, 0
    %v458 = vsel %vm393, %v381, 0
    %v461 = vsel %vm393, %v382, 0
    %v464 = vsel %vm393, %v383, 0
    %v467 = vsel %vm393, %v384, 0
    %v470 = vsel %vm393, %v385, 0
    %v473 = vsel %vm393, %v386, 0
    %v476 = vsel %vm393, %v387, 0
    %v479 = vsel %vm393, %v388, 0
    %v482 = vsel %vm393, %v389, 0
    %v485 = vsel %vm393, %v390, 0
    %v488 = vsel %vm393, %v391, 0
    %v491 = vsel %vm393, %v392, 0
    %493 = vmatpush.bf16.xpose.msra.mxu0 %v419
    %494 = vmatpush.bf16.xpose.msra.mxu0 %v416
    %495 = vmatpush.bf16.xpose.msra.mxu0 %v413
    %496 = vmatpush.bf16.xpose.msra.mxu0 %v410
    %497 = vmatpush.bf16.xpose.msra.mxu0 %v407
    %498 = vmatpush.bf16.xpose.msra.mxu0 %v404
    %499 = vmatpush.bf16.xpose.msra.mxu0 %v401
    %500 = vmatpush.bf16.xpose.msra.mxu0 %v398
    %501 = vmatmul.bf16.gmra.mxu0 %v395
    %v502 = vpop.f32.mrf.mxu0
    %v503 = vadd.f32 0.0, %v502
    %v504 = vpop.f32.mrf.mxu0
    %505 = vdwg.mxu0
    %506 = vmatpush.bf16.xpose.msra.mxu0 %v443
    %507 = vmatpush.bf16.xpose.msra.mxu0 %v440
    %508 = vmatpush.bf16.xpose.msra.mxu0 %v437
    %509 = vmatpush.bf16.xpose.msra.mxu0 %v434
    %510 = vmatpush.bf16.xpose.msra.mxu0 %v431
    %511 = vmatpush.bf16.xpose.msra.mxu0 %v428
    %512 = vmatpush.bf16.xpose.msra.mxu0 %v425
    %513 = vmatpush.bf16.xpose.msra.mxu0 %v422
    %514 = vmatmul.bf16.gmra.mxu0 %v395
    %v515 = vpop.f32.mrf.mxu0
    %v516 = vadd.f32 0.0, %v515
    %v517 = vpop.f32.mrf.mxu0
    %518 = vdwg.mxu0
    %519 = vmatpush.bf16.xpose.msra.mxu0 %v467
    %520 = vmatpush.bf16.xpose.msra.mxu0 %v464
    %521 = vmatpush.bf16.xpose.msra.mxu0 %v461
    %522 = vmatpush.bf16.xpose.msra.mxu0 %v458
    %523 = vmatpush.bf16.xpose.msra.mxu0 %v455
    %524 = vmatpush.bf16.xpose.msra.mxu0 %v452
    %525 = vmatpush.bf16.xpose.msra.mxu0 %v449
    %526 = vmatpush.bf16.xpose.msra.mxu0 %v446
    %527 = vmatmul.bf16.gmra.mxu0 %v395
    %v528 = vpop.f32.mrf.mxu0
    %v529 = vadd.f32 0.0, %v528
    %v530 = vpop.f32.mrf.mxu0
    %531 = vdwg.mxu0
    %532 = vmatpush.bf16.xpose.msra.mxu0 %v491
    %533 = vmatpush.bf16.xpose.msra.mxu0 %v488
    %534 = vmatpush.bf16.xpose.msra.mxu0 %v485
    %535 = vmatpush.bf16.xpose.msra.mxu0 %v482
    %536 = vmatpush.bf16.xpose.msra.mxu0 %v479
    %537 = vmatpush.bf16.xpose.msra.mxu0 %v476
    %538 = vmatpush.bf16.xpose.msra.mxu0 %v473
    %539 = vmatpush.bf16.xpose.msra.mxu0 %v470
    %540 = vmatmul.bf16.gmra.mxu0 %v395
    %v541 = vpop.f32.mrf.mxu0
    %v542 = vadd.f32 0.0, %v541
    %v543 = vpop.f32.mrf.mxu0
    %544 = vdwg.mxu0
    %v549 = vrot.slane %v516, 6
    %v550 = vrot.slane %v529, 4
    %v551 = vrot.slane %v542, 2
    %vm552 = vcmask 1041408
    %v553 = vsel %vm552, %v503, %v549
    %vm554 = vcmask 1045508
    %v555 = vsel %vm554, %v550, %v551
    %vm556 = vcmask 1043456
    %v557 = vsel %vm556, %v553, %v555
    %v559 = vadd.f32 %v358, %v557
    %560 = vst [vmem:[#allocation2] sm:$0xff] %v559
    // Predicated region
    $region42: #{noisy_dqn_forward.9} parent=1 // pred_check
      %p561 = pneg %p33
    $region43: #{noisy_dqn_forward.9} parent=1 // pred_check_branch
      %563 = sbr.rel (%p561) target = $region45
    $region44: #{noisy_dqn_forward.9} parent=1 // pred_region
      %v564 = vld [vmem:[#allocation2] sm:$0xff]
      %v565 = vld [vmem:[%s4] sm:$0xf]
      %v567 = vperm.slane %v565, 0
      %v568 = vperm.slane %v565, 1
      %v569 = vperm.slane %v565, 2
      %v570 = vperm.slane %v565, 3
      %v571 = vrot.slane %v568, 6
      %v572 = vrot.slane %v569, 4
      %v573 = vrot.slane %v570, 2
      %v574 = vsel %vm552, %v567, %v571
      %v575 = vsel %vm554, %v572, %v573
      %v576 = vsel %vm556, %v574, %v575
      %v578 = vadd.f32 %v564, %v576
      %v579 = vmax.f32 %v578, 0.0
      %v580 = vld [vmem:[%s5] sm:$0xff]
      %v581 = vld [vmem:[%s5 + $0x8] sm:$0xff]
      %v582 = vld [vmem:[%s5 + $0x10] sm:$0xff]
      %v583 = vld [vmem:[%s5 + $0x18] sm:$0xff]
      %v584 = vld [vmem:[%s5 + $0x20] sm:$0xff]
      %v585 = vld [vmem:[%s5 + $0x28] sm:$0xff]
      %v586 = vld [vmem:[%s5 + $0x30] sm:$0xff]
      %v587 = vld [vmem:[%s5 + $0x38] sm:$0xff]
      %v588 = vld [vmem:[%s5 + $0x40] sm:$0xff]
      %v589 = vld [vmem:[%s5 + $0x48] sm:$0xff]
      %v590 = vld [vmem:[%s5 + $0x50] sm:$0xff]
      %v591 = vld [vmem:[%s5 + $0x58] sm:$0xff]
      %v592 = vld [vmem:[%s5 + $0x60] sm:$0xff]
      %v593 = vld [vmem:[%s5 + $0x68] sm:$0xff]
      %v594 = vld [vmem:[%s5 + $0x70] sm:$0xff]
      %v595 = vld [vmem:[%s5 + $0x78] sm:$0xff]
      %v596 = vld [vmem:[%s5 + $0x80] sm:$0xff]
      %v597 = vld [vmem:[%s5 + $0x88] sm:$0xff]
      %v598 = vld [vmem:[%s5 + $0x90] sm:$0xff]
      %v599 = vld [vmem:[%s5 + $0x98] sm:$0xff]
      %v600 = vld [vmem:[%s5 + $0xa0] sm:$0xff]
      %v601 = vld [vmem:[%s5 + $0xa8] sm:$0xff]
      %v602 = vld [vmem:[%s5 + $0xb0] sm:$0xff]
      %v603 = vld [vmem:[%s5 + $0xb8] sm:$0xff]
      %v604 = vld [vmem:[%s5 + $0xc0] sm:$0xff]
      %v605 = vld [vmem:[%s5 + $0xc8] sm:$0xff]
      %v606 = vld [vmem:[%s5 + $0xd0] sm:$0xff]
      %v607 = vld [vmem:[%s5 + $0xd8] sm:$0xff]
      %v608 = vld [vmem:[%s5 + $0xe0] sm:$0xff]
      %v609 = vld [vmem:[%s5 + $0xe8] sm:$0xff]
      %v610 = vld [vmem:[%s5 + $0xf0] sm:$0xff]
      %v611 = vld [vmem:[%s5 + $0xf8] sm:$0xff]
      %v612 = vld [vmem:[%s5 + $0x100] sm:$0xff]
      %v613 = vld [vmem:[%s5 + $0x108] sm:$0xff]
      %v614 = vld [vmem:[%s5 + $0x110] sm:$0xff]
      %v615 = vld [vmem:[%s5 + $0x118] sm:$0xff]
      %v616 = vld [vmem:[%s5 + $0x120] sm:$0xff]
      %v617 = vld [vmem:[%s5 + $0x128] sm:$0xff]
      %v618 = vld [vmem:[%s5 + $0x130] sm:$0xff]
      %v619 = vld [vmem:[%s5 + $0x138] sm:$0xff]
      %v620 = vld [vmem:[%s5 + $0x140] sm:$0xff]
      %v621 = vld [vmem:[%s5 + $0x148] sm:$0xff]
      %v622 = vld [vmem:[%s5 + $0x150] sm:$0xff]
      %v623 = vld [vmem:[%s5 + $0x158] sm:$0xff]
      %v624 = vld [vmem:[%s5 + $0x160] sm:$0xff]
      %v625 = vld [vmem:[%s5 + $0x168] sm:$0xff]
      %v626 = vld [vmem:[%s5 + $0x170] sm:$0xff]
      %v627 = vld [vmem:[%s5 + $0x178] sm:$0xff]
      %v628 = vld [vmem:[%s5 + $0x180] sm:$0xff]
      %v629 = vld [vmem:[%s5 + $0x188] sm:$0xff]
      %v630 = vld [vmem:[%s5 + $0x190] sm:$0xff]
      %v631 = vld [vmem:[%s5 + $0x198] sm:$0xff]
      %v632 = vld [vmem:[%s5 + $0x1a0] sm:$0xff]
      %v633 = vld [vmem:[%s5 + $0x1a8] sm:$0xff]
      %v634 = vld [vmem:[%s5 + $0x1b0] sm:$0xff]
      %v635 = vld [vmem:[%s5 + $0x1b8] sm:$0xff]
      %v636 = vld [vmem:[%s5 + $0x1c0] sm:$0xff]
      %v637 = vld [vmem:[%s5 + $0x1c8] sm:$0xff]
      %v638 = vld [vmem:[%s5 + $0x1d0] sm:$0xff]
      %v639 = vld [vmem:[%s5 + $0x1d8] sm:$0xff]
      %v640 = vld [vmem:[%s5 + $0x1e0] sm:$0xff]
      %v641 = vld [vmem:[%s5 + $0x1e8] sm:$0xff]
      %v642 = vld [vmem:[%s5 + $0x1f0] sm:$0xff]
      %v643 = vld [vmem:[%s5 + $0x1f8] sm:$0xff]
      %v644 = vld [vmem:[%s6] sm:$0xff]
      %v645 = vld [vmem:[%s6 + $0x8] sm:$0xff]
      %v646 = vld [vmem:[%s6 + $0x10] sm:$0xff]
      %v647 = vld [vmem:[%s6 + $0x18] sm:$0xff]
      %v648 = vld [vmem:[%s6 + $0x20] sm:$0xff]
      %v649 = vld [vmem:[%s6 + $0x28] sm:$0xff]
      %v650 = vld [vmem:[%s6 + $0x30] sm:$0xff]
      %v651 = vld [vmem:[%s6 + $0x38] sm:$0xff]
      %v652 = vld [vmem:[%s6 + $0x40] sm:$0xff]
      %v653 = vld [vmem:[%s6 + $0x48] sm:$0xff]
      %v654 = vld [vmem:[%s6 + $0x50] sm:$0xff]
      %v655 = vld [vmem:[%s6 + $0x58] sm:$0xff]
      %v656 = vld [vmem:[%s6 + $0x60] sm:$0xff]
      %v657 = vld [vmem:[%s6 + $0x68] sm:$0xff]
      %v658 = vld [vmem:[%s6 + $0x70] sm:$0xff]
      %v659 = vld [vmem:[%s6 + $0x78] sm:$0xff]
      %v660 = vld [vmem:[%s6 + $0x80] sm:$0xff]
      %v661 = vld [vmem:[%s6 + $0x88] sm:$0xff]
      %v662 = vld [vmem:[%s6 + $0x90] sm:$0xff]
      %v663 = vld [vmem:[%s6 + $0x98] sm:$0xff]
      %v664 = vld [vmem:[%s6 + $0xa0] sm:$0xff]
      %v665 = vld [vmem:[%s6 + $0xa8] sm:$0xff]
      %v666 = vld [vmem:[%s6 + $0xb0] sm:$0xff]
      %v667 = vld [vmem:[%s6 + $0xb8] sm:$0xff]
      %v668 = vld [vmem:[%s6 + $0xc0] sm:$0xff]
      %v669 = vld [vmem:[%s6 + $0xc8] sm:$0xff]
      %v670 = vld [vmem:[%s6 + $0xd0] sm:$0xff]
      %v671 = vld [vmem:[%s6 + $0xd8] sm:$0xff]
      %v672 = vld [vmem:[%s6 + $0xe0] sm:$0xff]
      %v673 = vld [vmem:[%s6 + $0xe8] sm:$0xff]
      %v674 = vld [vmem:[%s6 + $0xf0] sm:$0xff]
      %v675 = vld [vmem:[%s6 + $0xf8] sm:$0xff]
      %v676 = vld [vmem:[%s6 + $0x100] sm:$0xff]
      %v677 = vld [vmem:[%s6 + $0x108] sm:$0xff]
      %v678 = vld [vmem:[%s6 + $0x110] sm:$0xff]
      %v679 = vld [vmem:[%s6 + $0x118] sm:$0xff]
      %v680 = vld [vmem:[%s6 + $0x120] sm:$0xff]
      %v681 = vld [vmem:[%s6 + $0x128] sm:$0xff]
      %v682 = vld [vmem:[%s6 + $0x130] sm:$0xff]
      %v683 = vld [vmem:[%s6 + $0x138] sm:$0xff]
      %v684 = vld [vmem:[%s6 + $0x140] sm:$0xff]
      %v685 = vld [vmem:[%s6 + $0x148] sm:$0xff]
      %v686 = vld [vmem:[%s6 + $0x150] sm:$0xff]
      %v687 = vld [vmem:[%s6 + $0x158] sm:$0xff]
      %v688 = vld [vmem:[%s6 + $0x160] sm:$0xff]
      %v689 = vld [vmem:[%s6 + $0x168] sm:$0xff]
      %v690 = vld [vmem:[%s6 + $0x170] sm:$0xff]
      %v691 = vld [vmem:[%s6 + $0x178] sm:$0xff]
      %v692 = vld [vmem:[%s6 + $0x180] sm:$0xff]
      %v693 = vld [vmem:[%s6 + $0x188] sm:$0xff]
      %v694 = vld [vmem:[%s6 + $0x190] sm:$0xff]
      %v695 = vld [vmem:[%s6 + $0x198] sm:$0xff]
      %v696 = vld [vmem:[%s6 + $0x1a0] sm:$0xff]
      %v697 = vld [vmem:[%s6 + $0x1a8] sm:$0xff]
      %v698 = vld [vmem:[%s6 + $0x1b0] sm:$0xff]
      %v699 = vld [vmem:[%s6 + $0x1b8] sm:$0xff]
      %v700 = vld [vmem:[%s6 + $0x1c0] sm:$0xff]
      %v701 = vld [vmem:[%s6 + $0x1c8] sm:$0xff]
      %v702 = vld [vmem:[%s6 + $0x1d0] sm:$0xff]
      %v703 = vld [vmem:[%s6 + $0x1d8] sm:$0xff]
      %v704 = vld [vmem:[%s6 + $0x1e0] sm:$0xff]
      %v705 = vld [vmem:[%s6 + $0x1e8] sm:$0xff]
      %v706 = vld [vmem:[%s6 + $0x1f0] sm:$0xff]
      %v707 = vld [vmem:[%s6 + $0x1f8] sm:$0xff]
      %v708 = vld [vmem:[%s7] sm:$0xff]
      %v709 = vld [vmem:[%s7 + $0x8] sm:$0xff]
      %v710 = vld [vmem:[%s7 + $0x10] sm:$0xff]
      %v711 = vld [vmem:[%s7 + $0x18] sm:$0xff]
      %v712 = vld [vmem:[%s7 + $0x20] sm:$0xff]
      %v713 = vld [vmem:[%s7 + $0x28] sm:$0xff]
      %v714 = vld [vmem:[%s7 + $0x30] sm:$0xff]
      %v715 = vld [vmem:[%s7 + $0x38] sm:$0xff]
      %v716 = vld [vmem:[%s7 + $0x40] sm:$0xff]
      %v717 = vld [vmem:[%s7 + $0x48] sm:$0xff]
      %v718 = vld [vmem:[%s7 + $0x50] sm:$0xff]
      %v719 = vld [vmem:[%s7 + $0x58] sm:$0xff]
      %v720 = vld [vmem:[%s7 + $0x60] sm:$0xff]
      %v721 = vld [vmem:[%s7 + $0x68] sm:$0xff]
      %v722 = vld [vmem:[%s7 + $0x70] sm:$0xff]
      %v723 = vld [vmem:[%s7 + $0x78] sm:$0xff]
      %v724 = vld [vmem:[%s7 + $0x80] sm:$0xff]
      %v725 = vld [vmem:[%s7 + $0x88] sm:$0xff]
      %v726 = vld [vmem:[%s7 + $0x90] sm:$0xff]
      %v727 = vld [vmem:[%s7 + $0x98] sm:$0xff]
      %v728 = vld [vmem:[%s7 + $0xa0] sm:$0xff]
      %v729 = vld [vmem:[%s7 + $0xa8] sm:$0xff]
      %v730 = vld [vmem:[%s7 + $0xb0] sm:$0xff]
      %v731 = vld [vmem:[%s7 + $0xb8] sm:$0xff]
      %v732 = vld [vmem:[%s7 + $0xc0] sm:$0xff]
      %v733 = vld [vmem:[%s7 + $0xc8] sm:$0xff]
      %v734 = vld [vmem:[%s7 + $0xd0] sm:$0xff]
      %v735 = vld [vmem:[%s7 + $0xd8] sm:$0xff]
      %v736 = vld [vmem:[%s7 + $0xe0] sm:$0xff]
      %v737 = vld [vmem:[%s7 + $0xe8] sm:$0xff]
      %v738 = vld [vmem:[%s7 + $0xf0] sm:$0xff]
      %v739 = vld [vmem:[%s7 + $0xf8] sm:$0xff]
      %v740 = vld [vmem:[%s7 + $0x100] sm:$0xff]
      %v741 = vld [vmem:[%s7 + $0x108] sm:$0xff]
      %v742 = vld [vmem:[%s7 + $0x110] sm:$0xff]
      %v743 = vld [vmem:[%s7 + $0x118] sm:$0xff]
      %v744 = vld [vmem:[%s7 + $0x120] sm:$0xff]
      %v745 = vld [vmem:[%s7 + $0x128] sm:$0xff]
      %v746 = vld [vmem:[%s7 + $0x130] sm:$0xff]
      %v747 = vld [vmem:[%s7 + $0x138] sm:$0xff]
      %v748 = vld [vmem:[%s7 + $0x140] sm:$0xff]
      %v749 = vld [vmem:[%s7 + $0x148] sm:$0xff]
      %v750 = vld [vmem:[%s7 + $0x150] sm:$0xff]
      %v751 = vld [vmem:[%s7 + $0x158] sm:$0xff]
      %v752 = vld [vmem:[%s7 + $0x160] sm:$0xff]
      %v753 = vld [vmem:[%s7 + $0x168] sm:$0xff]
      %v754 = vld [vmem:[%s7 + $0x170] sm:$0xff]
      %v755 = vld [vmem:[%s7 + $0x178] sm:$0xff]
      %v756 = vld [vmem:[%s7 + $0x180] sm:$0xff]
      %v757 = vld [vmem:[%s7 + $0x188] sm:$0xff]
      %v758 = vld [vmem:[%s7 + $0x190] sm:$0xff]
      %v759 = vld [vmem:[%s7 + $0x198] sm:$0xff]
      %v760 = vld [vmem:[%s7 + $0x1a0] sm:$0xff]
      %v761 = vld [vmem:[%s7 + $0x1a8] sm:$0xff]
      %v762 = vld [vmem:[%s7 + $0x1b0] sm:$0xff]
      %v763 = vld [vmem:[%s7 + $0x1b8] sm:$0xff]
      %v764 = vld [vmem:[%s7 + $0x1c0] sm:$0xff]
      %v765 = vld [vmem:[%s7 + $0x1c8] sm:$0xff]
      %v766 = vld [vmem:[%s7 + $0x1d0] sm:$0xff]
      %v767 = vld [vmem:[%s7 + $0x1d8] sm:$0xff]
      %v768 = vld [vmem:[%s7 + $0x1e0] sm:$0xff]
      %v769 = vld [vmem:[%s7 + $0x1e8] sm:$0xff]
      %v770 = vld [vmem:[%s7 + $0x1f0] sm:$0xff]
      %v771 = vld [vmem:[%s7 + $0x1f8] sm:$0xff]
      %v772 = vmul.f32 %v644, %v708
      %v773 = vmul.f32 %v645, %v709
      %v774 = vmul.f32 %v646, %v710
      %v775 = vmul.f32 %v647, %v711
      %v776 = vmul.f32 %v648, %v712
      %v777 = vmul.f32 %v649, %v713
      %v778 = vmul.f32 %v650, %v714
      %v779 = vmul.f32 %v651, %v715
      %v780 = vmul.f32 %v652, %v716
      %v781 = vmul.f32 %v653, %v717
      %v782 = vmul.f32 %v654, %v718
      %v783 = vmul.f32 %v655, %v719
      %v784 = vmul.f32 %v656, %v720
      %v785 = vmul.f32 %v657, %v721
      %v786 = vmul.f32 %v658, %v722
      %v787 = vmul.f32 %v659, %v723
      %v788 = vmul.f32 %v660, %v724
      %v789 = vmul.f32 %v661, %v725
      %v790 = vmul.f32 %v662, %v726
      %v791 = vmul.f32 %v663, %v727
      %v792 = vmul.f32 %v664, %v728
      %v793 = vmul.f32 %v665, %v729
      %v794 = vmul.f32 %v666, %v730
      %v795 = vmul.f32 %v667, %v731
      %v796 = vmul.f32 %v668, %v732
      %v797 = vmul.f32 %v669, %v733
      %v798 = vmul.f32 %v670, %v734
      %v799 = vmul.f32 %v671, %v735
      %v800 = vmul.f32 %v672, %v736
      %v801 = vmul.f32 %v673, %v737
      %v802 = vmul.f32 %v674, %v738
      %v803 = vmul.f32 %v675, %v739
      %v804 = vmul.f32 %v676, %v740
      %v805 = vmul.f32 %v677, %v741
      %v806 = vmul.f32 %v678, %v742
      %v807 = vmul.f32 %v679, %v743
      %v808 = vmul.f32 %v680, %v744
      %v809 = vmul.f32 %v681, %v745
      %v810 = vmul.f32 %v682, %v746
      %v811 = vmul.f32 %v683, %v747
      %v812 = vmul.f32 %v684, %v748
      %v813 = vmul.f32 %v685, %v749
      %v814 = vmul.f32 %v686, %v750
      %v815 = vmul.f32 %v687, %v751
      %v816 = vmul.f32 %v688, %v752
      %v817 = vmul.f32 %v689, %v753
      %v818 = vmul.f32 %v690, %v754
      %v819 = vmul.f32 %v691, %v755
      %v820 = vmul.f32 %v692, %v756
      %v821 = vmul.f32 %v693, %v757
      %v822 = vmul.f32 %v694, %v758
      %v823 = vmul.f32 %v695, %v759
      %v824 = vmul.f32 %v696, %v760
      %v825 = vmul.f32 %v697, %v761
      %v826 = vmul.f32 %v698, %v762
      %v827 = vmul.f32 %v699, %v763
      %v828 = vmul.f32 %v700, %v764
      %v829 = vmul.f32 %v701, %v765
      %v830 = vmul.f32 %v702, %v766
      %v831 = vmul.f32 %v703, %v767
      %v832 = vmul.f32 %v704, %v768
      %v833 = vmul.f32 %v705, %v769
      %v834 = vmul.f32 %v706, %v770
      %v835 = vmul.f32 %v707, %v771
      %v836 = vadd.f32 %v580, %v772
      %v837 = vadd.f32 %v581, %v773
      %v838 = vadd.f32 %v582, %v774
      %v839 = vadd.f32 %v583, %v775
      %v840 = vadd.f32 %v584, %v776
      %v841 = vadd.f32 %v585, %v777
      %v842 = vadd.f32 %v586, %v778
      %v843 = vadd.f32 %v587, %v779
      %v844 = vadd.f32 %v588, %v780
      %v845 = vadd.f32 %v589, %v781
      %v846 = vadd.f32 %v590, %v782
      %v847 = vadd.f32 %v591, %v783
      %v848 = vadd.f32 %v592, %v784
      %v849 = vadd.f32 %v593, %v785
      %v850 = vadd.f32 %v594, %v786
      %v851 = vadd.f32 %v595, %v787
      %v852 = vadd.f32 %v596, %v788
      %v853 = vadd.f32 %v597, %v789
      %v854 = vadd.f32 %v598, %v790
      %v855 = vadd.f32 %v599, %v791
      %v856 = vadd.f32 %v600, %v792
      %v857 = vadd.f32 %v601, %v793
      %v858 = vadd.f32 %v602, %v794
      %v859 = vadd.f32 %v603, %v795
      %v860 = vadd.f32 %v604, %v796
      %v861 = vadd.f32 %v605, %v797
      %v862 = vadd.f32 %v606, %v798
      %v863 = vadd.f32 %v607, %v799
      %v864 = vadd.f32 %v608, %v800
      %v865 = vadd.f32 %v609, %v801
      %v866 = vadd.f32 %v610, %v802
      %v867 = vadd.f32 %v611, %v803
      %v868 = vadd.f32 %v612, %v804
      %v869 = vadd.f32 %v613, %v805
      %v870 = vadd.f32 %v614, %v806
      %v871 = vadd.f32 %v615, %v807
      %v872 = vadd.f32 %v616, %v808
      %v873 = vadd.f32 %v617, %v809
      %v874 = vadd.f32 %v618, %v810
      %v875 = vadd.f32 %v619, %v811
      %v876 = vadd.f32 %v620, %v812
      %v877 = vadd.f32 %v621, %v813
      %v878 = vadd.f32 %v622, %v814
      %v879 = vadd.f32 %v623, %v815
      %v880 = vadd.f32 %v624, %v816
      %v881 = vadd.f32 %v625, %v817
      %v882 = vadd.f32 %v626, %v818
      %v883 = vadd.f32 %v627, %v819
      %v884 = vadd.f32 %v628, %v820
      %v885 = vadd.f32 %v629, %v821
      %v886 = vadd.f32 %v630, %v822
      %v887 = vadd.f32 %v631, %v823
      %v888 = vadd.f32 %v632, %v824
      %v889 = vadd.f32 %v633, %v825
      %v890 = vadd.f32 %v634, %v826
      %v891 = vadd.f32 %v635, %v827
      %v892 = vadd.f32 %v636, %v828
      %v893 = vadd.f32 %v637, %v829
      %v894 = vadd.f32 %v638, %v830
      %v895 = vadd.f32 %v639, %v831
      %v896 = vadd.f32 %v640, %v832
      %v897 = vadd.f32 %v641, %v833
      %v898 = vadd.f32 %v642, %v834
      %v899 = vadd.f32 %v643, %v835
      %901 = vst [vmem:[#allocation1] ss:$4 sm:$0xff] %v579
      %v902 = vld.sshfl [vmem:[#allocation1] sm:$0xff pattern:$0x73625140]
      %v903 = vld.sshfl [vmem:[#allocation1 + $0x8] sm:$0xff pattern:$0x73625140]
      %v904 = vld.sshfl [vmem:[#allocation1 + $0x10] sm:$0xff pattern:$0x73625140]
      %v905 = vld.sshfl [vmem:[#allocation1 + $0x18] sm:$0xff pattern:$0x73625140]
      %v910 = vpack.c.bf16 %v902, %v902
      %v911 = vpack.c.bf16 %v903, %v903
      %v912 = vpack.c.bf16 %v904, %v904
      %v913 = vpack.c.bf16 %v905, %v905
      %v914 = vpack.c.bf16 %v840, %v836
      %v915 = vpack.c.bf16 %v841, %v837
      %v916 = vpack.c.bf16 %v842, %v838
      %v917 = vpack.c.bf16 %v843, %v839
      %v918 = vpack.c.bf16 %v848, %v844
      %v919 = vpack.c.bf16 %v849, %v845
      %v920 = vpack.c.bf16 %v850, %v846
      %v921 = vpack.c.bf16 %v851, %v847
      %v922 = vpack.c.bf16 %v856, %v852
      %v923 = vpack.c.bf16 %v857, %v853
      %v924 = vpack.c.bf16 %v858, %v854
      %v925 = vpack.c.bf16 %v859, %v855
      %v926 = vpack.c.bf16 %v864, %v860
      %v927 = vpack.c.bf16 %v865, %v861
      %v928 = vpack.c.bf16 %v866, %v862
      %v929 = vpack.c.bf16 %v867, %v863
      %v930 = vpack.c.bf16 %v872, %v868
      %v931 = vpack.c.bf16 %v873, %v869
      %v932 = vpack.c.bf16 %v874, %v870
      %v933 = vpack.c.bf16 %v875, %v871
      %v934 = vpack.c.bf16 %v880, %v876
      %v935 = vpack.c.bf16 %v881, %v877
      %v936 = vpack.c.bf16 %v882, %v878
      %v937 = vpack.c.bf16 %v883, %v879
      %v938 = vpack.c.bf16 %v888, %v884
      %v939 = vpack.c.bf16 %v889, %v885
      %v940 = vpack.c.bf16 %v890, %v886
      %v941 = vpack.c.bf16 %v891, %v887
      %v942 = vpack.c.bf16 %v896, %v892
      %v943 = vpack.c.bf16 %v897, %v893
      %v944 = vpack.c.bf16 %v898, %v894
      %v945 = vpack.c.bf16 %v899, %v895
      %v946 = vld [vmem:[%s8] sm:$0x1]
      %v948 = vperm.slane %v946, 0
      %950 = vmatpush.bf16.xpose.msra.mxu0 %v942
      %951 = vmatpush.bf16.xpose.msra.mxu0 %v938
      %952 = vmatpush.bf16.xpose.msra.mxu0 %v934
      %953 = vmatpush.bf16.xpose.msra.mxu0 %v930
      %954 = vmatpush.bf16.xpose.msra.mxu0 %v926
      %955 = vmatpush.bf16.xpose.msra.mxu0 %v922
      %956 = vmatpush.bf16.xpose.msra.mxu0 %v918
      %957 = vmatpush.bf16.xpose.msra.mxu0 %v914
      %958 = vmatmul.bf16.gmra.mxu0 %v910
      %v959 = vpop.f32.mrf.mxu0
      %v960 = vadd.f32 %v948, %v959
      %v961 = vpop.f32.mrf.mxu0
      %962 = vdwg.mxu0
      %963 = vmatpush.bf16.xpose.msra.mxu0 %v943
      %964 = vmatpush.bf16.xpose.msra.mxu0 %v939
      %965 = vmatpush.bf16.xpose.msra.mxu0 %v935
      %966 = vmatpush.bf16.xpose.msra.mxu0 %v931
      %967 = vmatpush.bf16.xpose.msra.mxu0 %v927
      %968 = vmatpush.bf16.xpose.msra.mxu0 %v923
      %969 = vmatpush.bf16.xpose.msra.mxu0 %v919
      %970 = vmatpush.bf16.xpose.msra.mxu0 %v915
      %971 = vmatmul.bf16.gmra.mxu0 %v911
      %v972 = vpop.f32.mrf.mxu0
      %v973 = vadd.f32 %v960, %v972
      %v974 = vpop.f32.mrf.mxu0
      %975 = vdwg.mxu0
      %976 = vmatpush.bf16.xpose.msra.mxu0 %v944
      %977 = vmatpush.bf16.xpose.msra.mxu0 %v940
      %978 = vmatpush.bf16.xpose.msra.mxu0 %v936
      %979 = vmatpush.bf16.xpose.msra.mxu0 %v932
      %980 = vmatpush.bf16.xpose.msra.mxu0 %v928
      %981 = vmatpush.bf16.xpose.msra.mxu0 %v924
      %982 = vmatpush.bf16.xpose.msra.mxu0 %v920
      %983 = vmatpush.bf16.xpose.msra.mxu0 %v916
      %984 = vmatmul.bf16.gmra.mxu0 %v912
      %v985 = vpop.f32.mrf.mxu0
      %v986 = vadd.f32 %v973, %v985
      %v987 = vpop.f32.mrf.mxu0
      %988 = vdwg.mxu0
      %989 = vmatpush.bf16.xpose.msra.mxu0 %v945
      %990 = vmatpush.bf16.xpose.msra.mxu0 %v941
      %991 = vmatpush.bf16.xpose.msra.mxu0 %v937
      %992 = vmatpush.bf16.xpose.msra.mxu0 %v933
      %993 = vmatpush.bf16.xpose.msra.mxu0 %v929
      %994 = vmatpush.bf16.xpose.msra.mxu0 %v925
      %995 = vmatpush.bf16.xpose.msra.mxu0 %v921
      %996 = vmatpush.bf16.xpose.msra.mxu0 %v917
      %997 = vmatmul.bf16.gmra.mxu0 %v913
      %v998 = vpop.f32.mrf.mxu0
      %v999 = vadd.f32 %v986, %v998
      %v1000 = vpop.f32.mrf.mxu0
      %1001 = vdwg.mxu0
      %1002 = vst [vmem:[#allocation3] sm:$0x3] %v999
    $region45: #{noisy_dqn_forward.9} parent=1 // pred_fallthru
      _
    // Predicated region
    $region46: #{noisy_dqn_forward.9} parent=1 // pred_check
      _
    $region47: #{noisy_dqn_forward.9} parent=1 // pred_check_branch
      %1004 = sbr.rel (0) target = $region49
    $region48: #{noisy_dqn_forward.9} parent=1 // pred_region
      %1006 = vsyncadd [#allocation4], 0
      %s1008 = sshll.u32 [#allocation3], 4
      %s1009 = int_to_ptr.vmem [resolvable:$true] %s1008
      %s1010 = sshll.u32 %s9, 4
      %s1011 = int_to_ptr.hbm [resolvable:$true] %s1010
      %1013 = dma.vmem_to_hbm [thread:$0]  %s1009, 32, %s1011, [#allocation4]
    $region49: #{noisy_dqn_forward.9} parent=1 // pred_fallthru
      _
    // Predicated region
    $region50: #{noisy_dqn_forward.9} parent=1 // pred_check
      _
    $region51: #{noisy_dqn_forward.9} parent=1 // pred_check_branch
      %1015 = sbr.rel (0) target = $region53
    $region52: #{noisy_dqn_forward.9} parent=1 // pred_region
      %1017 = dma.done [#allocation4], 32
    $region53: #{noisy_dqn_forward.9} parent=1 // pred_fallthru
      _
    %1018 = vsyncpa [#allocation4], 1

</llo_original>
